<compile_context>
chip_gen: v7x
topology: tpu7x:2x2x1
jax: 0.10.0
libtpu: 0.0.40
codegen_flags: <defaults>
</compile_context>

<pallas_src>
import numpy as np

import jax
import jax.numpy as jnp
from jax.experimental import pallas as pl
from jax.experimental.pallas import tpu as pltpu


def _round_up(n, m):
    return ((n + m - 1) // m) * m


# ----------------------------------------------------------------------------
# Constant 0/1 selection matrices implementing patch extraction as a matmul,
# vertically stacked over the k*k kernel offsets.  Block idx=i*k+j occupies
# rows [idx*rows_out_block, (idx+1)*rows_out_block);  (S_idx @ A)[r_out, c]
# equals the activation at (n, oh*stride+i, ow*stride+j) for r_out=(n,oh,ow).
# Padded rows/cols stay all-zero, so padded activation rows are never selected.
# ----------------------------------------------------------------------------
def _conv_row_selection_stacked(batch, h_in, w_in, k, stride, rows_in_pad, rows_out_block):
    h_out = (h_in - k) // stride + 1
    w_out = (w_in - k) // stride + 1
    assert batch * h_out * w_out <= rows_out_block
    sel = np.zeros((k * k, rows_out_block, rows_in_pad), np.float32)
    for i in range(k):
        for j in range(k):
            idx = i * k + j
            for n in range(batch):
                for oh in range(h_out):
                    for ow in range(w_out):
                        r_out = (n * h_out + oh) * w_out + ow
                        r_in = (n * h_in + oh * stride + i) * w_in + (ow * stride + j)
                        sel[idx, r_out, r_in] = 1.0
    return sel.reshape(k * k * rows_out_block, rows_in_pad), h_out, w_out


# ----------------------------------------------------------------------------
# One-time XLA glue: im2col for conv1 on the raw NCHW input.
# Feature order = (C, kh, kw) (== PyTorch weight.reshape(out,-1) order);
# row order = (n, oh, ow).  bf16 cast + NHWC move happen BEFORE the window
# stack so the only transpose touches the small raw input.
# ----------------------------------------------------------------------------
def _im2col_conv1(x, kh, kw, stride):
    n, c, h, w = x.shape
    ho = (h - kh) // stride + 1
    wo = (w - kw) // stride + 1
    xh = x.astype(jnp.bfloat16).transpose(0, 2, 3, 1)            # (N, H, W, C)
    parts = [xh[:, i:i + stride * ho:stride, j:j + stride * wo:stride, :]
             for i in range(kh) for j in range(kw)]
    p = jnp.stack(parts, axis=-1)                                # (N, Ho, Wo, C, kh*kw)
    return p.reshape(n * ho * wo, c * kh * kw)


# ----------------------------------------------------------------------------
# Parameters (deterministic synthetic init, PyTorch-like fan-in scaling).
# ----------------------------------------------------------------------------
def init_dqn_params(key, in_channels, num_actions):
    def uniform(k, shape, fan_in):
        bound = 1.0 / np.sqrt(float(fan_in))
        return jax.random.uniform(k, shape, jnp.float32, -bound, bound)

    keys = jax.random.split(key, 10)
    return {
        "conv1_w": uniform(keys[0], (32, in_channels, 8, 8), in_channels * 8 * 8),
        "conv1_b": uniform(keys[1], (32,), in_channels * 8 * 8),
        "conv2_w": uniform(keys[2], (64, 32, 4, 4), 32 * 4 * 4),
        "conv2_b": uniform(keys[3], (64,), 32 * 4 * 4),
        "conv3_w": uniform(keys[4], (64, 64, 3, 3), 64 * 3 * 3),
        "conv3_b": uniform(keys[5], (64,), 64 * 3 * 3),
        "fc1_w": uniform(keys[6], (512, 64), 64),       # PyTorch Linear: (out, in)
        "fc1_b": uniform(keys[7], (512,), 64),
        "fc2_w": uniform(keys[8], (num_actions, 512), 512),
        "fc2_b": uniform(keys[9], (num_actions,), 512),
    }


# ----------------------------------------------------------------------------
# Pack weights / biases / selection matrices ONCE into a few coalesced buffers.
# ----------------------------------------------------------------------------
def pack_dqn_params(params, *, batch, height, width):
    h1, w1 = (height - 8) // 4 + 1, (width - 8) // 4 + 1
    h2, w2 = (h1 - 4) // 2 + 1, (w1 - 4) // 2 + 1
    h3, w3 = (h2 - 3) // 1 + 1, (w2 - 3) // 1 + 1
    # fc1 in_features=64 implies conv3 output must be 1x1 spatial (e.g. 36x36 input).
    assert h3 == 1 and w3 == 1, "DQN.fc1 expects conv3 output to be 1x1 spatial"

    cin = params["conv1_w"].shape[1]
    num_actions = params["fc2_w"].shape[0]
    assert num_actions <= 64

    # Row counts.  Per-offset blocks padded to x16 so bf16 slices of the stacked
    # stage-1 results never straddle the 16-sublane packing boundary.
    r1 = _round_up(batch * h1 * w1, 8)        # conv1 output rows
    r2 = _round_up(batch * h2 * w2, 16)       # conv2 output rows / per-offset block
    r3 = _round_up(batch * h3 * w3, 16)       # conv3 output rows / per-offset block

    # Stacked selection matrices, coalesced into ONE bf16 buffer (single DMA).
    s2, _, _ = _conv_row_selection_stacked(batch, h1, w1, 4, 2, r1, r2)   # (16*r2, r1)
    s3, _, _ = _conv_row_selection_stacked(batch, h2, w2, 3, 1, r2, r3)   # (9*r3,  r2)
    sel_lanes = max(r1, r2)
    sel = np.zeros((16 * r2 + 9 * r3, sel_lanes), np.float32)
    sel[:16 * r2, :r1] = s2
    sel[16 * r2:, :r2] = s3

    # All matmul weights coalesced into ONE bf16 buffer; every section starts at
    # a 16-row-aligned offset so in-kernel row slices are layout-trivial.
    w_lanes = max(64, num_actions)
    w1m = params["conv1_w"].reshape(32, -1).T                                   # (cin*64, 32)
    w2m = jnp.transpose(params["conv2_w"], (2, 3, 1, 0)).reshape(16 * 32, 64)   # (512, 64)
    w3m = jnp.transpose(params["conv3_w"], (2, 3, 1, 0)).reshape(9 * 64, 64)    # (576, 64)
    fc2m = params["fc2_w"].T                                                    # (512, A)
    pad = lambda m: jnp.pad(m, ((0, 0), (0, w_lanes - m.shape[1])))
    wbuf = jnp.concatenate([pad(w1m), pad(w2m), pad(w3m), pad(fc2m)], axis=0)

    # All biases in ONE lane-padded f32 table (one row per layer).
    bias = np.zeros((8, 512), np.float32)
    bias[0, :32] = np.asarray(params["conv1_b"])
    bias[1, :64] = np.asarray(params["conv2_b"])
    bias[2, :64] = np.asarray(params["conv3_b"])
    bias[3, :512] = np.asarray(params["fc1_b"])
    bias[4, :num_actions] = np.asarray(params["fc2_b"])

    packed = {
        "sel": jnp.asarray(sel, jnp.bfloat16),
        "wbuf": wbuf.astype(jnp.bfloat16),
        "fc1w": jnp.asarray(params["fc1_w"].T, jnp.bfloat16),   # (64, 512)
        "bias": jnp.asarray(bias),
    }
    meta = dict(
        batch=batch, num_actions=num_actions, cin=cin, r1=r1, r2=r2, r3=r3,
        o_w1=0, o_w2=cin * 64, o_w3=cin * 64 + 512, o_fc2=cin * 64 + 512 + 576,
    )
    return packed, meta


# ----------------------------------------------------------------------------
# Build the fused forward: conv1 -> conv2 -> conv3 -> fc1 -> fc2 in ONE kernel.
# ----------------------------------------------------------------------------
def build_dqn_forward(meta):
    batch, num_a = meta["batch"], meta["num_actions"]
    r1, r2, r3 = meta["r1"], meta["r2"], meta["r3"]
    cin = meta["cin"]
    o_w1, o_w2, o_w3, o_fc2 = meta["o_w1"], meta["o_w2"], meta["o_w3"], meta["o_fc2"]
    n2, n3 = 16 * r2, 9 * r3

    def kernel(cols_ref, sel_ref, wbuf_ref, fc1w_ref, bias_ref, out_ref):
        f32, bf16 = jnp.float32, jnp.bfloat16

        def dot(a, b):
            return jnp.dot(a, b, preferred_element_type=f32)

        # Static, tile-aligned views of the coalesced weight / bias buffers.
        w1 = wbuf_ref[o_w1:o_w1 + cin * 64, 0:32]
        w2 = wbuf_ref[o_w2:o_w2 + 512, 0:64].reshape(16, 32, 64)
        w3 = wbuf_ref[o_w3:o_w3 + 576, 0:64].reshape(9, 64, 64)
        fc2w = wbuf_ref[o_fc2:o_fc2 + 512, 0:num_a]
        b1 = bias_ref[0:1, 0:32]
        b2 = bias_ref[1:2, 0:64]
        b3 = bias_ref[2:3, 0:64]
        fb1 = bias_ref[3:4, 0:512]
        fb2 = bias_ref[4:5, 0:num_a]

        # conv1: one im2col GEMM (r1 x cin*64 x 32) + bias + ReLU.
        a = jnp.maximum(dot(cols_ref[...], w1) + b1, 0.0).astype(bf16)        # (r1, 32)

        # conv2: ONE stacked-selection GEMM, then a batched per-offset GEMM and
        # a vectorized reduce (no per-offset stage-1 pushes, no serial VPU chain).
        l2 = dot(sel_ref[0:n2, 0:r1], a)                                      # (16*r2, 32) f32
        l2 = l2.reshape(16, r2, 32).astype(bf16)                              # 16-row aligned
        c2 = jnp.einsum("krc,kco->kro", l2, w2, preferred_element_type=f32)   # (16, r2, 64)
        a = jnp.maximum(jnp.sum(c2, axis=0) + b2, 0.0).astype(bf16)           # (r2, 64)

        # conv3: same two-GEMM structure with 9 offsets.
        l3 = dot(sel_ref[n2:n2 + n3, 0:r2], a)                                # (9*r3, 64) f32
        l3 = l3.reshape(9, r3, 64).astype(bf16)
        c3 = jnp.einsum("krc,kco->kro", l3, w3, preferred_element_type=f32)   # (9, r3, 64)
        a = jnp.maximum(jnp.sum(c3, axis=0) + b3, 0.0).astype(bf16)           # (r3, 64)

        # fc1 + ReLU (conv3 output is 1x1 spatial, so the flatten is the identity).
        a = jnp.maximum(dot(a, fc1w_ref[...]) + fb1, 0.0).astype(bf16)        # (r3, 512)

        # fc2 (no activation); only valid batch rows are written to HBM.
        y = dot(a, fc2w) + fb2                                                # (r3, A)
        out_ref[...] = y[:out_ref.shape[0], :].astype(out_ref.dtype)

    @jax.jit
    def fwd(packed, x):
        cols = _im2col_conv1(x, 8, 8, 4)                  # (N*H1*W1, cin*64) bf16
        if cols.shape[0] != r1:                           # static; no pad at 36x36 / batch=2
            cols = jnp.pad(cols, ((0, r1 - cols.shape[0]), (0, 0)))
        return pl.pallas_call(
            kernel,
            out_shape=jax.ShapeDtypeStruct((batch, num_a), jnp.float32),
            in_specs=[pl.BlockSpec(memory_space=pltpu.VMEM)] * 5,
            out_specs=pl.BlockSpec(memory_space=pltpu.VMEM),
        )(cols, packed["sel"], packed["wbuf"], packed["fc1w"], packed["bias"])

    return fwd


# Pure-JAX reference (mirrors DQN.forward) for a numerical self-check.
def dqn_reference(params, x):
    dn = ("NCHW", "OIHW", "NCHW")
    y = jax.lax.conv_general_dilated(x, params["conv1_w"], (4, 4), "VALID", dimension_numbers=dn)
    y = jax.nn.relu(y + params["conv1_b"][None, :, None, None])
    y = jax.lax.conv_general_dilated(y, params["conv2_w"], (2, 2), "VALID", dimension_numbers=dn)
    y = jax.nn.relu(y + params["conv2_b"][None, :, None, None])
    y = jax.lax.conv_general_dilated(y, params["conv3_w"], (1, 1), "VALID", dimension_numbers=dn)
    y = jax.nn.relu(y + params["conv3_b"][None, :, None, None])
    y = y.reshape(y.shape[0], -1)
    y = jax.nn.relu(y @ params["fc1_w"].T + params["fc1_b"])
    y = y @ params["fc2_w"].T + params["fc2_b"]
    return y


if __name__ == "__main__":
    key = jax.random.PRNGKey(0)
    k_param, k_input = jax.random.split(key)

    # 36x36 input makes conv3's output exactly 1x1, matching fc1.in_features=64.
    batch, in_channels, spatial, num_actions = 2, 4, 36, 6
    params = init_dqn_params(k_param, in_channels, num_actions)
    packed, meta = pack_dqn_params(params, batch=batch, height=spatial, width=spatial)
    dqn_forward = build_dqn_forward(meta)

    x = jax.random.normal(k_input, (batch, in_channels, spatial, spatial), dtype=jnp.float32)

    out = jax.block_until_ready(dqn_forward(packed, x))
    assert out.shape == (batch, num_actions), out.shape
    assert out.dtype == jnp.float32

    ref = jax.block_until_ready(dqn_reference(params, x))
    np.testing.assert_allclose(np.asarray(out), np.asarray(ref), rtol=3e-2, atol=3e-2)

    print("KERNEL_OK")
</pallas_src>

<mosaic_0001>
module attributes {stable_mosaic.version = 11 : i64} {
  func.func @kernel(%arg0: memref<128x256xbf16, #tpu.memory_space<vmem>>, %arg1: memref<656x128xbf16, #tpu.memory_space<vmem>>, %arg2: memref<1856x64xbf16, #tpu.memory_space<vmem>>, %arg3: memref<64x512xbf16, #tpu.memory_space<vmem>>, %arg4: memref<8x512xf32, #tpu.memory_space<vmem>>, %arg5: memref<2x6xf32, #tpu.memory_space<vmem>>) attributes {dimension_semantics = [], scalar_prefetch = 0 : i64, scratch_operands = 0 : i64, tpu.core_type = #tpu.core_type<tc>} {
    %c0 = arith.constant 0 : index
    %c0_0 = arith.constant 0 : index
    %0 = vector.load %arg2[%c0, %c0_0] : memref<1856x64xbf16, #tpu.memory_space<vmem>>, vector<256x32xbf16>
    %c256 = arith.constant 256 : index
    %c0_1 = arith.constant 0 : index
    %1 = vector.load %arg2[%c256, %c0_1] : memref<1856x64xbf16, #tpu.memory_space<vmem>>, vector<512x64xbf16>
    %2 = vector.shape_cast %1 : vector<512x64xbf16> to vector<16x32x64xbf16>
    %c768 = arith.constant 768 : index
    %c0_2 = arith.constant 0 : index
    %3 = vector.load %arg2[%c768, %c0_2] : memref<1856x64xbf16, #tpu.memory_space<vmem>>, vector<576x64xbf16>
    %4 = vector.shape_cast %3 : vector<576x64xbf16> to vector<9x64x64xbf16>
    %c1344 = arith.constant 1344 : index
    %c0_3 = arith.constant 0 : index
    %5 = vector.load %arg2[%c1344, %c0_3] : memref<1856x64xbf16, #tpu.memory_space<vmem>>, vector<512x6xbf16>
    %c0_4 = arith.constant 0 : index
    %c0_5 = arith.constant 0 : index
    %6 = vector.load %arg4[%c0_4, %c0_5] : memref<8x512xf32, #tpu.memory_space<vmem>>, vector<1x32xf32>
    %c1 = arith.constant 1 : index
    %c0_6 = arith.constant 0 : index
    %7 = vector.load %arg4[%c1, %c0_6] : memref<8x512xf32, #tpu.memory_space<vmem>>, vector<1x64xf32>
    %c2 = arith.constant 2 : index
    %c0_7 = arith.constant 0 : index
    %8 = vector.load %arg4[%c2, %c0_7] : memref<8x512xf32, #tpu.memory_space<vmem>>, vector<1x64xf32>
    %c3 = arith.constant 3 : index
    %c0_8 = arith.constant 0 : index
    %9 = vector.load %arg4[%c3, %c0_8] : memref<8x512xf32, #tpu.memory_space<vmem>>, vector<1x512xf32>
    %c4 = arith.constant 4 : index
    %c0_9 = arith.constant 0 : index
    %10 = vector.load %arg4[%c4, %c0_9] : memref<8x512xf32, #tpu.memory_space<vmem>>, vector<1x6xf32>
    %c0_10 = arith.constant 0 : index
    %c0_11 = arith.constant 0 : index
    %11 = vector.load %arg0[%c0_10, %c0_11] : memref<128x256xbf16, #tpu.memory_space<vmem>>, vector<128x256xbf16>
    %cst = arith.constant dense<0.000000e+00> : vector<128x32xf32>
    %12 = tpu.matmul %11, %0, %cst {dimension_numbers = #tpu.dot_dimension_numbers<[1], [0], [0], [1], [0, 0, 1, 1], [], []>} : vector<128x256xbf16>, vector<256x32xbf16>, vector<128x32xf32> -> vector<128x32xf32>
    %13 = vector.broadcast %6 : vector<1x32xf32> to vector<128x32xf32>
    %14 = arith.addf %12, %13 : vector<128x32xf32>
    %cst_12 = arith.constant 0.000000e+00 : f32
    %15 = vector.broadcast %cst_12 : f32 to vector<128x32xf32>
    %16 = arith.maximumf %14, %15 : vector<128x32xf32>
    %17 = arith.truncf %16 : vector<128x32xf32> to vector<128x32xbf16>
    %c0_13 = arith.constant 0 : index
    %c0_14 = arith.constant 0 : index
    %18 = vector.load %arg1[%c0_13, %c0_14] : memref<656x128xbf16, #tpu.memory_space<vmem>>, vector<512x128xbf16>
    %cst_15 = arith.constant dense<0.000000e+00> : vector<512x32xf32>
    %19 = tpu.matmul %18, %17, %cst_15 {dimension_numbers = #tpu.dot_dimension_numbers<[1], [0], [0], [1], [0, 0, 1, 1], [], []>} : vector<512x128xbf16>, vector<128x32xbf16>, vector<512x32xf32> -> vector<512x32xf32>
    %20 = vector.shape_cast %19 : vector<512x32xf32> to vector<16x32x32xf32>
    %21 = arith.truncf %20 : vector<16x32x32xf32> to vector<16x32x32xbf16>
    "tpu.trace_start"() <{level = 10 : i32, message = "krc,kco->kro"}> : () -> ()
    %cst_16 = arith.constant dense<0.000000e+00> : vector<16x32x64xf32>
    %22 = tpu.matmul %21, %2, %cst_16 {dimension_numbers = #tpu.dot_dimension_numbers<[2], [1], [1], [2], [0, 0, 0, 1, 1, 2], [0], [0]>} : vector<16x32x32xbf16>, vector<16x32x64xbf16>, vector<16x32x64xf32> -> vector<16x32x64xf32>
    "tpu.trace_stop"() : () -> ()
    %cst_17 = arith.constant dense<0.000000e+00> : vector<32x64xf32>
    %23 = vector.multi_reduction <add>, %22, %cst_17 [0] : vector<16x32x64xf32> to vector<32x64xf32>
    %24 = vector.broadcast %7 : vector<1x64xf32> to vector<32x64xf32>
    %25 = arith.addf %23, %24 : vector<32x64xf32>
    %cst_18 = arith.constant 0.000000e+00 : f32
    %26 = vector.broadcast %cst_18 : f32 to vector<32x64xf32>
    %27 = arith.maximumf %25, %26 : vector<32x64xf32>
    %28 = arith.truncf %27 : vector<32x64xf32> to vector<32x64xbf16>
    %c512 = arith.constant 512 : index
    %c0_19 = arith.constant 0 : index
    %29 = vector.load %arg1[%c512, %c0_19] : memref<656x128xbf16, #tpu.memory_space<vmem>>, vector<144x32xbf16>
    %cst_20 = arith.constant dense<0.000000e+00> : vector<144x64xf32>
    %30 = tpu.matmul %29, %28, %cst_20 {dimension_numbers = #tpu.dot_dimension_numbers<[1], [0], [0], [1], [0, 0, 1, 1], [], []>} : vector<144x32xbf16>, vector<32x64xbf16>, vector<144x64xf32> -> vector<144x64xf32>
    %31 = vector.shape_cast %30 : vector<144x64xf32> to vector<9x16x64xf32>
    %32 = arith.truncf %31 : vector<9x16x64xf32> to vector<9x16x64xbf16>
    "tpu.trace_start"() <{level = 10 : i32, message = "krc,kco->kro"}> : () -> ()
    %cst_21 = arith.constant dense<0.000000e+00> : vector<9x16x64xf32>
    %33 = tpu.matmul %32, %4, %cst_21 {dimension_numbers = #tpu.dot_dimension_numbers<[2], [1], [1], [2], [0, 0, 0, 1, 1, 2], [0], [0]>} : vector<9x16x64xbf16>, vector<9x64x64xbf16>, vector<9x16x64xf32> -> vector<9x16x64xf32>
    "tpu.trace_stop"() : () -> ()
    %cst_22 = arith.constant dense<0.000000e+00> : vector<16x64xf32>
    %34 = vector.multi_reduction <add>, %33, %cst_22 [0] : vector<9x16x64xf32> to vector<16x64xf32>
    %35 = vector.broadcast %8 : vector<1x64xf32> to vector<16x64xf32>
    %36 = arith.addf %34, %35 : vector<16x64xf32>
    %cst_23 = arith.constant 0.000000e+00 : f32
    %37 = vector.broadcast %cst_23 : f32 to vector<16x64xf32>
    %38 = arith.maximumf %36, %37 : vector<16x64xf32>
    %39 = arith.truncf %38 : vector<16x64xf32> to vector<16x64xbf16>
    %c0_24 = arith.constant 0 : index
    %c0_25 = arith.constant 0 : index
    %40 = vector.load %arg3[%c0_24, %c0_25] : memref<64x512xbf16, #tpu.memory_space<vmem>>, vector<64x512xbf16>
    %cst_26 = arith.constant dense<0.000000e+00> : vector<16x512xf32>
    %41 = tpu.matmul %39, %40, %cst_26 {dimension_numbers = #tpu.dot_dimension_numbers<[1], [0], [0], [1], [0, 0, 1, 1], [], []>} : vector<16x64xbf16>, vector<64x512xbf16>, vector<16x512xf32> -> vector<16x512xf32>
    %42 = vector.broadcast %9 : vector<1x512xf32> to vector<16x512xf32>
    %43 = arith.addf %41, %42 : vector<16x512xf32>
    %cst_27 = arith.constant 0.000000e+00 : f32
    %44 = vector.broadcast %cst_27 : f32 to vector<16x512xf32>
    %45 = arith.maximumf %43, %44 : vector<16x512xf32>
    %46 = arith.truncf %45 : vector<16x512xf32> to vector<16x512xbf16>
    %cst_28 = arith.constant dense<0.000000e+00> : vector<16x6xf32>
    %47 = tpu.matmul %46, %5, %cst_28 {dimension_numbers = #tpu.dot_dimension_numbers<[1], [0], [0], [1], [0, 0, 1, 1], [], []>} : vector<16x512xbf16>, vector<512x6xbf16>, vector<16x6xf32> -> vector<16x6xf32>
    %48 = vector.broadcast %10 : vector<1x6xf32> to vector<16x6xf32>
    %49 = arith.addf %47, %48 : vector<16x6xf32>
    %50 = vector.extract_strided_slice %49 {offsets = [0, 0], sizes = [2, 6], strides = [1, 1]} : vector<16x6xf32> to vector<2x6xf32>
    %c0_29 = arith.constant 0 : index
    %c0_30 = arith.constant 0 : index
    %51 = vector.load %arg5[%c0_29, %c0_30] : memref<2x6xf32, #tpu.memory_space<vmem>>, vector<2x6xf32>
    tpu.vector_store %arg5[%c0_29, %c0_30], %50 {strides = array<i32>} : memref<2x6xf32, #tpu.memory_space<vmem>>, vector<2x6xf32>,
    return
  }
}

</mosaic_0001>

<llo_original>
// kernel: fwd.1
$region0: #{fwd.1}
  #allocation0 [shape = 'u32[]', space=smem, size = 0x4, offset = 0x4, fixed_abs, tag = 'smem constant byte address 0x4 - core index']
  #allocation1 [shape = 'u32[144,128]{1,0:T(1,128)}', space=vmem, size = 0x12000, scoped, tag = 'internal scratch']
  %s0 = inlined_call_operand.vmem [shape: bf16[128,256], index: 0, kind: input, shape index: {}]
  %s1 = inlined_call_operand.vmem [shape: bf16[656,128], index: 1, kind: input, shape index: {}]
  %s2 = inlined_call_operand.vmem [shape: bf16[1856,64], index: 2, kind: input, shape index: {}]
  %s3 = inlined_call_operand.vmem [shape: bf16[64,512], index: 3, kind: input, shape index: {}]
  %s4 = inlined_call_operand.vmem [shape: f32[8,512], index: 4, kind: input, shape index: {}]
  %s5 = inlined_call_operand.hbm [shape: f32[2,6], index: 5, kind: output, shape index: {}]
  %s6 = sld [smem:[#allocation0]]
  $region30: #{fwd.1} parent=0
    _
  %s8 = ssub.s32 1, %s6
  %s9 = scalar_select 0, %s8, %s6
  $region1: #{fwd.1} parent=0
    #allocation2 [shape = 'u8[1024]{0}', space=vmem, size = 0x400, scoped, tag = 'output window, operand 0, single buffered']
    #allocation3 [shape = 's32[1]{0}', space=sflag, size = 0x4, scoped, tag = 'scoped memory for fwd.1']
    %10 = vsyncpa [#allocation3], 0
    // Predicated region
    $region2: #{fwd.1} parent=1 // pred_check
      _
    $region3: #{fwd.1} parent=1 // pred_check_branch
      %12 = sbr.rel (0) target = $region5
    $region4: #{fwd.1} parent=1 // pred_region
      _
    $region5: #{fwd.1} parent=1 // pred_fallthru
      _
    // Predicated region
    $region6: #{fwd.1} parent=1 // pred_check
      _
    $region7: #{fwd.1} parent=1 // pred_check_branch
      %14 = sbr.rel (0) target = $region9
    $region8: #{fwd.1} parent=1 // pred_region
      _
    $region9: #{fwd.1} parent=1 // pred_fallthru
      _
    // Predicated region
    $region10: #{fwd.1} parent=1 // pred_check
      _
    $region11: #{fwd.1} parent=1 // pred_check_branch
      %16 = sbr.rel (0) target = $region13
    $region12: #{fwd.1} parent=1 // pred_region
      _
    $region13: #{fwd.1} parent=1 // pred_fallthru
      _
    // Predicated region
    $region14: #{fwd.1} parent=1 // pred_check
      _
    $region15: #{fwd.1} parent=1 // pred_check_branch
      %18 = sbr.rel (0) target = $region17
    $region16: #{fwd.1} parent=1 // pred_region
      _
    $region17: #{fwd.1} parent=1 // pred_fallthru
      _
    // Predicated region
    $region18: #{fwd.1} parent=1 // pred_check
      _
    $region19: #{fwd.1} parent=1 // pred_check_branch
      %20 = sbr.rel (0) target = $region21
    $region20: #{fwd.1} parent=1 // pred_region
      _
    $region21: #{fwd.1} parent=1 // pred_fallthru
      _
    %v22 = vld [vmem:[%s2] sm:$0xf]
    %v23 = vld [vmem:[%s2 + $0x4] sm:$0xf]
    %v24 = vld [vmem:[%s2 + $0x8] sm:$0xf]
    %v25 = vld [vmem:[%s2 + $0xc] sm:$0xf]
    %v26 = vld [vmem:[%s2 + $0x10] sm:$0xf]
    %v27 = vld [vmem:[%s2 + $0x14] sm:$0xf]
    %v28 = vld [vmem:[%s2 + $0x18] sm:$0xf]
    %v29 = vld [vmem:[%s2 + $0x1c] sm:$0xf]
    %v30 = vld [vmem:[%s2 + $0x20] sm:$0xf]
    %v31 = vld [vmem:[%s2 + $0x24] sm:$0xf]
    %v32 = vld [vmem:[%s2 + $0x28] sm:$0xf]
    %v33 = vld [vmem:[%s2 + $0x2c] sm:$0xf]
    %v34 = vld [vmem:[%s2 + $0x30] sm:$0xf]
    %v35 = vld [vmem:[%s2 + $0x34] sm:$0xf]
    %v36 = vld [vmem:[%s2 + $0x38] sm:$0xf]
    %v37 = vld [vmem:[%s2 + $0x3c] sm:$0xf]
    %v38 = vld [vmem:[%s2 + $0x40] sm:$0xf]
    %v39 = vld [vmem:[%s2 + $0x44] sm:$0xf]
    %v40 = vld [vmem:[%s2 + $0x48] sm:$0xf]
    %v41 = vld [vmem:[%s2 + $0x4c] sm:$0xf]
    %v42 = vld [vmem:[%s2 + $0x50] sm:$0xf]
    %v43 = vld [vmem:[%s2 + $0x54] sm:$0xf]
    %v44 = vld [vmem:[%s2 + $0x58] sm:$0xf]
    %v45 = vld [vmem:[%s2 + $0x5c] sm:$0xf]
    %v46 = vld [vmem:[%s2 + $0x60] sm:$0xf]
    %v47 = vld [vmem:[%s2 + $0x64] sm:$0xf]
    %v48 = vld [vmem:[%s2 + $0x68] sm:$0xf]
    %v49 = vld [vmem:[%s2 + $0x6c] sm:$0xf]
    %v50 = vld [vmem:[%s2 + $0x70] sm:$0xf]
    %v51 = vld [vmem:[%s2 + $0x74] sm:$0xf]
    %v52 = vld [vmem:[%s2 + $0x78] sm:$0xf]
    %v53 = vld [vmem:[%s2 + $0x7c] sm:$0xf]
    %v54 = vld [vmem:[%s2 + $0x80] sm:$0xf]
    %v55 = vld [vmem:[%s2 + $0x84] sm:$0xf]
    %v56 = vld [vmem:[%s2 + $0x88] sm:$0xf]
    %v57 = vld [vmem:[%s2 + $0x8c] sm:$0xf]
    %v58 = vld [vmem:[%s2 + $0x90] sm:$0xf]
    %v59 = vld [vmem:[%s2 + $0x94] sm:$0xf]
    %v60 = vld [vmem:[%s2 + $0x98] sm:$0xf]
    %v61 = vld [vmem:[%s2 + $0x9c] sm:$0xf]
    %v62 = vld [vmem:[%s2 + $0xa0] sm:$0xf]
    %v63 = vld [vmem:[%s2 + $0xa4] sm:$0xf]
    %v64 = vld [vmem:[%s2 + $0xa8] sm:$0xf]
    %v65 = vld [vmem:[%s2 + $0xac] sm:$0xf]
    %v66 = vld [vmem:[%s2 + $0xb0] sm:$0xf]
    %v67 = vld [vmem:[%s2 + $0xb4] sm:$0xf]
    %v68 = vld [vmem:[%s2 + $0xb8] sm:$0xf]
    %v69 = vld [vmem:[%s2 + $0xbc] sm:$0xf]
    %v70 = vld [vmem:[%s2 + $0xc0] sm:$0xf]
    %v71 = vld [vmem:[%s2 + $0xc4] sm:$0xf]
    %v72 = vld [vmem:[%s2 + $0xc8] sm:$0xf]
    %v73 = vld [vmem:[%s2 + $0xcc] sm:$0xf]
    %v74 = vld [vmem:[%s2 + $0xd0] sm:$0xf]
    %v75 = vld [vmem:[%s2 + $0xd4] sm:$0xf]
    %v76 = vld [vmem:[%s2 + $0xd8] sm:$0xf]
    %v77 = vld [vmem:[%s2 + $0xdc] sm:$0xf]
    %v78 = vld [vmem:[%s2 + $0xe0] sm:$0xf]
    %v79 = vld [vmem:[%s2 + $0xe4] sm:$0xf]
    %v80 = vld [vmem:[%s2 + $0xe8] sm:$0xf]
    %v81 = vld [vmem:[%s2 + $0xec] sm:$0xf]
    %v82 = vld [vmem:[%s2 + $0xf0] sm:$0xf]
    %v83 = vld [vmem:[%s2 + $0xf4] sm:$0xf]
    %v84 = vld [vmem:[%s2 + $0xf8] sm:$0xf]
    %v85 = vld [vmem:[%s2 + $0xfc] sm:$0xf]
    %v86 = vld [vmem:[%s2 + $0x100] sm:$0xf]
    %v87 = vld [vmem:[%s2 + $0x104] sm:$0xf]
    %v88 = vld [vmem:[%s2 + $0x108] sm:$0xf]
    %v89 = vld [vmem:[%s2 + $0x10c] sm:$0xf]
    %v90 = vld [vmem:[%s2 + $0x110] sm:$0xf]
    %v91 = vld [vmem:[%s2 + $0x114] sm:$0xf]
    %v92 = vld [vmem:[%s2 + $0x118] sm:$0xf]
    %v93 = vld [vmem:[%s2 + $0x11c] sm:$0xf]
    %v94 = vld [vmem:[%s2 + $0x120] sm:$0xf]
    %v95 = vld [vmem:[%s2 + $0x124] sm:$0xf]
    %v96 = vld [vmem:[%s2 + $0x128] sm:$0xf]
    %v97 = vld [vmem:[%s2 + $0x12c] sm:$0xf]
    %v98 = vld [vmem:[%s2 + $0x130] sm:$0xf]
    %v99 = vld [vmem:[%s2 + $0x134] sm:$0xf]
    %v100 = vld [vmem:[%s2 + $0x138] sm:$0xf]
    %v101 = vld [vmem:[%s2 + $0x13c] sm:$0xf]
    %v102 = vld [vmem:[%s2 + $0x140] sm:$0xf]
    %v103 = vld [vmem:[%s2 + $0x144] sm:$0xf]
    %v104 = vld [vmem:[%s2 + $0x148] sm:$0xf]
    %v105 = vld [vmem:[%s2 + $0x14c] sm:$0xf]
    %v106 = vld [vmem:[%s2 + $0x150] sm:$0xf]
    %v107 = vld [vmem:[%s2 + $0x154] sm:$0xf]
    %v108 = vld [vmem:[%s2 + $0x158] sm:$0xf]
    %v109 = vld [vmem:[%s2 + $0x15c] sm:$0xf]
    %v110 = vld [vmem:[%s2 + $0x160] sm:$0xf]
    %v111 = vld [vmem:[%s2 + $0x164] sm:$0xf]
    %v112 = vld [vmem:[%s2 + $0x168] sm:$0xf]
    %v113 = vld [vmem:[%s2 + $0x16c] sm:$0xf]
    %v114 = vld [vmem:[%s2 + $0x170] sm:$0xf]
    %v115 = vld [vmem:[%s2 + $0x174] sm:$0xf]
    %v116 = vld [vmem:[%s2 + $0x178] sm:$0xf]
    %v117 = vld [vmem:[%s2 + $0x17c] sm:$0xf]
    %v118 = vld [vmem:[%s2 + $0x180] sm:$0xf]
    %v119 = vld [vmem:[%s2 + $0x184] sm:$0xf]
    %v120 = vld [vmem:[%s2 + $0x188] sm:$0xf]
    %v121 = vld [vmem:[%s2 + $0x18c] sm:$0xf]
    %v122 = vld [vmem:[%s2 + $0x190] sm:$0xf]
    %v123 = vld [vmem:[%s2 + $0x194] sm:$0xf]
    %v124 = vld [vmem:[%s2 + $0x198] sm:$0xf]
    %v125 = vld [vmem:[%s2 + $0x19c] sm:$0xf]
    %v126 = vld [vmem:[%s2 + $0x1a0] sm:$0xf]
    %v127 = vld [vmem:[%s2 + $0x1a4] sm:$0xf]
    %v128 = vld [vmem:[%s2 + $0x1a8] sm:$0xf]
    %v129 = vld [vmem:[%s2 + $0x1ac] sm:$0xf]
    %v130 = vld [vmem:[%s2 + $0x1b0] sm:$0xf]
    %v131 = vld [vmem:[%s2 + $0x1b4] sm:$0xf]
    %v132 = vld [vmem:[%s2 + $0x1b8] sm:$0xf]
    %v133 = vld [vmem:[%s2 + $0x1bc] sm:$0xf]
    %v134 = vld [vmem:[%s2 + $0x1c0] sm:$0xf]
    %v135 = vld [vmem:[%s2 + $0x1c4] sm:$0xf]
    %v136 = vld [vmem:[%s2 + $0x1c8] sm:$0xf]
    %v137 = vld [vmem:[%s2 + $0x1cc] sm:$0xf]
    %v138 = vld [vmem:[%s2 + $0x1d0] sm:$0xf]
    %v139 = vld [vmem:[%s2 + $0x1d4] sm:$0xf]
    %v140 = vld [vmem:[%s2 + $0x1d8] sm:$0xf]
    %v141 = vld [vmem:[%s2 + $0x1dc] sm:$0xf]
    %v142 = vld [vmem:[%s2 + $0x1e0] sm:$0xf]
    %v143 = vld [vmem:[%s2 + $0x1e4] sm:$0xf]
    %v144 = vld [vmem:[%s2 + $0x1e8] sm:$0xf]
    %v145 = vld [vmem:[%s2 + $0x1ec] sm:$0xf]
    %v146 = vld [vmem:[%s2 + $0x1f0] sm:$0xf]
    %v147 = vld [vmem:[%s2 + $0x1f4] sm:$0xf]
    %v148 = vld [vmem:[%s2 + $0x1f8] sm:$0xf]
    %v149 = vld [vmem:[%s2 + $0x1fc] sm:$0xf]
    %v150 = vld [vmem:[%s2 + $0x200] sm:$0xf]
    %v151 = vld [vmem:[%s2 + $0x204] sm:$0xf]
    %v152 = vld [vmem:[%s2 + $0x208] sm:$0xf]
    %v153 = vld [vmem:[%s2 + $0x20c] sm:$0xf]
    %v154 = vld [vmem:[%s2 + $0x210] sm:$0xf]
    %v155 = vld [vmem:[%s2 + $0x214] sm:$0xf]
    %v156 = vld [vmem:[%s2 + $0x218] sm:$0xf]
    %v157 = vld [vmem:[%s2 + $0x21c] sm:$0xf]
    %v158 = vld [vmem:[%s2 + $0x220] sm:$0xf]
    %v159 = vld [vmem:[%s2 + $0x224] sm:$0xf]
    %v160 = vld [vmem:[%s2 + $0x228] sm:$0xf]
    %v161 = vld [vmem:[%s2 + $0x22c] sm:$0xf]
    %v162 = vld [vmem:[%s2 + $0x230] sm:$0xf]
    %v163 = vld [vmem:[%s2 + $0x234] sm:$0xf]
    %v164 = vld [vmem:[%s2 + $0x238] sm:$0xf]
    %v165 = vld [vmem:[%s2 + $0x23c] sm:$0xf]
    %v166 = vld [vmem:[%s2 + $0x240] sm:$0xf]
    %v167 = vld [vmem:[%s2 + $0x244] sm:$0xf]
    %v168 = vld [vmem:[%s2 + $0x248] sm:$0xf]
    %v169 = vld [vmem:[%s2 + $0x24c] sm:$0xf]
    %v170 = vld [vmem:[%s2 + $0x250] sm:$0xf]
    %v171 = vld [vmem:[%s2 + $0x254] sm:$0xf]
    %v172 = vld [vmem:[%s2 + $0x258] sm:$0xf]
    %v173 = vld [vmem:[%s2 + $0x25c] sm:$0xf]
    %v174 = vld [vmem:[%s2 + $0x260] sm:$0xf]
    %v175 = vld [vmem:[%s2 + $0x264] sm:$0xf]
    %v176 = vld [vmem:[%s2 + $0x268] sm:$0xf]
    %v177 = vld [vmem:[%s2 + $0x26c] sm:$0xf]
    %v178 = vld [vmem:[%s2 + $0x270] sm:$0xf]
    %v179 = vld [vmem:[%s2 + $0x274] sm:$0xf]
    %v180 = vld [vmem:[%s2 + $0x278] sm:$0xf]
    %v181 = vld [vmem:[%s2 + $0x27c] sm:$0xf]
    %v182 = vld [vmem:[%s2 + $0x280] sm:$0xf]
    %v183 = vld [vmem:[%s2 + $0x284] sm:$0xf]
    %v184 = vld [vmem:[%s2 + $0x288] sm:$0xf]
    %v185 = vld [vmem:[%s2 + $0x28c] sm:$0xf]
    %v186 = vld [vmem:[%s2 + $0x290] sm:$0xf]
    %v187 = vld [vmem:[%s2 + $0x294] sm:$0xf]
    %v188 = vld [vmem:[%s2 + $0x298] sm:$0xf]
    %v189 = vld [vmem:[%s2 + $0x29c] sm:$0xf]
    %v190 = vld [vmem:[%s2 + $0x2a0] sm:$0xf]
    %v191 = vld [vmem:[%s2 + $0x2a4] sm:$0xf]
    %v192 = vld [vmem:[%s2 + $0x2a8] sm:$0xf]
    %v193 = vld [vmem:[%s2 + $0x2ac] sm:$0xf]
    %v194 = vld [vmem:[%s2 + $0x2b0] sm:$0xf]
    %v195 = vld [vmem:[%s2 + $0x2b4] sm:$0xf]
    %v196 = vld [vmem:[%s2 + $0x2b8] sm:$0xf]
    %v197 = vld [vmem:[%s2 + $0x2bc] sm:$0xf]
    %v198 = vld [vmem:[%s2 + $0x2c0] sm:$0xf]
    %v199 = vld [vmem:[%s2 + $0x2c4] sm:$0xf]
    %v200 = vld [vmem:[%s2 + $0x2c8] sm:$0xf]
    %v201 = vld [vmem:[%s2 + $0x2cc] sm:$0xf]
    %v202 = vld [vmem:[%s2 + $0x2d0] sm:$0xf]
    %v203 = vld [vmem:[%s2 + $0x2d4] sm:$0xf]
    %v204 = vld [vmem:[%s2 + $0x2d8] sm:$0xf]
    %v205 = vld [vmem:[%s2 + $0x2dc] sm:$0xf]
    %v206 = vld [vmem:[%s2 + $0x2e0] sm:$0xf]
    %v207 = vld [vmem:[%s2 + $0x2e4] sm:$0xf]
    %v208 = vld [vmem:[%s2 + $0x2e8] sm:$0xf]
    %v209 = vld [vmem:[%s2 + $0x2ec] sm:$0xf]
    %v210 = vld [vmem:[%s2 + $0x2f0] sm:$0xf]
    %v211 = vld [vmem:[%s2 + $0x2f4] sm:$0xf]
    %v212 = vld [vmem:[%s2 + $0x2f8] sm:$0xf]
    %v213 = vld [vmem:[%s2 + $0x2fc] sm:$0xf]
    %v214 = vld [vmem:[%s2 + $0x300] sm:$0xf]
    %v215 = vld [vmem:[%s2 + $0x304] sm:$0xf]
    %v216 = vld [vmem:[%s2 + $0x308] sm:$0xf]
    %v217 = vld [vmem:[%s2 + $0x30c] sm:$0xf]
    %v218 = vld [vmem:[%s2 + $0x310] sm:$0xf]
    %v219 = vld [vmem:[%s2 + $0x314] sm:$0xf]
    %v220 = vld [vmem:[%s2 + $0x318] sm:$0xf]
    %v221 = vld [vmem:[%s2 + $0x31c] sm:$0xf]
    %v222 = vld [vmem:[%s2 + $0x320] sm:$0xf]
    %v223 = vld [vmem:[%s2 + $0x324] sm:$0xf]
    %v224 = vld [vmem:[%s2 + $0x328] sm:$0xf]
    %v225 = vld [vmem:[%s2 + $0x32c] sm:$0xf]
    %v226 = vld [vmem:[%s2 + $0x330] sm:$0xf]
    %v227 = vld [vmem:[%s2 + $0x334] sm:$0xf]
    %v228 = vld [vmem:[%s2 + $0x338] sm:$0xf]
    %v229 = vld [vmem:[%s2 + $0x33c] sm:$0xf]
    %v230 = vld [vmem:[%s2 + $0x340] sm:$0xf]
    %v231 = vld [vmem:[%s2 + $0x344] sm:$0xf]
    %v232 = vld [vmem:[%s2 + $0x348] sm:$0xf]
    %v233 = vld [vmem:[%s2 + $0x34c] sm:$0xf]
    %v234 = vld [vmem:[%s2 + $0x350] sm:$0xf]
    %v235 = vld [vmem:[%s2 + $0x354] sm:$0xf]
    %v236 = vld [vmem:[%s2 + $0x358] sm:$0xf]
    %v237 = vld [vmem:[%s2 + $0x35c] sm:$0xf]
    %v238 = vld [vmem:[%s2 + $0x360] sm:$0xf]
    %v239 = vld [vmem:[%s2 + $0x364] sm:$0xf]
    %v240 = vld [vmem:[%s2 + $0x368] sm:$0xf]
    %v241 = vld [vmem:[%s2 + $0x36c] sm:$0xf]
    %v242 = vld [vmem:[%s2 + $0x370] sm:$0xf]
    %v243 = vld [vmem:[%s2 + $0x374] sm:$0xf]
    %v244 = vld [vmem:[%s2 + $0x378] sm:$0xf]
    %v245 = vld [vmem:[%s2 + $0x37c] sm:$0xf]
    %v246 = vld [vmem:[%s2 + $0x380] sm:$0xf]
    %v247 = vld [vmem:[%s2 + $0x384] sm:$0xf]
    %v248 = vld [vmem:[%s2 + $0x388] sm:$0xf]
    %v249 = vld [vmem:[%s2 + $0x38c] sm:$0xf]
    %v250 = vld [vmem:[%s2 + $0x390] sm:$0xf]
    %v251 = vld [vmem:[%s2 + $0x394] sm:$0xf]
    %v252 = vld [vmem:[%s2 + $0x398] sm:$0xf]
    %v253 = vld [vmem:[%s2 + $0x39c] sm:$0xf]
    %v254 = vld [vmem:[%s4] ss:$0 sm:$0xff]
    %v255 = vld [vmem:[%s4 + $0x1] ss:$0 sm:$0xff]
    %v256 = vld [vmem:[%s4 + $0x2] ss:$0 sm:$0xff]
    %s257 = scalar_lea.vmem %s4, 3
    %v258 = vld [vmem:[%s257] ss:$8 sm:$0xf]
    %v259 = vld [vmem:[%s4 + $0x4] ss:$0 sm:$0xff]
    %v260 = vld [vmem:[%s0] sm:$0xff]
    %v261 = vld [vmem:[%s0 + $0x8] sm:$0xff]
    %v262 = vld [vmem:[%s0 + $0x10] sm:$0xff]
    %v263 = vld [vmem:[%s0 + $0x18] sm:$0xff]
    %v264 = vld [vmem:[%s0 + $0x20] sm:$0xff]
    %v265 = vld [vmem:[%s0 + $0x28] sm:$0xff]
    %v266 = vld [vmem:[%s0 + $0x30] sm:$0xff]
    %v267 = vld [vmem:[%s0 + $0x38] sm:$0xff]
    %v268 = vld [vmem:[%s0 + $0x40] sm:$0xff]
    %v269 = vld [vmem:[%s0 + $0x48] sm:$0xff]
    %v270 = vld [vmem:[%s0 + $0x50] sm:$0xff]
    %v271 = vld [vmem:[%s0 + $0x58] sm:$0xff]
    %v272 = vld [vmem:[%s0 + $0x60] sm:$0xff]
    %v273 = vld [vmem:[%s0 + $0x68] sm:$0xff]
    %v274 = vld [vmem:[%s0 + $0x70] sm:$0xff]
    %v275 = vld [vmem:[%s0 + $0x78] sm:$0xff]
    %v292 = vunpack.c.l.b16 %v260
    %v293 = vunpack.c.h.b16 %v260
    %v294 = vunpack.c.l.b16 %v261
    %v295 = vunpack.c.h.b16 %v261
    %v296 = vunpack.c.l.b16 %v262
    %v297 = vunpack.c.h.b16 %v262
    %v298 = vunpack.c.l.b16 %v263
    %v299 = vunpack.c.h.b16 %v263
    %v300 = vunpack.c.l.b16 %v264
    %v301 = vunpack.c.h.b16 %v264
    %v302 = vunpack.c.l.b16 %v265
    %v303 = vunpack.c.h.b16 %v265
    %v304 = vunpack.c.l.b16 %v266
    %v305 = vunpack.c.h.b16 %v266
    %v306 = vunpack.c.l.b16 %v267
    %v307 = vunpack.c.h.b16 %v267
    %v308 = vunpack.c.l.b16 %v268
    %v309 = vunpack.c.h.b16 %v268
    %v310 = vunpack.c.l.b16 %v269
    %v311 = vunpack.c.h.b16 %v269
    %v312 = vunpack.c.l.b16 %v270
    %v313 = vunpack.c.h.b16 %v270
    %v314 = vunpack.c.l.b16 %v271
    %v315 = vunpack.c.h.b16 %v271
    %v316 = vunpack.c.l.b16 %v272
    %v317 = vunpack.c.h.b16 %v272
    %v318 = vunpack.c.l.b16 %v273
    %v319 = vunpack.c.h.b16 %v273
    %v320 = vunpack.c.l.b16 %v274
    %v321 = vunpack.c.h.b16 %v274
    %v322 = vunpack.c.l.b16 %v275
    %v323 = vunpack.c.h.b16 %v275
    %v324 = vpack.c.b16 %v294, %v292
    %v325 = vpack.c.b16 %v295, %v293
    %v326 = vpack.c.b16 %v298, %v296
    %v327 = vpack.c.b16 %v299, %v297
    %v328 = vpack.c.b16 %v302, %v300
    %v329 = vpack.c.b16 %v303, %v301
    %v330 = vpack.c.b16 %v306, %v304
    %v331 = vpack.c.b16 %v307, %v305
    %v332 = vpack.c.b16 %v310, %v308
    %v333 = vpack.c.b16 %v311, %v309
    %v334 = vpack.c.b16 %v314, %v312
    %v335 = vpack.c.b16 %v315, %v313
    %v336 = vpack.c.b16 %v318, %v316
    %v337 = vpack.c.b16 %v319, %v317
    %v338 = vpack.c.b16 %v322, %v320
    %v339 = vpack.c.b16 %v323, %v321
    %v388 = vunpack.c.l.b16 %v22
    %v389 = vunpack.c.l.b16 %v23
    %v390 = vunpack.c.l.b16 %v24
    %v391 = vunpack.c.l.b16 %v25
    %v392 = vunpack.c.l.b16 %v26
    %v393 = vunpack.c.l.b16 %v27
    %v394 = vunpack.c.l.b16 %v28
    %v395 = vunpack.c.l.b16 %v29
    %v396 = vunpack.c.l.b16 %v30
    %v397 = vunpack.c.l.b16 %v31
    %v398 = vunpack.c.l.b16 %v32
    %v399 = vunpack.c.l.b16 %v33
    %v400 = vunpack.c.l.b16 %v34
    %v401 = vunpack.c.l.b16 %v35
    %v402 = vunpack.c.l.b16 %v36
    %v403 = vunpack.c.l.b16 %v37
    %v404 = vunpack.c.l.b16 %v38
    %v405 = vunpack.c.l.b16 %v39
    %v406 = vunpack.c.l.b16 %v40
    %v407 = vunpack.c.l.b16 %v41
    %v408 = vunpack.c.l.b16 %v42
    %v409 = vunpack.c.l.b16 %v43
    %v410 = vunpack.c.l.b16 %v44
    %v411 = vunpack.c.l.b16 %v45
    %v412 = vunpack.c.l.b16 %v46
    %v413 = vunpack.c.l.b16 %v47
    %v414 = vunpack.c.l.b16 %v48
    %v415 = vunpack.c.l.b16 %v49
    %v416 = vunpack.c.l.b16 %v50
    %v417 = vunpack.c.l.b16 %v51
    %v418 = vunpack.c.l.b16 %v52
    %v419 = vunpack.c.l.b16 %v53
    %v420 = vpack.c.b16 %v389, %v388
    %v421 = vpack.c.b16 %v391, %v390
    %v422 = vpack.c.b16 %v393, %v392
    %v423 = vpack.c.b16 %v395, %v394
    %v424 = vpack.c.b16 %v397, %v396
    %v425 = vpack.c.b16 %v399, %v398
    %v426 = vpack.c.b16 %v401, %v400
    %v427 = vpack.c.b16 %v403, %v402
    %v428 = vpack.c.b16 %v405, %v404
    %v429 = vpack.c.b16 %v407, %v406
    %v430 = vpack.c.b16 %v409, %v408
    %v431 = vpack.c.b16 %v411, %v410
    %v432 = vpack.c.b16 %v413, %v412
    %v433 = vpack.c.b16 %v415, %v414
    %v434 = vpack.c.b16 %v417, %v416
    %v435 = vpack.c.b16 %v419, %v418
    %452 = vmatprep.subr.bf16.mxu0 0
    %453 = vmatpush1.bf16.msra.mxu0 %v420
    %454 = vmatprep.subr.bf16.mxu0 0
    %455 = vmatpush1.bf16.msra.mxu0 %v421
    %456 = vmatprep.subr.bf16.mxu0 0
    %457 = vmatpush1.bf16.msra.mxu0 %v422
    %458 = vmatprep.subr.bf16.mxu0 0
    %459 = vmatpush1.bf16.msra.mxu0 %v423
    %460 = vmatprep.subr.bf16.mxu0 0
    %461 = vmatpush1.bf16.msra.mxu0 %v424
    %462 = vmatprep.subr.bf16.mxu0 0
    %463 = vmatpush1.bf16.msra.mxu0 %v425
    %464 = vmatprep.subr.bf16.mxu0 0
    %465 = vmatpush1.bf16.msra.mxu0 %v426
    %466 = vmatprep.subr.bf16.mxu0 0
    %467 = vmatpush1.bf16.msra.mxu0 %v427
    %468 = vmatprep.subr.bf16.mxu0 0
    %469 = vmatpush1.bf16.msra.mxu0 %v428
    %470 = vmatprep.subr.bf16.mxu0 0
    %471 = vmatpush1.bf16.msra.mxu0 %v429
    %472 = vmatprep.subr.bf16.mxu0 0
    %473 = vmatpush1.bf16.msra.mxu0 %v430
    %474 = vmatprep.subr.bf16.mxu0 0
    %475 = vmatpush1.bf16.msra.mxu0 %v431
    %476 = vmatprep.subr.bf16.mxu0 0
    %477 = vmatpush1.bf16.msra.mxu0 %v432
    %478 = vmatprep.subr.bf16.mxu0 0
    %479 = vmatpush1.bf16.msra.mxu0 %v433
    %480 = vmatprep.subr.bf16.mxu0 0
    %481 = vmatpush1.bf16.msra.mxu0 %v434
    %482 = vmatprep.subr.bf16.mxu0 0
    %483 = vmatpush1.bf16.msra.mxu0 %v435
    %484 = vmatprep.mubr.bf16.mxu0 %v325
    %485 = vmatmul.mubr.bf16.gmra.mrb[0].mxu0 %v324
    %v486 = vpop.f32.mrb[0].mxu0
    %v487 = vadd.f32 %v254, %v486
    %v488 = vpop.f32.mrb[0].mxu0
    %v489 = vpop.f32.mrb[0].mxu0
    %v490 = vadd.f32 %v254, %v489
    %v491 = vpop.f32.mrb[0].mxu0
    %492 = vmatprep.mubr.bf16.mxu0 %v327
    %493 = vmatmul.mubr.bf16.gmra.mrb[0].mxu0 %v326
    %v494 = vpop.f32.mrb[0].mxu0
    %v495 = vadd.f32 %v254, %v494
    %v496 = vpop.f32.mrb[0].mxu0
    %v497 = vpop.f32.mrb[0].mxu0
    %v498 = vadd.f32 %v254, %v497
    %v499 = vpop.f32.mrb[0].mxu0
    %500 = vmatprep.mubr.bf16.mxu0 %v329
    %501 = vmatmul.mubr.bf16.gmra.mrb[0].mxu0 %v328
    %v502 = vpop.f32.mrb[0].mxu0
    %v503 = vadd.f32 %v254, %v502
    %v504 = vpop.f32.mrb[0].mxu0
    %v505 = vpop.f32.mrb[0].mxu0
    %v506 = vadd.f32 %v254, %v505
    %v507 = vpop.f32.mrb[0].mxu0
    %508 = vmatprep.mubr.bf16.mxu0 %v331
    %509 = vmatmul.mubr.bf16.gmra.mrb[0].mxu0 %v330
    %v510 = vpop.f32.mrb[0].mxu0
    %v511 = vadd.f32 %v254, %v510
    %v512 = vpop.f32.mrb[0].mxu0
    %v513 = vpop.f32.mrb[0].mxu0
    %v514 = vadd.f32 %v254, %v513
    %v515 = vpop.f32.mrb[0].mxu0
    %516 = vmatprep.mubr.bf16.mxu0 %v333
    %517 = vmatmul.mubr.bf16.gmra.mrb[0].mxu0 %v332
    %v518 = vpop.f32.mrb[0].mxu0
    %v519 = vadd.f32 %v254, %v518
    %v520 = vpop.f32.mrb[0].mxu0
    %v521 = vpop.f32.mrb[0].mxu0
    %v522 = vadd.f32 %v254, %v521
    %v523 = vpop.f32.mrb[0].mxu0
    %524 = vmatprep.mubr.bf16.mxu0 %v335
    %525 = vmatmul.mubr.bf16.gmra.mrb[0].mxu0 %v334
    %v526 = vpop.f32.mrb[0].mxu0
    %v527 = vadd.f32 %v254, %v526
    %v528 = vpop.f32.mrb[0].mxu0
    %v529 = vpop.f32.mrb[0].mxu0
    %v530 = vadd.f32 %v254, %v529
    %v531 = vpop.f32.mrb[0].mxu0
    %532 = vmatprep.mubr.bf16.mxu0 %v337
    %533 = vmatmul.mubr.bf16.gmra.mrb[0].mxu0 %v336
    %v534 = vpop.f32.mrb[0].mxu0
    %v535 = vadd.f32 %v254, %v534
    %v536 = vpop.f32.mrb[0].mxu0
    %v537 = vpop.f32.mrb[0].mxu0
    %v538 = vadd.f32 %v254, %v537
    %v539 = vpop.f32.mrb[0].mxu0
    %540 = vmatprep.mubr.bf16.mxu0 %v339
    %541 = vmatmul.mubr.bf16.gmra.mrb[0].mxu0 %v338
    %v542 = vpop.f32.mrb[0].mxu0
    %v543 = vadd.f32 %v254, %v542
    %v544 = vpop.f32.mrb[0].mxu0
    %v545 = vpop.f32.mrb[0].mxu0
    %v546 = vadd.f32 %v254, %v545
    %v547 = vpop.f32.mrb[0].mxu0
    %548 = vdwg.mxu0
    %v549 = vmax.f32 %v487, 0.0
    %v550 = vmax.f32 %v490, 0.0
    %v551 = vmax.f32 %v495, 0.0
    %v552 = vmax.f32 %v498, 0.0
    %v553 = vmax.f32 %v503, 0.0
    %v554 = vmax.f32 %v506, 0.0
    %v555 = vmax.f32 %v511, 0.0
    %v556 = vmax.f32 %v514, 0.0
    %v557 = vmax.f32 %v519, 0.0
    %v558 = vmax.f32 %v522, 0.0
    %v559 = vmax.f32 %v527, 0.0
    %v560 = vmax.f32 %v530, 0.0
    %v561 = vmax.f32 %v535, 0.0
    %v562 = vmax.f32 %v538, 0.0
    %v563 = vmax.f32 %v543, 0.0
    %v564 = vmax.f32 %v546, 0.0
    %v565 = vpack.c.bf16 %v550, %v549
    %v566 = vpack.c.bf16 %v552, %v551
    %v567 = vpack.c.bf16 %v554, %v553
    %v568 = vpack.c.bf16 %v556, %v555
    %v569 = vpack.c.bf16 %v558, %v557
    %v570 = vpack.c.bf16 %v560, %v559
    %v571 = vpack.c.bf16 %v562, %v561
    %v572 = vpack.c.bf16 %v564, %v563
    %v573 = vld [vmem:[%s1] sm:$0xf]
    %v574 = vld [vmem:[%s1 + $0x4] sm:$0xf]
    %v575 = vld [vmem:[%s1 + $0x8] sm:$0xf]
    %v576 = vld [vmem:[%s1 + $0xc] sm:$0xf]
    %v577 = vld [vmem:[%s1 + $0x10] sm:$0xf]
    %v578 = vld [vmem:[%s1 + $0x14] sm:$0xf]
    %v579 = vld [vmem:[%s1 + $0x18] sm:$0xf]
    %v580 = vld [vmem:[%s1 + $0x1c] sm:$0xf]
    %v581 = vld [vmem:[%s1 + $0x20] sm:$0xf]
    %v582 = vld [vmem:[%s1 + $0x24] sm:$0xf]
    %v583 = vld [vmem:[%s1 + $0x28] sm:$0xf]
    %v584 = vld [vmem:[%s1 + $0x2c] sm:$0xf]
    %v585 = vld [vmem:[%s1 + $0x30] sm:$0xf]
    %v586 = vld [vmem:[%s1 + $0x34] sm:$0xf]
    %v587 = vld [vmem:[%s1 + $0x38] sm:$0xf]
    %v588 = vld [vmem:[%s1 + $0x3c] sm:$0xf]
    %v589 = vld [vmem:[%s1 + $0x40] sm:$0xf]
    %v590 = vld [vmem:[%s1 + $0x44] sm:$0xf]
    %v591 = vld [vmem:[%s1 + $0x48] sm:$0xf]
    %v592 = vld [vmem:[%s1 + $0x4c] sm:$0xf]
    %v593 = vld [vmem:[%s1 + $0x50] sm:$0xf]
    %v594 = vld [vmem:[%s1 + $0x54] sm:$0xf]
    %v595 = vld [vmem:[%s1 + $0x58] sm:$0xf]
    %v596 = vld [vmem:[%s1 + $0x5c] sm:$0xf]
    %v597 = vld [vmem:[%s1 + $0x60] sm:$0xf]
    %v598 = vld [vmem:[%s1 + $0x64] sm:$0xf]
    %v599 = vld [vmem:[%s1 + $0x68] sm:$0xf]
    %v600 = vld [vmem:[%s1 + $0x6c] sm:$0xf]
    %v601 = vld [vmem:[%s1 + $0x70] sm:$0xf]
    %v602 = vld [vmem:[%s1 + $0x74] sm:$0xf]
    %v603 = vld [vmem:[%s1 + $0x78] sm:$0xf]
    %v604 = vld [vmem:[%s1 + $0x7c] sm:$0xf]
    %v605 = vld [vmem:[%s1 + $0x80] sm:$0xf]
    %v606 = vld [vmem:[%s1 + $0x84] sm:$0xf]
    %v607 = vld [vmem:[%s1 + $0x88] sm:$0xf]
    %v608 = vld [vmem:[%s1 + $0x8c] sm:$0xf]
    %v609 = vld [vmem:[%s1 + $0x90] sm:$0xf]
    %v610 = vld [vmem:[%s1 + $0x94] sm:$0xf]
    %v611 = vld [vmem:[%s1 + $0x98] sm:$0xf]
    %v612 = vld [vmem:[%s1 + $0x9c] sm:$0xf]
    %v613 = vld [vmem:[%s1 + $0xa0] sm:$0xf]
    %v614 = vld [vmem:[%s1 + $0xa4] sm:$0xf]
    %v615 = vld [vmem:[%s1 + $0xa8] sm:$0xf]
    %v616 = vld [vmem:[%s1 + $0xac] sm:$0xf]
    %v617 = vld [vmem:[%s1 + $0xb0] sm:$0xf]
    %v618 = vld [vmem:[%s1 + $0xb4] sm:$0xf]
    %v619 = vld [vmem:[%s1 + $0xb8] sm:$0xf]
    %v620 = vld [vmem:[%s1 + $0xbc] sm:$0xf]
    %v621 = vld [vmem:[%s1 + $0xc0] sm:$0xf]
    %v622 = vld [vmem:[%s1 + $0xc4] sm:$0xf]
    %v623 = vld [vmem:[%s1 + $0xc8] sm:$0xf]
    %v624 = vld [vmem:[%s1 + $0xcc] sm:$0xf]
    %v625 = vld [vmem:[%s1 + $0xd0] sm:$0xf]
    %v626 = vld [vmem:[%s1 + $0xd4] sm:$0xf]
    %v627 = vld [vmem:[%s1 + $0xd8] sm:$0xf]
    %v628 = vld [vmem:[%s1 + $0xdc] sm:$0xf]
    %v629 = vld [vmem:[%s1 + $0xe0] sm:$0xf]
    %v630 = vld [vmem:[%s1 + $0xe4] sm:$0xf]
    %v631 = vld [vmem:[%s1 + $0xe8] sm:$0xf]
    %v632 = vld [vmem:[%s1 + $0xec] sm:$0xf]
    %v633 = vld [vmem:[%s1 + $0xf0] sm:$0xf]
    %v634 = vld [vmem:[%s1 + $0xf4] sm:$0xf]
    %v635 = vld [vmem:[%s1 + $0xf8] sm:$0xf]
    %v636 = vld [vmem:[%s1 + $0xfc] sm:$0xf]
    %v701 = vunpack.c.l.b16 %v573
    %v702 = vunpack.c.l.b16 %v574
    %v703 = vunpack.c.l.b16 %v575
    %v704 = vunpack.c.l.b16 %v576
    %v705 = vunpack.c.l.b16 %v577
    %v706 = vunpack.c.l.b16 %v578
    %v707 = vunpack.c.l.b16 %v579
    %v708 = vunpack.c.l.b16 %v580
    %v709 = vunpack.c.l.b16 %v581
    %v710 = vunpack.c.l.b16 %v582
    %v711 = vunpack.c.l.b16 %v583
    %v712 = vunpack.c.l.b16 %v584
    %v713 = vunpack.c.l.b16 %v585
    %v714 = vunpack.c.l.b16 %v586
    %v715 = vunpack.c.l.b16 %v587
    %v716 = vunpack.c.l.b16 %v588
    %v717 = vunpack.c.l.b16 %v589
    %v718 = vunpack.c.l.b16 %v590
    %v719 = vunpack.c.l.b16 %v591
    %v720 = vunpack.c.l.b16 %v592
    %v721 = vunpack.c.l.b16 %v593
    %v722 = vunpack.c.l.b16 %v594
    %v723 = vunpack.c.l.b16 %v595
    %v724 = vunpack.c.l.b16 %v596
    %v725 = vunpack.c.l.b16 %v597
    %v726 = vunpack.c.l.b16 %v598
    %v727 = vunpack.c.l.b16 %v599
    %v728 = vunpack.c.l.b16 %v600
    %v729 = vunpack.c.l.b16 %v601
    %v730 = vunpack.c.l.b16 %v602
    %v731 = vunpack.c.l.b16 %v603
    %v732 = vunpack.c.l.b16 %v604
    %v733 = vunpack.c.l.b16 %v605
    %v734 = vunpack.c.l.b16 %v606
    %v735 = vunpack.c.l.b16 %v607
    %v736 = vunpack.c.l.b16 %v608
    %v737 = vunpack.c.l.b16 %v609
    %v738 = vunpack.c.l.b16 %v610
    %v739 = vunpack.c.l.b16 %v611
    %v740 = vunpack.c.l.b16 %v612
    %v741 = vunpack.c.l.b16 %v613
    %v742 = vunpack.c.l.b16 %v614
    %v743 = vunpack.c.l.b16 %v615
    %v744 = vunpack.c.l.b16 %v616
    %v745 = vunpack.c.l.b16 %v617
    %v746 = vunpack.c.l.b16 %v618
    %v747 = vunpack.c.l.b16 %v619
    %v748 = vunpack.c.l.b16 %v620
    %v749 = vunpack.c.l.b16 %v621
    %v750 = vunpack.c.l.b16 %v622
    %v751 = vunpack.c.l.b16 %v623
    %v752 = vunpack.c.l.b16 %v624
    %v753 = vunpack.c.l.b16 %v625
    %v754 = vunpack.c.l.b16 %v626
    %v755 = vunpack.c.l.b16 %v627
    %v756 = vunpack.c.l.b16 %v628
    %v757 = vunpack.c.l.b16 %v629
    %v758 = vunpack.c.l.b16 %v630
    %v759 = vunpack.c.l.b16 %v631
    %v760 = vunpack.c.l.b16 %v632
    %v761 = vunpack.c.l.b16 %v633
    %v762 = vunpack.c.l.b16 %v634
    %v763 = vunpack.c.l.b16 %v635
    %v764 = vunpack.c.l.b16 %v636
    %v765 = vpack.c.b16 %v702, %v701
    %v766 = vpack.c.b16 %v704, %v703
    %v767 = vpack.c.b16 %v706, %v705
    %v768 = vpack.c.b16 %v708, %v707
    %v769 = vpack.c.b16 %v710, %v709
    %v770 = vpack.c.b16 %v712, %v711
    %v771 = vpack.c.b16 %v714, %v713
    %v772 = vpack.c.b16 %v716, %v715
    %v773 = vpack.c.b16 %v718, %v717
    %v774 = vpack.c.b16 %v720, %v719
    %v775 = vpack.c.b16 %v722, %v721
    %v776 = vpack.c.b16 %v724, %v723
    %v777 = vpack.c.b16 %v726, %v725
    %v778 = vpack.c.b16 %v728, %v727
    %v779 = vpack.c.b16 %v730, %v729
    %v780 = vpack.c.b16 %v732, %v731
    %v781 = vpack.c.b16 %v734, %v733
    %v782 = vpack.c.b16 %v736, %v735
    %v783 = vpack.c.b16 %v738, %v737
    %v784 = vpack.c.b16 %v740, %v739
    %v785 = vpack.c.b16 %v742, %v741
    %v786 = vpack.c.b16 %v744, %v743
    %v787 = vpack.c.b16 %v746, %v745
    %v788 = vpack.c.b16 %v748, %v747
    %v789 = vpack.c.b16 %v750, %v749
    %v790 = vpack.c.b16 %v752, %v751
    %v791 = vpack.c.b16 %v754, %v753
    %v792 = vpack.c.b16 %v756, %v755
    %v793 = vpack.c.b16 %v758, %v757
    %v794 = vpack.c.b16 %v760, %v759
    %v795 = vpack.c.b16 %v762, %v761
    %v796 = vpack.c.b16 %v764, %v763
    %829 = vmatprep.subr.bf16.mxu0 0
    %830 = vmatpush1.bf16.msra.mxu0 %v565
    %831 = vmatprep.subr.bf16.mxu0 0
    %832 = vmatpush1.bf16.msra.mxu0 %v566
    %833 = vmatprep.subr.bf16.mxu0 0
    %834 = vmatpush1.bf16.msra.mxu0 %v567
    %835 = vmatprep.subr.bf16.mxu0 0
    %836 = vmatpush1.bf16.msra.mxu0 %v568
    %837 = vmatprep.subr.bf16.mxu0 0
    %838 = vmatpush1.bf16.msra.mxu0 %v569
    %839 = vmatprep.subr.bf16.mxu0 0
    %840 = vmatpush1.bf16.msra.mxu0 %v570
    %841 = vmatprep.subr.bf16.mxu0 0
    %842 = vmatpush1.bf16.msra.mxu0 %v571
    %843 = vmatprep.subr.bf16.mxu0 0
    %844 = vmatpush1.bf16.msra.mxu0 %v572
    %845 = vmatprep.subr.bf16.mxu0 0
    %846 = vmatpush1.bf16.msra.mxu0 0
    %847 = vmatprep.subr.bf16.mxu0 0
    %848 = vmatpush1.bf16.msra.mxu0 0
    %849 = vmatprep.subr.bf16.mxu0 0
    %850 = vmatpush1.bf16.msra.mxu0 0
    %851 = vmatprep.subr.bf16.mxu0 0
    %852 = vmatpush1.bf16.msra.mxu0 0
    %853 = vmatprep.subr.bf16.mxu0 0
    %854 = vmatpush1.bf16.msra.mxu0 0
    %855 = vmatprep.subr.bf16.mxu0 0
    %856 = vmatpush1.bf16.msra.mxu0 0
    %857 = vmatprep.subr.bf16.mxu0 0
    %858 = vmatpush1.bf16.msra.mxu0 0
    %859 = vmatprep.subr.bf16.mxu0 0
    %860 = vmatpush1.bf16.msra.mxu0 0
    %861 = vmatprep.mubr.bf16.mxu0 0
    %862 = vmatmul.mubr.bf16.gmra.mrb[0].mxu0 %v765
    %v863 = vpop.f32.mrb[0].mxu0
    %v864 = vadd.f32 0.0, %v863
    %v865 = vpop.f32.mrb[0].mxu0
    %v866 = vpop.f32.mrb[0].mxu0
    %v867 = vadd.f32 0.0, %v866
    %v868 = vpop.f32.mrb[0].mxu0
    %869 = vmatprep.mubr.bf16.mxu0 0
    %870 = vmatmul.mubr.bf16.gmra.mrb[0].mxu0 %v766
    %v871 = vpop.f32.mrb[0].mxu0
    %v872 = vadd.f32 0.0, %v871
    %v873 = vpop.f32.mrb[0].mxu0
    %v874 = vpop.f32.mrb[0].mxu0
    %v875 = vadd.f32 0.0, %v874
    %v876 = vpop.f32.mrb[0].mxu0
    %877 = vmatprep.mubr.bf16.mxu0 0
    %878 = vmatmul.mubr.bf16.gmra.mrb[0].mxu0 %v767
    %v879 = vpop.f32.mrb[0].mxu0
    %v880 = vadd.f32 0.0, %v879
    %v881 = vpop.f32.mrb[0].mxu0
    %v882 = vpop.f32.mrb[0].mxu0
    %v883 = vadd.f32 0.0, %v882
    %v884 = vpop.f32.mrb[0].mxu0
    %885 = vmatprep.mubr.bf16.mxu0 0
    %886 = vmatmul.mubr.bf16.gmra.mrb[0].mxu0 %v768
    %v887 = vpop.f32.mrb[0].mxu0
    %v888 = vadd.f32 0.0, %v887
    %v889 = vpop.f32.mrb[0].mxu0
    %v890 = vpop.f32.mrb[0].mxu0
    %v891 = vadd.f32 0.0, %v890
    %v892 = vpop.f32.mrb[0].mxu0
    %893 = vmatprep.mubr.bf16.mxu0 0
    %894 = vmatmul.mubr.bf16.gmra.mrb[0].mxu0 %v769
    %v895 = vpop.f32.mrb[0].mxu0
    %v896 = vadd.f32 0.0, %v895
    %v897 = vpop.f32.mrb[0].mxu0
    %v898 = vpop.f32.mrb[0].mxu0
    %v899 = vadd.f32 0.0, %v898
    %v900 = vpop.f32.mrb[0].mxu0
    %901 = vmatprep.mubr.bf16.mxu0 0
    %902 = vmatmul.mubr.bf16.gmra.mrb[0].mxu0 %v770
    %v903 = vpop.f32.mrb[0].mxu0
    %v904 = vadd.f32 0.0, %v903
    %v905 = vpop.f32.mrb[0].mxu0
    %v906 = vpop.f32.mrb[0].mxu0
    %v907 = vadd.f32 0.0, %v906
    %v908 = vpop.f32.mrb[0].mxu0
    %909 = vmatprep.mubr.bf16.mxu0 0
    %910 = vmatmul.mubr.bf16.gmra.mrb[0].mxu0 %v771
    %v911 = vpop.f32.mrb[0].mxu0
    %v912 = vadd.f32 0.0, %v911
    %v913 = vpop.f32.mrb[0].mxu0
    %v914 = vpop.f32.mrb[0].mxu0
    %v915 = vadd.f32 0.0, %v914
    %v916 = vpop.f32.mrb[0].mxu0
    %917 = vmatprep.mubr.bf16.mxu0 0
    %918 = vmatmul.mubr.bf16.gmra.mrb[0].mxu0 %v772
    %v919 = vpop.f32.mrb[0].mxu0
    %v920 = vadd.f32 0.0, %v919
    %v921 = vpop.f32.mrb[0].mxu0
    %v922 = vpop.f32.mrb[0].mxu0
    %v923 = vadd.f32 0.0, %v922
    %v924 = vpop.f32.mrb[0].mxu0
    %925 = vmatprep.mubr.bf16.mxu0 0
    %926 = vmatmul.mubr.bf16.gmra.mrb[0].mxu0 %v773
    %v927 = vpop.f32.mrb[0].mxu0
    %v928 = vadd.f32 0.0, %v927
    %v929 = vpop.f32.mrb[0].mxu0
    %v930 = vpop.f32.mrb[0].mxu0
    %v931 = vadd.f32 0.0, %v930
    %v932 = vpop.f32.mrb[0].mxu0
    %933 = vmatprep.mubr.bf16.mxu0 0
    %934 = vmatmul.mubr.bf16.gmra.mrb[0].mxu0 %v774
    %v935 = vpop.f32.mrb[0].mxu0
    %v936 = vadd.f32 0.0, %v935
    %v937 = vpop.f32.mrb[0].mxu0
    %v938 = vpop.f32.mrb[0].mxu0
    %v939 = vadd.f32 0.0, %v938
    %v940 = vpop.f32.mrb[0].mxu0
    %941 = vmatprep.mubr.bf16.mxu0 0
    %942 = vmatmul.mubr.bf16.gmra.mrb[0].mxu0 %v775
    %v943 = vpop.f32.mrb[0].mxu0
    %v944 = vadd.f32 0.0, %v943
    %v945 = vpop.f32.mrb[0].mxu0
    %v946 = vpop.f32.mrb[0].mxu0
    %v947 = vadd.f32 0.0, %v946
    %v948 = vpop.f32.mrb[0].mxu0
    %949 = vmatprep.mubr.bf16.mxu0 0
    %950 = vmatmul.mubr.bf16.gmra.mrb[0].mxu0 %v776
    %v951 = vpop.f32.mrb[0].mxu0
    %v952 = vadd.f32 0.0, %v951
    %v953 = vpop.f32.mrb[0].mxu0
    %v954 = vpop.f32.mrb[0].mxu0
    %v955 = vadd.f32 0.0, %v954
    %v956 = vpop.f32.mrb[0].mxu0
    %957 = vmatprep.mubr.bf16.mxu0 0
    %958 = vmatmul.mubr.bf16.gmra.mrb[0].mxu0 %v777
    %v959 = vpop.f32.mrb[0].mxu0
    %v960 = vadd.f32 0.0, %v959
    %v961 = vpop.f32.mrb[0].mxu0
    %v962 = vpop.f32.mrb[0].mxu0
    %v963 = vadd.f32 0.0, %v962
    %v964 = vpop.f32.mrb[0].mxu0
    %965 = vmatprep.mubr.bf16.mxu0 0
    %966 = vmatmul.mubr.bf16.gmra.mrb[0].mxu0 %v778
    %v967 = vpop.f32.mrb[0].mxu0
    %v968 = vadd.f32 0.0, %v967
    %v969 = vpop.f32.mrb[0].mxu0
    %v970 = vpop.f32.mrb[0].mxu0
    %v971 = vadd.f32 0.0, %v970
    %v972 = vpop.f32.mrb[0].mxu0
    %973 = vmatprep.mubr.bf16.mxu0 0
    %974 = vmatmul.mubr.bf16.gmra.mrb[0].mxu0 %v779
    %v975 = vpop.f32.mrb[0].mxu0
    %v976 = vadd.f32 0.0, %v975
    %v977 = vpop.f32.mrb[0].mxu0
    %v978 = vpop.f32.mrb[0].mxu0
    %v979 = vadd.f32 0.0, %v978
    %v980 = vpop.f32.mrb[0].mxu0
    %981 = vmatprep.mubr.bf16.mxu0 0
    %982 = vmatmul.mubr.bf16.gmra.mrb[0].mxu0 %v780
    %v983 = vpop.f32.mrb[0].mxu0
    %v984 = vadd.f32 0.0, %v983
    %v985 = vpop.f32.mrb[0].mxu0
    %v986 = vpop.f32.mrb[0].mxu0
    %v987 = vadd.f32 0.0, %v986
    %v988 = vpop.f32.mrb[0].mxu0
    %989 = vmatprep.mubr.bf16.mxu0 0
    %990 = vmatmul.mubr.bf16.gmra.mrb[0].mxu0 %v781
    %v991 = vpop.f32.mrb[0].mxu0
    %v992 = vadd.f32 0.0, %v991
    %v993 = vpop.f32.mrb[0].mxu0
    %v994 = vpop.f32.mrb[0].mxu0
    %v995 = vadd.f32 0.0, %v994
    %v996 = vpop.f32.mrb[0].mxu0
    %997 = vmatprep.mubr.bf16.mxu0 0
    %998 = vmatmul.mubr.bf16.gmra.mrb[0].mxu0 %v782
    %v999 = vpop.f32.mrb[0].mxu0
    %v1000 = vadd.f32 0.0, %v999
    %v1001 = vpop.f32.mrb[0].mxu0
    %v1002 = vpop.f32.mrb[0].mxu0
    %v1003 = vadd.f32 0.0, %v1002
    %v1004 = vpop.f32.mrb[0].mxu0
    %1005 = vmatprep.mubr.bf16.mxu0 0
    %1006 = vmatmul.mubr.bf16.gmra.mrb[0].mxu0 %v783
    %v1007 = vpop.f32.mrb[0].mxu0
    %v1008 = vadd.f32 0.0, %v1007
    %v1009 = vpop.f32.mrb[0].mxu0
    %v1010 = vpop.f32.mrb[0].mxu0
    %v1011 = vadd.f32 0.0, %v1010
    %v1012 = vpop.f32.mrb[0].mxu0
    %1013 = vmatprep.mubr.bf16.mxu0 0
    %1014 = vmatmul.mubr.bf16.gmra.mrb[0].mxu0 %v784
    %v1015 = vpop.f32.mrb[0].mxu0
    %v1016 = vadd.f32 0.0, %v1015
    %v1017 = vpop.f32.mrb[0].mxu0
    %v1018 = vpop.f32.mrb[0].mxu0
    %v1019 = vadd.f32 0.0, %v1018
    %v1020 = vpop.f32.mrb[0].mxu0
    %1021 = vmatprep.mubr.bf16.mxu0 0
    %1022 = vmatmul.mubr.bf16.gmra.mrb[0].mxu0 %v785
    %v1023 = vpop.f32.mrb[0].mxu0
    %v1024 = vadd.f32 0.0, %v1023
    %v1025 = vpop.f32.mrb[0].mxu0
    %v1026 = vpop.f32.mrb[0].mxu0
    %v1027 = vadd.f32 0.0, %v1026
    %v1028 = vpop.f32.mrb[0].mxu0
    %1029 = vmatprep.mubr.bf16.mxu0 0
    %1030 = vmatmul.mubr.bf16.gmra.mrb[0].mxu0 %v786
    %v1031 = vpop.f32.mrb[0].mxu0
    %v1032 = vadd.f32 0.0, %v1031
    %v1033 = vpop.f32.mrb[0].mxu0
    %v1034 = vpop.f32.mrb[0].mxu0
    %v1035 = vadd.f32 0.0, %v1034
    %v1036 = vpop.f32.mrb[0].mxu0
    %1037 = vmatprep.mubr.bf16.mxu0 0
    %1038 = vmatmul.mubr.bf16.gmra.mrb[0].mxu0 %v787
    %v1039 = vpop.f32.mrb[0].mxu0
    %v1040 = vadd.f32 0.0, %v1039
    %v1041 = vpop.f32.mrb[0].mxu0
    %v1042 = vpop.f32.mrb[0].mxu0
    %v1043 = vadd.f32 0.0, %v1042
    %v1044 = vpop.f32.mrb[0].mxu0
    %1045 = vmatprep.mubr.bf16.mxu0 0
    %1046 = vmatmul.mubr.bf16.gmra.mrb[0].mxu0 %v788
    %v1047 = vpop.f32.mrb[0].mxu0
    %v1048 = vadd.f32 0.0, %v1047
    %v1049 = vpop.f32.mrb[0].mxu0
    %v1050 = vpop.f32.mrb[0].mxu0
    %v1051 = vadd.f32 0.0, %v1050
    %v1052 = vpop.f32.mrb[0].mxu0
    %1053 = vmatprep.mubr.bf16.mxu0 0
    %1054 = vmatmul.mubr.bf16.gmra.mrb[0].mxu0 %v789
    %v1055 = vpop.f32.mrb[0].mxu0
    %v1056 = vadd.f32 0.0, %v1055
    %v1057 = vpop.f32.mrb[0].mxu0
    %v1058 = vpop.f32.mrb[0].mxu0
    %v1059 = vadd.f32 0.0, %v1058
    %v1060 = vpop.f32.mrb[0].mxu0
    %1061 = vmatprep.mubr.bf16.mxu0 0
    %1062 = vmatmul.mubr.bf16.gmra.mrb[0].mxu0 %v790
    %v1063 = vpop.f32.mrb[0].mxu0
    %v1064 = vadd.f32 0.0, %v1063
    %v1065 = vpop.f32.mrb[0].mxu0
    %v1066 = vpop.f32.mrb[0].mxu0
    %v1067 = vadd.f32 0.0, %v1066
    %v1068 = vpop.f32.mrb[0].mxu0
    %1069 = vmatprep.mubr.bf16.mxu0 0
    %1070 = vmatmul.mubr.bf16.gmra.mrb[0].mxu0 %v791
    %v1071 = vpop.f32.mrb[0].mxu0
    %v1072 = vadd.f32 0.0, %v1071
    %v1073 = vpop.f32.mrb[0].mxu0
    %v1074 = vpop.f32.mrb[0].mxu0
    %v1075 = vadd.f32 0.0, %v1074
    %v1076 = vpop.f32.mrb[0].mxu0
    %1077 = vmatprep.mubr.bf16.mxu0 0
    %1078 = vmatmul.mubr.bf16.gmra.mrb[0].mxu0 %v792
    %v1079 = vpop.f32.mrb[0].mxu0
    %v1080 = vadd.f32 0.0, %v1079
    %v1081 = vpop.f32.mrb[0].mxu0
    %v1082 = vpop.f32.mrb[0].mxu0
    %v1083 = vadd.f32 0.0, %v1082
    %v1084 = vpop.f32.mrb[0].mxu0
    %1085 = vmatprep.mubr.bf16.mxu0 0
    %1086 = vmatmul.mubr.bf16.gmra.mrb[0].mxu0 %v793
    %v1087 = vpop.f32.mrb[0].mxu0
    %v1088 = vadd.f32 0.0, %v1087
    %v1089 = vpop.f32.mrb[0].mxu0
    %v1090 = vpop.f32.mrb[0].mxu0
    %v1091 = vadd.f32 0.0, %v1090
    %v1092 = vpop.f32.mrb[0].mxu0
    %1093 = vmatprep.mubr.bf16.mxu0 0
    %1094 = vmatmul.mubr.bf16.gmra.mrb[0].mxu0 %v794
    %v1095 = vpop.f32.mrb[0].mxu0
    %v1096 = vadd.f32 0.0, %v1095
    %v1097 = vpop.f32.mrb[0].mxu0
    %v1098 = vpop.f32.mrb[0].mxu0
    %v1099 = vadd.f32 0.0, %v1098
    %v1100 = vpop.f32.mrb[0].mxu0
    %1101 = vmatprep.mubr.bf16.mxu0 0
    %1102 = vmatmul.mubr.bf16.gmra.mrb[0].mxu0 %v795
    %v1103 = vpop.f32.mrb[0].mxu0
    %v1104 = vadd.f32 0.0, %v1103
    %v1105 = vpop.f32.mrb[0].mxu0
    %v1106 = vpop.f32.mrb[0].mxu0
    %v1107 = vadd.f32 0.0, %v1106
    %v1108 = vpop.f32.mrb[0].mxu0
    %1109 = vmatprep.mubr.bf16.mxu0 0
    %1110 = vmatmul.mubr.bf16.gmra.mrb[0].mxu0 %v796
    %v1111 = vpop.f32.mrb[0].mxu0
    %v1112 = vadd.f32 0.0, %v1111
    %v1113 = vpop.f32.mrb[0].mxu0
    %v1114 = vpop.f32.mrb[0].mxu0
    %v1115 = vadd.f32 0.0, %v1114
    %v1116 = vpop.f32.mrb[0].mxu0
    %1117 = vdwg.mxu0
    %v1118 = vpack.c.bf16 %v867, %v864
    %v1119 = vpack.c.bf16 %v875, %v872
    %v1120 = vpack.c.bf16 %v883, %v880
    %v1121 = vpack.c.bf16 %v891, %v888
    %v1122 = vpack.c.bf16 %v899, %v896
    %v1123 = vpack.c.bf16 %v907, %v904
    %v1124 = vpack.c.bf16 %v915, %v912
    %v1125 = vpack.c.bf16 %v923, %v920
    %v1126 = vpack.c.bf16 %v931, %v928
    %v1127 = vpack.c.bf16 %v939, %v936
    %v1128 = vpack.c.bf16 %v947, %v944
    %v1129 = vpack.c.bf16 %v955, %v952
    %v1130 = vpack.c.bf16 %v963, %v960
    %v1131 = vpack.c.bf16 %v971, %v968
    %v1132 = vpack.c.bf16 %v979, %v976
    %v1133 = vpack.c.bf16 %v987, %v984
    %v1134 = vpack.c.bf16 %v995, %v992
    %v1135 = vpack.c.bf16 %v1003, %v1000
    %v1136 = vpack.c.bf16 %v1011, %v1008
    %v1137 = vpack.c.bf16 %v1019, %v1016
    %v1138 = vpack.c.bf16 %v1027, %v1024
    %v1139 = vpack.c.bf16 %v1035, %v1032
    %v1140 = vpack.c.bf16 %v1043, %v1040
    %v1141 = vpack.c.bf16 %v1051, %v1048
    %v1142 = vpack.c.bf16 %v1059, %v1056
    %v1143 = vpack.c.bf16 %v1067, %v1064
    %v1144 = vpack.c.bf16 %v1075, %v1072
    %v1145 = vpack.c.bf16 %v1083, %v1080
    %v1146 = vpack.c.bf16 %v1091, %v1088
    %v1147 = vpack.c.bf16 %v1099, %v1096
    %v1148 = vpack.c.bf16 %v1107, %v1104
    %v1149 = vpack.c.bf16 %v1115, %v1112
    %v1154 = vunpack.c.l.b16 %v54
    %v1155 = vunpack.c.l.b16 %v55
    %v1156 = vunpack.c.l.b16 %v56
    %v1157 = vunpack.c.l.b16 %v57
    %v1158 = vpack.c.b16 %v1155, %v1154
    %v1159 = vpack.c.b16 %v1157, %v1156
    %vm1162 = vcmask 261120
    %v1164 = vsel %vm1162, %v1118, 0
    %v1167 = vsel %vm1162, %v1119, 0
    %1169 = vmatprep.subr.bf16.mxu0 0
    %1170 = vmatpush1.bf16.msra.mxu0 %v1158
    %1171 = vmatprep.subr.bf16.mxu0 0
    %1172 = vmatpush1.bf16.msra.mxu0 %v1159
    %1173 = vmatprep.subr.bf16.mxu0 0
    %1174 = vmatpush1.bf16.msra.mxu0 0
    %1175 = vmatprep.subr.bf16.mxu0 0
    %1176 = vmatpush1.bf16.msra.mxu0 0
    %1177 = vmatprep.subr.bf16.mxu0 0
    %1178 = vmatpush1.bf16.msra.mxu0 0
    %1179 = vmatprep.subr.bf16.mxu0 0
    %1180 = vmatpush1.bf16.msra.mxu0 0
    %1181 = vmatprep.subr.bf16.mxu0 0
    %1182 = vmatpush1.bf16.msra.mxu0 0
    %1183 = vmatprep.subr.bf16.mxu0 0
    %1184 = vmatpush1.bf16.msra.mxu0 0
    %1185 = vmatprep.subr.bf16.mxu0 0
    %1186 = vmatpush1.bf16.msra.mxu0 0
    %1187 = vmatprep.subr.bf16.mxu0 0
    %1188 = vmatpush1.bf16.msra.mxu0 0
    %1189 = vmatprep.subr.bf16.mxu0 0
    %1190 = vmatpush1.bf16.msra.mxu0 0
    %1191 = vmatprep.subr.bf16.mxu0 0
    %1192 = vmatpush1.bf16.msra.mxu0 0
    %1193 = vmatprep.subr.bf16.mxu0 0
    %1194 = vmatpush1.bf16.msra.mxu0 0
    %1195 = vmatprep.subr.bf16.mxu0 0
    %1196 = vmatpush1.bf16.msra.mxu0 0
    %1197 = vmatprep.subr.bf16.mxu0 0
    %1198 = vmatpush1.bf16.msra.mxu0 0
    %1199 = vmatprep.subr.bf16.mxu0 0
    %1200 = vmatpush1.bf16.msra.mxu0 0
    %1201 = vmatprep.mubr.bf16.mxu0 0
    %1202 = vmatmul.mubr.bf16.gmra.mrb[0].mxu0 %v1164
    %v1203 = vpop.f32.mrb[0].mxu0
    %v1204 = vadd.f32 0.0, %v1203
    %v1205 = vpop.f32.mrb[0].mxu0
    %v1206 = vpop.f32.mrb[0].mxu0
    %v1207 = vadd.f32 0.0, %v1206
    %v1208 = vpop.f32.mrb[0].mxu0
    %1209 = vmatprep.mubr.bf16.mxu0 0
    %1210 = vmatmul.mubr.bf16.gmra.mrb[0].mxu0 %v1167
    %v1211 = vpop.f32.mrb[0].mxu0
    %v1212 = vadd.f32 0.0, %v1211
    %v1213 = vpop.f32.mrb[0].mxu0
    %v1214 = vpop.f32.mrb[0].mxu0
    %v1215 = vadd.f32 0.0, %v1214
    %v1216 = vpop.f32.mrb[0].mxu0
    %1217 = vdwg.mxu0
    %v1222 = vunpack.c.l.b16 %v58
    %v1223 = vunpack.c.l.b16 %v59
    %v1224 = vunpack.c.l.b16 %v60
    %v1225 = vunpack.c.l.b16 %v61
    %v1226 = vpack.c.b16 %v1223, %v1222
    %v1227 = vpack.c.b16 %v1225, %v1224
    %v1231 = vsel %vm1162, %v1120, 0
    %v1234 = vsel %vm1162, %v1121, 0
    %1236 = vmatprep.subr.bf16.mxu0 0
    %1237 = vmatpush1.bf16.msra.mxu0 %v1226
    %1238 = vmatprep.subr.bf16.mxu0 0
    %1239 = vmatpush1.bf16.msra.mxu0 %v1227
    %1240 = vmatprep.subr.bf16.mxu0 0
    %1241 = vmatpush1.bf16.msra.mxu0 0
    %1242 = vmatprep.subr.bf16.mxu0 0
    %1243 = vmatpush1.bf16.msra.mxu0 0
    %1244 = vmatprep.subr.bf16.mxu0 0
    %1245 = vmatpush1.bf16.msra.mxu0 0
    %1246 = vmatprep.subr.bf16.mxu0 0
    %1247 = vmatpush1.bf16.msra.mxu0 0
    %1248 = vmatprep.subr.bf16.mxu0 0
    %1249 = vmatpush1.bf16.msra.mxu0 0
    %1250 = vmatprep.subr.bf16.mxu0 0
    %1251 = vmatpush1.bf16.msra.mxu0 0
    %1252 = vmatprep.subr.bf16.mxu0 0
    %1253 = vmatpush1.bf16.msra.mxu0 0
    %1254 = vmatprep.subr.bf16.mxu0 0
    %1255 = vmatpush1.bf16.msra.mxu0 0
    %1256 = vmatprep.subr.bf16.mxu0 0
    %1257 = vmatpush1.bf16.msra.mxu0 0
    %1258 = vmatprep.subr.bf16.mxu0 0
    %1259 = vmatpush1.bf16.msra.mxu0 0
    %1260 = vmatprep.subr.bf16.mxu0 0
    %1261 = vmatpush1.bf16.msra.mxu0 0
    %1262 = vmatprep.subr.bf16.mxu0 0
    %1263 = vmatpush1.bf16.msra.mxu0 0
    %1264 = vmatprep.subr.bf16.mxu0 0
    %1265 = vmatpush1.bf16.msra.mxu0 0
    %1266 = vmatprep.subr.bf16.mxu0 0
    %1267 = vmatpush1.bf16.msra.mxu0 0
    %1268 = vmatprep.mubr.bf16.mxu0 0
    %1269 = vmatmul.mubr.bf16.gmra.mrb[0].mxu0 %v1231
    %v1270 = vpop.f32.mrb[0].mxu0
    %v1271 = vadd.f32 0.0, %v1270
    %v1272 = vpop.f32.mrb[0].mxu0
    %v1273 = vpop.f32.mrb[0].mxu0
    %v1274 = vadd.f32 0.0, %v1273
    %v1275 = vpop.f32.mrb[0].mxu0
    %1276 = vmatprep.mubr.bf16.mxu0 0
    %1277 = vmatmul.mubr.bf16.gmra.mrb[0].mxu0 %v1234
    %v1278 = vpop.f32.mrb[0].mxu0
    %v1279 = vadd.f32 0.0, %v1278
    %v1280 = vpop.f32.mrb[0].mxu0
    %v1281 = vpop.f32.mrb[0].mxu0
    %v1282 = vadd.f32 0.0, %v1281
    %v1283 = vpop.f32.mrb[0].mxu0
    %1284 = vdwg.mxu0
    %v1289 = vunpack.c.l.b16 %v62
    %v1290 = vunpack.c.l.b16 %v63
    %v1291 = vunpack.c.l.b16 %v64
    %v1292 = vunpack.c.l.b16 %v65
    %v1293 = vpack.c.b16 %v1290, %v1289
    %v1294 = vpack.c.b16 %v1292, %v1291
    %v1298 = vsel %vm1162, %v1122, 0
    %v1301 = vsel %vm1162, %v1123, 0
    %1303 = vmatprep.subr.bf16.mxu0 0
    %1304 = vmatpush1.bf16.msra.mxu0 %v1293
    %1305 = vmatprep.subr.bf16.mxu0 0
    %1306 = vmatpush1.bf16.msra.mxu0 %v1294
    %1307 = vmatprep.subr.bf16.mxu0 0
    %1308 = vmatpush1.bf16.msra.mxu0 0
    %1309 = vmatprep.subr.bf16.mxu0 0
    %1310 = vmatpush1.bf16.msra.mxu0 0
    %1311 = vmatprep.subr.bf16.mxu0 0
    %1312 = vmatpush1.bf16.msra.mxu0 0
    %1313 = vmatprep.subr.bf16.mxu0 0
    %1314 = vmatpush1.bf16.msra.mxu0 0
    %1315 = vmatprep.subr.bf16.mxu0 0
    %1316 = vmatpush1.bf16.msra.mxu0 0
    %1317 = vmatprep.subr.bf16.mxu0 0
    %1318 = vmatpush1.bf16.msra.mxu0 0
    %1319 = vmatprep.subr.bf16.mxu0 0
    %1320 = vmatpush1.bf16.msra.mxu0 0
    %1321 = vmatprep.subr.bf16.mxu0 0
    %1322 = vmatpush1.bf16.msra.mxu0 0
    %1323 = vmatprep.subr.bf16.mxu0 0
    %1324 = vmatpush1.bf16.msra.mxu0 0
    %1325 = vmatprep.subr.bf16.mxu0 0
    %1326 = vmatpush1.bf16.msra.mxu0 0
    %1327 = vmatprep.subr.bf16.mxu0 0
    %1328 = vmatpush1.bf16.msra.mxu0 0
    %1329 = vmatprep.subr.bf16.mxu0 0
    %1330 = vmatpush1.bf16.msra.mxu0 0
    %1331 = vmatprep.subr.bf16.mxu0 0
    %1332 = vmatpush1.bf16.msra.mxu0 0
    %1333 = vmatprep.subr.bf16.mxu0 0
    %1334 = vmatpush1.bf16.msra.mxu0 0
    %1335 = vmatprep.mubr.bf16.mxu0 0
    %1336 = vmatmul.mubr.bf16.gmra.mrb[0].mxu0 %v1298
    %v1337 = vpop.f32.mrb[0].mxu0
    %v1338 = vadd.f32 0.0, %v1337
    %v1339 = vpop.f32.mrb[0].mxu0
    %v1340 = vpop.f32.mrb[0].mxu0
    %v1341 = vadd.f32 0.0, %v1340
    %v1342 = vpop.f32.mrb[0].mxu0
    %1343 = vmatprep.mubr.bf16.mxu0 0
    %1344 = vmatmul.mubr.bf16.gmra.mrb[0].mxu0 %v1301
    %v1345 = vpop.f32.mrb[0].mxu0
    %v1346 = vadd.f32 0.0, %v1345
    %v1347 = vpop.f32.mrb[0].mxu0
    %v1348 = vpop.f32.mrb[0].mxu0
    %v1349 = vadd.f32 0.0, %v1348
    %v1350 = vpop.f32.mrb[0].mxu0
    %1351 = vdwg.mxu0
    %v1356 = vunpack.c.l.b16 %v66
    %v1357 = vunpack.c.l.b16 %v67
    %v1358 = vunpack.c.l.b16 %v68
    %v1359 = vunpack.c.l.b16 %v69
    %v1360 = vpack.c.b16 %v1357, %v1356
    %v1361 = vpack.c.b16 %v1359, %v1358
    %v1365 = vsel %vm1162, %v1124, 0
    %v1368 = vsel %vm1162, %v1125, 0
    %1370 = vmatprep.subr.bf16.mxu0 0
    %1371 = vmatpush1.bf16.msra.mxu0 %v1360
    %1372 = vmatprep.subr.bf16.mxu0 0
    %1373 = vmatpush1.bf16.msra.mxu0 %v1361
    %1374 = vmatprep.subr.bf16.mxu0 0
    %1375 = vmatpush1.bf16.msra.mxu0 0
    %1376 = vmatprep.subr.bf16.mxu0 0
    %1377 = vmatpush1.bf16.msra.mxu0 0
    %1378 = vmatprep.subr.bf16.mxu0 0
    %1379 = vmatpush1.bf16.msra.mxu0 0
    %1380 = vmatprep.subr.bf16.mxu0 0
    %1381 = vmatpush1.bf16.msra.mxu0 0
    %1382 = vmatprep.subr.bf16.mxu0 0
    %1383 = vmatpush1.bf16.msra.mxu0 0
    %1384 = vmatprep.subr.bf16.mxu0 0
    %1385 = vmatpush1.bf16.msra.mxu0 0
    %1386 = vmatprep.subr.bf16.mxu0 0
    %1387 = vmatpush1.bf16.msra.mxu0 0
    %1388 = vmatprep.subr.bf16.mxu0 0
    %1389 = vmatpush1.bf16.msra.mxu0 0
    %1390 = vmatprep.subr.bf16.mxu0 0
    %1391 = vmatpush1.bf16.msra.mxu0 0
    %1392 = vmatprep.subr.bf16.mxu0 0
    %1393 = vmatpush1.bf16.msra.mxu0 0
    %1394 = vmatprep.subr.bf16.mxu0 0
    %1395 = vmatpush1.bf16.msra.mxu0 0
    %1396 = vmatprep.subr.bf16.mxu0 0
    %1397 = vmatpush1.bf16.msra.mxu0 0
    %1398 = vmatprep.subr.bf16.mxu0 0
    %1399 = vmatpush1.bf16.msra.mxu0 0
    %1400 = vmatprep.subr.bf16.mxu0 0
    %1401 = vmatpush1.bf16.msra.mxu0 0
    %1402 = vmatprep.mubr.bf16.mxu0 0
    %1403 = vmatmul.mubr.bf16.gmra.mrb[0].mxu0 %v1365
    %v1404 = vpop.f32.mrb[0].mxu0
    %v1405 = vadd.f32 0.0, %v1404
    %v1406 = vpop.f32.mrb[0].mxu0
    %v1407 = vpop.f32.mrb[0].mxu0
    %v1408 = vadd.f32 0.0, %v1407
    %v1409 = vpop.f32.mrb[0].mxu0
    %1410 = vmatprep.mubr.bf16.mxu0 0
    %1411 = vmatmul.mubr.bf16.gmra.mrb[0].mxu0 %v1368
    %v1412 = vpop.f32.mrb[0].mxu0
    %v1413 = vadd.f32 0.0, %v1412
    %v1414 = vpop.f32.mrb[0].mxu0
    %v1415 = vpop.f32.mrb[0].mxu0
    %v1416 = vadd.f32 0.0, %v1415
    %v1417 = vpop.f32.mrb[0].mxu0
    %1418 = vdwg.mxu0
    %v1423 = vunpack.c.l.b16 %v70
    %v1424 = vunpack.c.l.b16 %v71
    %v1425 = vunpack.c.l.b16 %v72
    %v1426 = vunpack.c.l.b16 %v73
    %v1427 = vpack.c.b16 %v1424, %v1423
    %v1428 = vpack.c.b16 %v1426, %v1425
    %v1432 = vsel %vm1162, %v1126, 0
    %v1435 = vsel %vm1162, %v1127, 0
    %1437 = vmatprep.subr.bf16.mxu0 0
    %1438 = vmatpush1.bf16.msra.mxu0 %v1427
    %1439 = vmatprep.subr.bf16.mxu0 0
    %1440 = vmatpush1.bf16.msra.mxu0 %v1428
    %1441 = vmatprep.subr.bf16.mxu0 0
    %1442 = vmatpush1.bf16.msra.mxu0 0
    %1443 = vmatprep.subr.bf16.mxu0 0
    %1444 = vmatpush1.bf16.msra.mxu0 0
    %1445 = vmatprep.subr.bf16.mxu0 0
    %1446 = vmatpush1.bf16.msra.mxu0 0
    %1447 = vmatprep.subr.bf16.mxu0 0
    %1448 = vmatpush1.bf16.msra.mxu0 0
    %1449 = vmatprep.subr.bf16.mxu0 0
    %1450 = vmatpush1.bf16.msra.mxu0 0
    %1451 = vmatprep.subr.bf16.mxu0 0
    %1452 = vmatpush1.bf16.msra.mxu0 0
    %1453 = vmatprep.subr.bf16.mxu0 0
    %1454 = vmatpush1.bf16.msra.mxu0 0
    %1455 = vmatprep.subr.bf16.mxu0 0
    %1456 = vmatpush1.bf16.msra.mxu0 0
    %1457 = vmatprep.subr.bf16.mxu0 0
    %1458 = vmatpush1.bf16.msra.mxu0 0
    %1459 = vmatprep.subr.bf16.mxu0 0
    %1460 = vmatpush1.bf16.msra.mxu0 0
    %1461 = vmatprep.subr.bf16.mxu0 0
    %1462 = vmatpush1.bf16.msra.mxu0 0
    %1463 = vmatprep.subr.bf16.mxu0 0
    %1464 = vmatpush1.bf16.msra.mxu0 0
    %1465 = vmatprep.subr.bf16.mxu0 0
    %1466 = vmatpush1.bf16.msra.mxu0 0
    %1467 = vmatprep.subr.bf16.mxu0 0
    %1468 = vmatpush1.bf16.msra.mxu0 0
    %1469 = vmatprep.mubr.bf16.mxu0 0
    %1470 = vmatmul.mubr.bf16.gmra.mrb[0].mxu0 %v1432
    %v1471 = vpop.f32.mrb[0].mxu0
    %v1472 = vadd.f32 0.0, %v1471
    %v1473 = vpop.f32.mrb[0].mxu0
    %v1474 = vpop.f32.mrb[0].mxu0
    %v1475 = vadd.f32 0.0, %v1474
    %v1476 = vpop.f32.mrb[0].mxu0
    %1477 = vmatprep.mubr.bf16.mxu0 0
    %1478 = vmatmul.mubr.bf16.gmra.mrb[0].mxu0 %v1435
    %v1479 = vpop.f32.mrb[0].mxu0
    %v1480 = vadd.f32 0.0, %v1479
    %v1481 = vpop.f32.mrb[0].mxu0
    %v1482 = vpop.f32.mrb[0].mxu0
    %v1483 = vadd.f32 0.0, %v1482
    %v1484 = vpop.f32.mrb[0].mxu0
    %1485 = vdwg.mxu0
    %v1490 = vunpack.c.l.b16 %v74
    %v1491 = vunpack.c.l.b16 %v75
    %v1492 = vunpack.c.l.b16 %v76
    %v1493 = vunpack.c.l.b16 %v77
    %v1494 = vpack.c.b16 %v1491, %v1490
    %v1495 = vpack.c.b16 %v1493, %v1492
    %v1499 = vsel %vm1162, %v1128, 0
    %v1502 = vsel %vm1162, %v1129, 0
    %1504 = vmatprep.subr.bf16.mxu0 0
    %1505 = vmatpush1.bf16.msra.mxu0 %v1494
    %1506 = vmatprep.subr.bf16.mxu0 0
    %1507 = vmatpush1.bf16.msra.mxu0 %v1495
    %1508 = vmatprep.subr.bf16.mxu0 0
    %1509 = vmatpush1.bf16.msra.mxu0 0
    %1510 = vmatprep.subr.bf16.mxu0 0
    %1511 = vmatpush1.bf16.msra.mxu0 0
    %1512 = vmatprep.subr.bf16.mxu0 0
    %1513 = vmatpush1.bf16.msra.mxu0 0
    %1514 = vmatprep.subr.bf16.mxu0 0
    %1515 = vmatpush1.bf16.msra.mxu0 0
    %1516 = vmatprep.subr.bf16.mxu0 0
    %1517 = vmatpush1.bf16.msra.mxu0 0
    %1518 = vmatprep.subr.bf16.mxu0 0
    %1519 = vmatpush1.bf16.msra.mxu0 0
    %1520 = vmatprep.subr.bf16.mxu0 0
    %1521 = vmatpush1.bf16.msra.mxu0 0
    %1522 = vmatprep.subr.bf16.mxu0 0
    %1523 = vmatpush1.bf16.msra.mxu0 0
    %1524 = vmatprep.subr.bf16.mxu0 0
    %1525 = vmatpush1.bf16.msra.mxu0 0
    %1526 = vmatprep.subr.bf16.mxu0 0
    %1527 = vmatpush1.bf16.msra.mxu0 0
    %1528 = vmatprep.subr.bf16.mxu0 0
    %1529 = vmatpush1.bf16.msra.mxu0 0
    %1530 = vmatprep.subr.bf16.mxu0 0
    %1531 = vmatpush1.bf16.msra.mxu0 0
    %1532 = vmatprep.subr.bf16.mxu0 0
    %1533 = vmatpush1.bf16.msra.mxu0 0
    %1534 = vmatprep.subr.bf16.mxu0 0
    %1535 = vmatpush1.bf16.msra.mxu0 0
    %1536 = vmatprep.mubr.bf16.mxu0 0
    %1537 = vmatmul.mubr.bf16.gmra.mrb[0].mxu0 %v1499
    %v1538 = vpop.f32.mrb[0].mxu0
    %v1539 = vadd.f32 0.0, %v1538
    %v1540 = vpop.f32.mrb[0].mxu0
    %v1541 = vpop.f32.mrb[0].mxu0
    %v1542 = vadd.f32 0.0, %v1541
    %v1543 = vpop.f32.mrb[0].mxu0
    %1544 = vmatprep.mubr.bf16.mxu0 0
    %1545 = vmatmul.mubr.bf16.gmra.mrb[0].mxu0 %v1502
    %v1546 = vpop.f32.mrb[0].mxu0
    %v1547 = vadd.f32 0.0, %v1546
    %v1548 = vpop.f32.mrb[0].mxu0
    %v1549 = vpop.f32.mrb[0].mxu0
    %v1550 = vadd.f32 0.0, %v1549
    %v1551 = vpop.f32.mrb[0].mxu0
    %1552 = vdwg.mxu0
    %v1557 = vunpack.c.l.b16 %v78
    %v1558 = vunpack.c.l.b16 %v79
    %v1559 = vunpack.c.l.b16 %v80
    %v1560 = vunpack.c.l.b16 %v81
    %v1561 = vpack.c.b16 %v1558, %v1557
    %v1562 = vpack.c.b16 %v1560, %v1559
    %v1566 = vsel %vm1162, %v1130, 0
    %v1569 = vsel %vm1162, %v1131, 0
    %1571 = vmatprep.subr.bf16.mxu0 0
    %1572 = vmatpush1.bf16.msra.mxu0 %v1561
    %1573 = vmatprep.subr.bf16.mxu0 0
    %1574 = vmatpush1.bf16.msra.mxu0 %v1562
    %1575 = vmatprep.subr.bf16.mxu0 0
    %1576 = vmatpush1.bf16.msra.mxu0 0
    %1577 = vmatprep.subr.bf16.mxu0 0
    %1578 = vmatpush1.bf16.msra.mxu0 0
    %1579 = vmatprep.subr.bf16.mxu0 0
    %1580 = vmatpush1.bf16.msra.mxu0 0
    %1581 = vmatprep.subr.bf16.mxu0 0
    %1582 = vmatpush1.bf16.msra.mxu0 0
    %1583 = vmatprep.subr.bf16.mxu0 0
    %1584 = vmatpush1.bf16.msra.mxu0 0
    %1585 = vmatprep.subr.bf16.mxu0 0
    %1586 = vmatpush1.bf16.msra.mxu0 0
    %1587 = vmatprep.subr.bf16.mxu0 0
    %1588 = vmatpush1.bf16.msra.mxu0 0
    %1589 = vmatprep.subr.bf16.mxu0 0
    %1590 = vmatpush1.bf16.msra.mxu0 0
    %1591 = vmatprep.subr.bf16.mxu0 0
    %1592 = vmatpush1.bf16.msra.mxu0 0
    %1593 = vmatprep.subr.bf16.mxu0 0
    %1594 = vmatpush1.bf16.msra.mxu0 0
    %1595 = vmatprep.subr.bf16.mxu0 0
    %1596 = vmatpush1.bf16.msra.mxu0 0
    %1597 = vmatprep.subr.bf16.mxu0 0
    %1598 = vmatpush1.bf16.msra.mxu0 0
    %1599 = vmatprep.subr.bf16.mxu0 0
    %1600 = vmatpush1.bf16.msra.mxu0 0
    %1601 = vmatprep.subr.bf16.mxu0 0
    %1602 = vmatpush1.bf16.msra.mxu0 0
    %1603 = vmatprep.mubr.bf16.mxu0 0
    %1604 = vmatmul.mubr.bf16.gmra.mrb[0].mxu0 %v1566
    %v1605 = vpop.f32.mrb[0].mxu0
    %v1606 = vadd.f32 0.0, %v1605
    %v1607 = vpop.f32.mrb[0].mxu0
    %v1608 = vpop.f32.mrb[0].mxu0
    %v1609 = vadd.f32 0.0, %v1608
    %v1610 = vpop.f32.mrb[0].mxu0
    %1611 = vmatprep.mubr.bf16.mxu0 0
    %1612 = vmatmul.mubr.bf16.gmra.mrb[0].mxu0 %v1569
    %v1613 = vpop.f32.mrb[0].mxu0
    %v1614 = vadd.f32 0.0, %v1613
    %v1615 = vpop.f32.mrb[0].mxu0
    %v1616 = vpop.f32.mrb[0].mxu0
    %v1617 = vadd.f32 0.0, %v1616
    %v1618 = vpop.f32.mrb[0].mxu0
    %1619 = vdwg.mxu0
    %v1624 = vunpack.c.l.b16 %v82
    %v1625 = vunpack.c.l.b16 %v83
    %v1626 = vunpack.c.l.b16 %v84
    %v1627 = vunpack.c.l.b16 %v85
    %v1628 = vpack.c.b16 %v1625, %v1624
    %v1629 = vpack.c.b16 %v1627, %v1626
    %v1633 = vsel %vm1162, %v1132, 0
    %v1636 = vsel %vm1162, %v1133, 0
    %1638 = vmatprep.subr.bf16.mxu0 0
    %1639 = vmatpush1.bf16.msra.mxu0 %v1628
    %1640 = vmatprep.subr.bf16.mxu0 0
    %1641 = vmatpush1.bf16.msra.mxu0 %v1629
    %1642 = vmatprep.subr.bf16.mxu0 0
    %1643 = vmatpush1.bf16.msra.mxu0 0
    %1644 = vmatprep.subr.bf16.mxu0 0
    %1645 = vmatpush1.bf16.msra.mxu0 0
    %1646 = vmatprep.subr.bf16.mxu0 0
    %1647 = vmatpush1.bf16.msra.mxu0 0
    %1648 = vmatprep.subr.bf16.mxu0 0
    %1649 = vmatpush1.bf16.msra.mxu0 0
    %1650 = vmatprep.subr.bf16.mxu0 0
    %1651 = vmatpush1.bf16.msra.mxu0 0
    %1652 = vmatprep.subr.bf16.mxu0 0
    %1653 = vmatpush1.bf16.msra.mxu0 0
    %1654 = vmatprep.subr.bf16.mxu0 0
    %1655 = vmatpush1.bf16.msra.mxu0 0
    %1656 = vmatprep.subr.bf16.mxu0 0
    %1657 = vmatpush1.bf16.msra.mxu0 0
    %1658 = vmatprep.subr.bf16.mxu0 0
    %1659 = vmatpush1.bf16.msra.mxu0 0
    %1660 = vmatprep.subr.bf16.mxu0 0
    %1661 = vmatpush1.bf16.msra.mxu0 0
    %1662 = vmatprep.subr.bf16.mxu0 0
    %1663 = vmatpush1.bf16.msra.mxu0 0
    %1664 = vmatprep.subr.bf16.mxu0 0
    %1665 = vmatpush1.bf16.msra.mxu0 0
    %1666 = vmatprep.subr.bf16.mxu0 0
    %1667 = vmatpush1.bf16.msra.mxu0 0
    %1668 = vmatprep.subr.bf16.mxu0 0
    %1669 = vmatpush1.bf16.msra.mxu0 0
    %1670 = vmatprep.mubr.bf16.mxu0 0
    %1671 = vmatmul.mubr.bf16.gmra.mrb[0].mxu0 %v1633
    %v1672 = vpop.f32.mrb[0].mxu0
    %v1673 = vadd.f32 0.0, %v1672
    %v1674 = vpop.f32.mrb[0].mxu0
    %v1675 = vpop.f32.mrb[0].mxu0
    %v1676 = vadd.f32 0.0, %v1675
    %v1677 = vpop.f32.mrb[0].mxu0
    %1678 = vmatprep.mubr.bf16.mxu0 0
    %1679 = vmatmul.mubr.bf16.gmra.mrb[0].mxu0 %v1636
    %v1680 = vpop.f32.mrb[0].mxu0
    %v1681 = vadd.f32 0.0, %v1680
    %v1682 = vpop.f32.mrb[0].mxu0
    %v1683 = vpop.f32.mrb[0].mxu0
    %v1684 = vadd.f32 0.0, %v1683
    %v1685 = vpop.f32.mrb[0].mxu0
    %1686 = vdwg.mxu0
    %v1691 = vunpack.c.l.b16 %v86
    %v1692 = vunpack.c.l.b16 %v87
    %v1693 = vunpack.c.l.b16 %v88
    %v1694 = vunpack.c.l.b16 %v89
    %v1695 = vpack.c.b16 %v1692, %v1691
    %v1696 = vpack.c.b16 %v1694, %v1693
    %v1700 = vsel %vm1162, %v1134, 0
    %v1703 = vsel %vm1162, %v1135, 0
    %1705 = vmatprep.subr.bf16.mxu0 0
    %1706 = vmatpush1.bf16.msra.mxu0 %v1695
    %1707 = vmatprep.subr.bf16.mxu0 0
    %1708 = vmatpush1.bf16.msra.mxu0 %v1696
    %1709 = vmatprep.subr.bf16.mxu0 0
    %1710 = vmatpush1.bf16.msra.mxu0 0
    %1711 = vmatprep.subr.bf16.mxu0 0
    %1712 = vmatpush1.bf16.msra.mxu0 0
    %1713 = vmatprep.subr.bf16.mxu0 0
    %1714 = vmatpush1.bf16.msra.mxu0 0
    %1715 = vmatprep.subr.bf16.mxu0 0
    %1716 = vmatpush1.bf16.msra.mxu0 0
    %1717 = vmatprep.subr.bf16.mxu0 0
    %1718 = vmatpush1.bf16.msra.mxu0 0
    %1719 = vmatprep.subr.bf16.mxu0 0
    %1720 = vmatpush1.bf16.msra.mxu0 0
    %1721 = vmatprep.subr.bf16.mxu0 0
    %1722 = vmatpush1.bf16.msra.mxu0 0
    %1723 = vmatprep.subr.bf16.mxu0 0
    %1724 = vmatpush1.bf16.msra.mxu0 0
    %1725 = vmatprep.subr.bf16.mxu0 0
    %1726 = vmatpush1.bf16.msra.mxu0 0
    %1727 = vmatprep.subr.bf16.mxu0 0
    %1728 = vmatpush1.bf16.msra.mxu0 0
    %1729 = vmatprep.subr.bf16.mxu0 0
    %1730 = vmatpush1.bf16.msra.mxu0 0
    %1731 = vmatprep.subr.bf16.mxu0 0
    %1732 = vmatpush1.bf16.msra.mxu0 0
    %1733 = vmatprep.subr.bf16.mxu0 0
    %1734 = vmatpush1.bf16.msra.mxu0 0
    %1735 = vmatprep.subr.bf16.mxu0 0
    %1736 = vmatpush1.bf16.msra.mxu0 0
    %1737 = vmatprep.mubr.bf16.mxu0 0
    %1738 = vmatmul.mubr.bf16.gmra.mrb[0].mxu0 %v1700
    %v1739 = vpop.f32.mrb[0].mxu0
    %v1740 = vadd.f32 0.0, %v1739
    %v1741 = vpop.f32.mrb[0].mxu0
    %v1742 = vpop.f32.mrb[0].mxu0
    %v1743 = vadd.f32 0.0, %v1742
    %v1744 = vpop.f32.mrb[0].mxu0
    %1745 = vmatprep.mubr.bf16.mxu0 0
    %1746 = vmatmul.mubr.bf16.gmra.mrb[0].mxu0 %v1703
    %v1747 = vpop.f32.mrb[0].mxu0
    %v1748 = vadd.f32 0.0, %v1747
    %v1749 = vpop.f32.mrb[0].mxu0
    %v1750 = vpop.f32.mrb[0].mxu0
    %v1751 = vadd.f32 0.0, %v1750
    %v1752 = vpop.f32.mrb[0].mxu0
    %1753 = vdwg.mxu0
    %v1758 = vunpack.c.l.b16 %v90
    %v1759 = vunpack.c.l.b16 %v91
    %v1760 = vunpack.c.l.b16 %v92
    %v1761 = vunpack.c.l.b16 %v93
    %v1762 = vpack.c.b16 %v1759, %v1758
    %v1763 = vpack.c.b16 %v1761, %v1760
    %v1767 = vsel %vm1162, %v1136, 0
    %v1770 = vsel %vm1162, %v1137, 0
    %1772 = vmatprep.subr.bf16.mxu0 0
    %1773 = vmatpush1.bf16.msra.mxu0 %v1762
    %1774 = vmatprep.subr.bf16.mxu0 0
    %1775 = vmatpush1.bf16.msra.mxu0 %v1763
    %1776 = vmatprep.subr.bf16.mxu0 0
    %1777 = vmatpush1.bf16.msra.mxu0 0
    %1778 = vmatprep.subr.bf16.mxu0 0
    %1779 = vmatpush1.bf16.msra.mxu0 0
    %1780 = vmatprep.subr.bf16.mxu0 0
    %1781 = vmatpush1.bf16.msra.mxu0 0
    %1782 = vmatprep.subr.bf16.mxu0 0
    %1783 = vmatpush1.bf16.msra.mxu0 0
    %1784 = vmatprep.subr.bf16.mxu0 0
    %1785 = vmatpush1.bf16.msra.mxu0 0
    %1786 = vmatprep.subr.bf16.mxu0 0
    %1787 = vmatpush1.bf16.msra.mxu0 0
    %1788 = vmatprep.subr.bf16.mxu0 0
    %1789 = vmatpush1.bf16.msra.mxu0 0
    %1790 = vmatprep.subr.bf16.mxu0 0
    %1791 = vmatpush1.bf16.msra.mxu0 0
    %1792 = vmatprep.subr.bf16.mxu0 0
    %1793 = vmatpush1.bf16.msra.mxu0 0
    %1794 = vmatprep.subr.bf16.mxu0 0
    %1795 = vmatpush1.bf16.msra.mxu0 0
    %1796 = vmatprep.subr.bf16.mxu0 0
    %1797 = vmatpush1.bf16.msra.mxu0 0
    %1798 = vmatprep.subr.bf16.mxu0 0
    %1799 = vmatpush1.bf16.msra.mxu0 0
    %1800 = vmatprep.subr.bf16.mxu0 0
    %1801 = vmatpush1.bf16.msra.mxu0 0
    %1802 = vmatprep.subr.bf16.mxu0 0
    %1803 = vmatpush1.bf16.msra.mxu0 0
    %1804 = vmatprep.mubr.bf16.mxu0 0
    %1805 = vmatmul.mubr.bf16.gmra.mrb[0].mxu0 %v1767
    %v1806 = vpop.f32.mrb[0].mxu0
    %v1807 = vadd.f32 0.0, %v1806
    %v1808 = vpop.f32.mrb[0].mxu0
    %v1809 = vpop.f32.mrb[0].mxu0
    %v1810 = vadd.f32 0.0, %v1809
    %v1811 = vpop.f32.mrb[0].mxu0
    %1812 = vmatprep.mubr.bf16.mxu0 0
    %1813 = vmatmul.mubr.bf16.gmra.mrb[0].mxu0 %v1770
    %v1814 = vpop.f32.mrb[0].mxu0
    %v1815 = vadd.f32 0.0, %v1814
    %v1816 = vpop.f32.mrb[0].mxu0
    %v1817 = vpop.f32.mrb[0].mxu0
    %v1818 = vadd.f32 0.0, %v1817
    %v1819 = vpop.f32.mrb[0].mxu0
    %1820 = vdwg.mxu0
    %v1825 = vunpack.c.l.b16 %v94
    %v1826 = vunpack.c.l.b16 %v95
    %v1827 = vunpack.c.l.b16 %v96
    %v1828 = vunpack.c.l.b16 %v97
    %v1829 = vpack.c.b16 %v1826, %v1825
    %v1830 = vpack.c.b16 %v1828, %v1827
    %v1834 = vsel %vm1162, %v1138, 0
    %v1837 = vsel %vm1162, %v1139, 0
    %1839 = vmatprep.subr.bf16.mxu0 0
    %1840 = vmatpush1.bf16.msra.mxu0 %v1829
    %1841 = vmatprep.subr.bf16.mxu0 0
    %1842 = vmatpush1.bf16.msra.mxu0 %v1830
    %1843 = vmatprep.subr.bf16.mxu0 0
    %1844 = vmatpush1.bf16.msra.mxu0 0
    %1845 = vmatprep.subr.bf16.mxu0 0
    %1846 = vmatpush1.bf16.msra.mxu0 0
    %1847 = vmatprep.subr.bf16.mxu0 0
    %1848 = vmatpush1.bf16.msra.mxu0 0
    %1849 = vmatprep.subr.bf16.mxu0 0
    %1850 = vmatpush1.bf16.msra.mxu0 0
    %1851 = vmatprep.subr.bf16.mxu0 0
    %1852 = vmatpush1.bf16.msra.mxu0 0
    %1853 = vmatprep.subr.bf16.mxu0 0
    %1854 = vmatpush1.bf16.msra.mxu0 0
    %1855 = vmatprep.subr.bf16.mxu0 0
    %1856 = vmatpush1.bf16.msra.mxu0 0
    %1857 = vmatprep.subr.bf16.mxu0 0
    %1858 = vmatpush1.bf16.msra.mxu0 0
    %1859 = vmatprep.subr.bf16.mxu0 0
    %1860 = vmatpush1.bf16.msra.mxu0 0
    %1861 = vmatprep.subr.bf16.mxu0 0
    %1862 = vmatpush1.bf16.msra.mxu0 0
    %1863 = vmatprep.subr.bf16.mxu0 0
    %1864 = vmatpush1.bf16.msra.mxu0 0
    %1865 = vmatprep.subr.bf16.mxu0 0
    %1866 = vmatpush1.bf16.msra.mxu0 0
    %1867 = vmatprep.subr.bf16.mxu0 0
    %1868 = vmatpush1.bf16.msra.mxu0 0
    %1869 = vmatprep.subr.bf16.mxu0 0
    %1870 = vmatpush1.bf16.msra.mxu0 0
    %1871 = vmatprep.mubr.bf16.mxu0 0
    %1872 = vmatmul.mubr.bf16.gmra.mrb[0].mxu0 %v1834
    %v1873 = vpop.f32.mrb[0].mxu0
    %v1874 = vadd.f32 0.0, %v1873
    %v1875 = vpop.f32.mrb[0].mxu0
    %v1876 = vpop.f32.mrb[0].mxu0
    %v1877 = vadd.f32 0.0, %v1876
    %v1878 = vpop.f32.mrb[0].mxu0
    %1879 = vmatprep.mubr.bf16.mxu0 0
    %1880 = vmatmul.mubr.bf16.gmra.mrb[0].mxu0 %v1837
    %v1881 = vpop.f32.mrb[0].mxu0
    %v1882 = vadd.f32 0.0, %v1881
    %v1883 = vpop.f32.mrb[0].mxu0
    %v1884 = vpop.f32.mrb[0].mxu0
    %v1885 = vadd.f32 0.0, %v1884
    %v1886 = vpop.f32.mrb[0].mxu0
    %1887 = vdwg.mxu0
    %v1892 = vunpack.c.l.b16 %v98
    %v1893 = vunpack.c.l.b16 %v99
    %v1894 = vunpack.c.l.b16 %v100
    %v1895 = vunpack.c.l.b16 %v101
    %v1896 = vpack.c.b16 %v1893, %v1892
    %v1897 = vpack.c.b16 %v1895, %v1894
    %v1901 = vsel %vm1162, %v1140, 0
    %v1904 = vsel %vm1162, %v1141, 0
    %1906 = vmatprep.subr.bf16.mxu0 0
    %1907 = vmatpush1.bf16.msra.mxu0 %v1896
    %1908 = vmatprep.subr.bf16.mxu0 0
    %1909 = vmatpush1.bf16.msra.mxu0 %v1897
    %1910 = vmatprep.subr.bf16.mxu0 0
    %1911 = vmatpush1.bf16.msra.mxu0 0
    %1912 = vmatprep.subr.bf16.mxu0 0
    %1913 = vmatpush1.bf16.msra.mxu0 0
    %1914 = vmatprep.subr.bf16.mxu0 0
    %1915 = vmatpush1.bf16.msra.mxu0 0
    %1916 = vmatprep.subr.bf16.mxu0 0
    %1917 = vmatpush1.bf16.msra.mxu0 0
    %1918 = vmatprep.subr.bf16.mxu0 0
    %1919 = vmatpush1.bf16.msra.mxu0 0
    %1920 = vmatprep.subr.bf16.mxu0 0
    %1921 = vmatpush1.bf16.msra.mxu0 0
    %1922 = vmatprep.subr.bf16.mxu0 0
    %1923 = vmatpush1.bf16.msra.mxu0 0
    %1924 = vmatprep.subr.bf16.mxu0 0
    %1925 = vmatpush1.bf16.msra.mxu0 0
    %1926 = vmatprep.subr.bf16.mxu0 0
    %1927 = vmatpush1.bf16.msra.mxu0 0
    %1928 = vmatprep.subr.bf16.mxu0 0
    %1929 = vmatpush1.bf16.msra.mxu0 0
    %1930 = vmatprep.subr.bf16.mxu0 0
    %1931 = vmatpush1.bf16.msra.mxu0 0
    %1932 = vmatprep.subr.bf16.mxu0 0
    %1933 = vmatpush1.bf16.msra.mxu0 0
    %1934 = vmatprep.subr.bf16.mxu0 0
    %1935 = vmatpush1.bf16.msra.mxu0 0
    %1936 = vmatprep.subr.bf16.mxu0 0
    %1937 = vmatpush1.bf16.msra.mxu0 0
    %1938 = vmatprep.mubr.bf16.mxu0 0
    %1939 = vmatmul.mubr.bf16.gmra.mrb[0].mxu0 %v1901
    %v1940 = vpop.f32.mrb[0].mxu0
    %v1941 = vadd.f32 0.0, %v1940
    %v1942 = vpop.f32.mrb[0].mxu0
    %v1943 = vpop.f32.mrb[0].mxu0
    %v1944 = vadd.f32 0.0, %v1943
    %v1945 = vpop.f32.mrb[0].mxu0
    %1946 = vmatprep.mubr.bf16.mxu0 0
    %1947 = vmatmul.mubr.bf16.gmra.mrb[0].mxu0 %v1904
    %v1948 = vpop.f32.mrb[0].mxu0
    %v1949 = vadd.f32 0.0, %v1948
    %v1950 = vpop.f32.mrb[0].mxu0
    %v1951 = vpop.f32.mrb[0].mxu0
    %v1952 = vadd.f32 0.0, %v1951
    %v1953 = vpop.f32.mrb[0].mxu0
    %1954 = vdwg.mxu0
    %v1959 = vunpack.c.l.b16 %v102
    %v1960 = vunpack.c.l.b16 %v103
    %v1961 = vunpack.c.l.b16 %v104
    %v1962 = vunpack.c.l.b16 %v105
    %v1963 = vpack.c.b16 %v1960, %v1959
    %v1964 = vpack.c.b16 %v1962, %v1961
    %v1968 = vsel %vm1162, %v1142, 0
    %v1971 = vsel %vm1162, %v1143, 0
    %1973 = vmatprep.subr.bf16.mxu0 0
    %1974 = vmatpush1.bf16.msra.mxu0 %v1963
    %1975 = vmatprep.subr.bf16.mxu0 0
    %1976 = vmatpush1.bf16.msra.mxu0 %v1964
    %1977 = vmatprep.subr.bf16.mxu0 0
    %1978 = vmatpush1.bf16.msra.mxu0 0
    %1979 = vmatprep.subr.bf16.mxu0 0
    %1980 = vmatpush1.bf16.msra.mxu0 0
    %1981 = vmatprep.subr.bf16.mxu0 0
    %1982 = vmatpush1.bf16.msra.mxu0 0
    %1983 = vmatprep.subr.bf16.mxu0 0
    %1984 = vmatpush1.bf16.msra.mxu0 0
    %1985 = vmatprep.subr.bf16.mxu0 0
    %1986 = vmatpush1.bf16.msra.mxu0 0
    %1987 = vmatprep.subr.bf16.mxu0 0
    %1988 = vmatpush1.bf16.msra.mxu0 0
    %1989 = vmatprep.subr.bf16.mxu0 0
    %1990 = vmatpush1.bf16.msra.mxu0 0
    %1991 = vmatprep.subr.bf16.mxu0 0
    %1992 = vmatpush1.bf16.msra.mxu0 0
    %1993 = vmatprep.subr.bf16.mxu0 0
    %1994 = vmatpush1.bf16.msra.mxu0 0
    %1995 = vmatprep.subr.bf16.mxu0 0
    %1996 = vmatpush1.bf16.msra.mxu0 0
    %1997 = vmatprep.subr.bf16.mxu0 0
    %1998 = vmatpush1.bf16.msra.mxu0 0
    %1999 = vmatprep.subr.bf16.mxu0 0
    %2000 = vmatpush1.bf16.msra.mxu0 0
    %2001 = vmatprep.subr.bf16.mxu0 0
    %2002 = vmatpush1.bf16.msra.mxu0 0
    %2003 = vmatprep.subr.bf16.mxu0 0
    %2004 = vmatpush1.bf16.msra.mxu0 0
    %2005 = vmatprep.mubr.bf16.mxu0 0
    %2006 = vmatmul.mubr.bf16.gmra.mrb[0].mxu0 %v1968
    %v2007 = vpop.f32.mrb[0].mxu0
    %v2008 = vadd.f32 0.0, %v2007
    %v2009 = vpop.f32.mrb[0].mxu0
    %v2010 = vpop.f32.mrb[0].mxu0
    %v2011 = vadd.f32 0.0, %v2010
    %v2012 = vpop.f32.mrb[0].mxu0
    %2013 = vmatprep.mubr.bf16.mxu0 0
    %2014 = vmatmul.mubr.bf16.gmra.mrb[0].mxu0 %v1971
    %v2015 = vpop.f32.mrb[0].mxu0
    %v2016 = vadd.f32 0.0, %v2015
    %v2017 = vpop.f32.mrb[0].mxu0
    %v2018 = vpop.f32.mrb[0].mxu0
    %v2019 = vadd.f32 0.0, %v2018
    %v2020 = vpop.f32.mrb[0].mxu0
    %2021 = vdwg.mxu0
    %v2026 = vunpack.c.l.b16 %v106
    %v2027 = vunpack.c.l.b16 %v107
    %v2028 = vunpack.c.l.b16 %v108
    %v2029 = vunpack.c.l.b16 %v109
    %v2030 = vpack.c.b16 %v2027, %v2026
    %v2031 = vpack.c.b16 %v2029, %v2028
    %v2035 = vsel %vm1162, %v1144, 0
    %v2038 = vsel %vm1162, %v1145, 0
    %2040 = vmatprep.subr.bf16.mxu0 0
    %2041 = vmatpush1.bf16.msra.mxu0 %v2030
    %2042 = vmatprep.subr.bf16.mxu0 0
    %2043 = vmatpush1.bf16.msra.mxu0 %v2031
    %2044 = vmatprep.subr.bf16.mxu0 0
    %2045 = vmatpush1.bf16.msra.mxu0 0
    %2046 = vmatprep.subr.bf16.mxu0 0
    %2047 = vmatpush1.bf16.msra.mxu0 0
    %2048 = vmatprep.subr.bf16.mxu0 0
    %2049 = vmatpush1.bf16.msra.mxu0 0
    %2050 = vmatprep.subr.bf16.mxu0 0
    %2051 = vmatpush1.bf16.msra.mxu0 0
    %2052 = vmatprep.subr.bf16.mxu0 0
    %2053 = vmatpush1.bf16.msra.mxu0 0
    %2054 = vmatprep.subr.bf16.mxu0 0
    %2055 = vmatpush1.bf16.msra.mxu0 0
    %2056 = vmatprep.subr.bf16.mxu0 0
    %2057 = vmatpush1.bf16.msra.mxu0 0
    %2058 = vmatprep.subr.bf16.mxu0 0
    %2059 = vmatpush1.bf16.msra.mxu0 0
    %2060 = vmatprep.subr.bf16.mxu0 0
    %2061 = vmatpush1.bf16.msra.mxu0 0
    %2062 = vmatprep.subr.bf16.mxu0 0
    %2063 = vmatpush1.bf16.msra.mxu0 0
    %2064 = vmatprep.subr.bf16.mxu0 0
    %2065 = vmatpush1.bf16.msra.mxu0 0
    %2066 = vmatprep.subr.bf16.mxu0 0
    %2067 = vmatpush1.bf16.msra.mxu0 0
    %2068 = vmatprep.subr.bf16.mxu0 0
    %2069 = vmatpush1.bf16.msra.mxu0 0
    %2070 = vmatprep.subr.bf16.mxu0 0
    %2071 = vmatpush1.bf16.msra.mxu0 0
    %2072 = vmatprep.mubr.bf16.mxu0 0
    %2073 = vmatmul.mubr.bf16.gmra.mrb[0].mxu0 %v2035
    %v2074 = vpop.f32.mrb[0].mxu0
    %v2075 = vadd.f32 0.0, %v2074
    %v2076 = vpop.f32.mrb[0].mxu0
    %v2077 = vpop.f32.mrb[0].mxu0
    %v2078 = vadd.f32 0.0, %v2077
    %v2079 = vpop.f32.mrb[0].mxu0
    %2080 = vmatprep.mubr.bf16.mxu0 0
    %2081 = vmatmul.mubr.bf16.gmra.mrb[0].mxu0 %v2038
    %v2082 = vpop.f32.mrb[0].mxu0
    %v2083 = vadd.f32 0.0, %v2082
    %v2084 = vpop.f32.mrb[0].mxu0
    %v2085 = vpop.f32.mrb[0].mxu0
    %v2086 = vadd.f32 0.0, %v2085
    %v2087 = vpop.f32.mrb[0].mxu0
    %2088 = vdwg.mxu0
    %v2093 = vunpack.c.l.b16 %v110
    %v2094 = vunpack.c.l.b16 %v111
    %v2095 = vunpack.c.l.b16 %v112
    %v2096 = vunpack.c.l.b16 %v113
    %v2097 = vpack.c.b16 %v2094, %v2093
    %v2098 = vpack.c.b16 %v2096, %v2095
    %v2102 = vsel %vm1162, %v1146, 0
    %v2105 = vsel %vm1162, %v1147, 0
    %2107 = vmatprep.subr.bf16.mxu0 0
    %2108 = vmatpush1.bf16.msra.mxu0 %v2097
    %2109 = vmatprep.subr.bf16.mxu0 0
    %2110 = vmatpush1.bf16.msra.mxu0 %v2098
    %2111 = vmatprep.subr.bf16.mxu0 0
    %2112 = vmatpush1.bf16.msra.mxu0 0
    %2113 = vmatprep.subr.bf16.mxu0 0
    %2114 = vmatpush1.bf16.msra.mxu0 0
    %2115 = vmatprep.subr.bf16.mxu0 0
    %2116 = vmatpush1.bf16.msra.mxu0 0
    %2117 = vmatprep.subr.bf16.mxu0 0
    %2118 = vmatpush1.bf16.msra.mxu0 0
    %2119 = vmatprep.subr.bf16.mxu0 0
    %2120 = vmatpush1.bf16.msra.mxu0 0
    %2121 = vmatprep.subr.bf16.mxu0 0
    %2122 = vmatpush1.bf16.msra.mxu0 0
    %2123 = vmatprep.subr.bf16.mxu0 0
    %2124 = vmatpush1.bf16.msra.mxu0 0
    %2125 = vmatprep.subr.bf16.mxu0 0
    %2126 = vmatpush1.bf16.msra.mxu0 0
    %2127 = vmatprep.subr.bf16.mxu0 0
    %2128 = vmatpush1.bf16.msra.mxu0 0
    %2129 = vmatprep.subr.bf16.mxu0 0
    %2130 = vmatpush1.bf16.msra.mxu0 0
    %2131 = vmatprep.subr.bf16.mxu0 0
    %2132 = vmatpush1.bf16.msra.mxu0 0
    %2133 = vmatprep.subr.bf16.mxu0 0
    %2134 = vmatpush1.bf16.msra.mxu0 0
    %2135 = vmatprep.subr.bf16.mxu0 0
    %2136 = vmatpush1.bf16.msra.mxu0 0
    %2137 = vmatprep.subr.bf16.mxu0 0
    %2138 = vmatpush1.bf16.msra.mxu0 0
    %2139 = vmatprep.mubr.bf16.mxu0 0
    %2140 = vmatmul.mubr.bf16.gmra.mrb[0].mxu0 %v2102
    %v2141 = vpop.f32.mrb[0].mxu0
    %v2142 = vadd.f32 0.0, %v2141
    %v2143 = vpop.f32.mrb[0].mxu0
    %v2144 = vpop.f32.mrb[0].mxu0
    %v2145 = vadd.f32 0.0, %v2144
    %v2146 = vpop.f32.mrb[0].mxu0
    %2147 = vmatprep.mubr.bf16.mxu0 0
    %2148 = vmatmul.mubr.bf16.gmra.mrb[0].mxu0 %v2105
    %v2149 = vpop.f32.mrb[0].mxu0
    %v2150 = vadd.f32 0.0, %v2149
    %v2151 = vpop.f32.mrb[0].mxu0
    %v2152 = vpop.f32.mrb[0].mxu0
    %v2153 = vadd.f32 0.0, %v2152
    %v2154 = vpop.f32.mrb[0].mxu0
    %2155 = vdwg.mxu0
    %v2160 = vunpack.c.l.b16 %v114
    %v2161 = vunpack.c.l.b16 %v115
    %v2162 = vunpack.c.l.b16 %v116
    %v2163 = vunpack.c.l.b16 %v117
    %v2164 = vpack.c.b16 %v2161, %v2160
    %v2165 = vpack.c.b16 %v2163, %v2162
    %v2169 = vsel %vm1162, %v1148, 0
    %v2172 = vsel %vm1162, %v1149, 0
    %2174 = vmatprep.subr.bf16.mxu0 0
    %2175 = vmatpush1.bf16.msra.mxu0 %v2164
    %2176 = vmatprep.subr.bf16.mxu0 0
    %2177 = vmatpush1.bf16.msra.mxu0 %v2165
    %2178 = vmatprep.subr.bf16.mxu0 0
    %2179 = vmatpush1.bf16.msra.mxu0 0
    %2180 = vmatprep.subr.bf16.mxu0 0
    %2181 = vmatpush1.bf16.msra.mxu0 0
    %2182 = vmatprep.subr.bf16.mxu0 0
    %2183 = vmatpush1.bf16.msra.mxu0 0
    %2184 = vmatprep.subr.bf16.mxu0 0
    %2185 = vmatpush1.bf16.msra.mxu0 0
    %2186 = vmatprep.subr.bf16.mxu0 0
    %2187 = vmatpush1.bf16.msra.mxu0 0
    %2188 = vmatprep.subr.bf16.mxu0 0
    %2189 = vmatpush1.bf16.msra.mxu0 0
    %2190 = vmatprep.subr.bf16.mxu0 0
    %2191 = vmatpush1.bf16.msra.mxu0 0
    %2192 = vmatprep.subr.bf16.mxu0 0
    %2193 = vmatpush1.bf16.msra.mxu0 0
    %2194 = vmatprep.subr.bf16.mxu0 0
    %2195 = vmatpush1.bf16.msra.mxu0 0
    %2196 = vmatprep.subr.bf16.mxu0 0
    %2197 = vmatpush1.bf16.msra.mxu0 0
    %2198 = vmatprep.subr.bf16.mxu0 0
    %2199 = vmatpush1.bf16.msra.mxu0 0
    %2200 = vmatprep.subr.bf16.mxu0 0
    %2201 = vmatpush1.bf16.msra.mxu0 0
    %2202 = vmatprep.subr.bf16.mxu0 0
    %2203 = vmatpush1.bf16.msra.mxu0 0
    %2204 = vmatprep.subr.bf16.mxu0 0
    %2205 = vmatpush1.bf16.msra.mxu0 0
    %2206 = vmatprep.mubr.bf16.mxu0 0
    %2207 = vmatmul.mubr.bf16.gmra.mrb[0].mxu0 %v2169
    %v2208 = vpop.f32.mrb[0].mxu0
    %v2209 = vadd.f32 0.0, %v2208
    %v2210 = vpop.f32.mrb[0].mxu0
    %v2211 = vpop.f32.mrb[0].mxu0
    %v2212 = vadd.f32 0.0, %v2211
    %v2213 = vpop.f32.mrb[0].mxu0
    %2214 = vmatprep.mubr.bf16.mxu0 0
    %2215 = vmatmul.mubr.bf16.gmra.mrb[0].mxu0 %v2172
    %v2216 = vpop.f32.mrb[0].mxu0
    %v2217 = vadd.f32 0.0, %v2216
    %v2218 = vpop.f32.mrb[0].mxu0
    %v2219 = vpop.f32.mrb[0].mxu0
    %v2220 = vadd.f32 0.0, %v2219
    %v2221 = vpop.f32.mrb[0].mxu0
    %2222 = vdwg.mxu0
    %vm2223 = vcmask 523264
    %v2224 = vsel %vm2223, %v1204, 0.0
    %v2225 = vsel %vm2223, %v1271, 0.0
    %v2226 = vadd.f32 %v2224, %v2225
    %v2227 = vsel %vm2223, %v1338, 0.0
    %v2228 = vadd.f32 %v2226, %v2227
    %v2229 = vsel %vm2223, %v1405, 0.0
    %v2230 = vadd.f32 %v2228, %v2229
    %v2231 = vsel %vm2223, %v1472, 0.0
    %v2232 = vadd.f32 %v2230, %v2231
    %v2233 = vsel %vm2223, %v1539, 0.0
    %v2234 = vadd.f32 %v2232, %v2233
    %v2235 = vsel %vm2223, %v1606, 0.0
    %v2236 = vadd.f32 %v2234, %v2235
    %v2237 = vsel %vm2223, %v1673, 0.0
    %v2238 = vadd.f32 %v2236, %v2237
    %v2239 = vsel %vm2223, %v1740, 0.0
    %v2240 = vadd.f32 %v2238, %v2239
    %v2241 = vsel %vm2223, %v1807, 0.0
    %v2242 = vadd.f32 %v2240, %v2241
    %v2243 = vsel %vm2223, %v1874, 0.0
    %v2244 = vadd.f32 %v2242, %v2243
    %v2245 = vsel %vm2223, %v1941, 0.0
    %v2246 = vadd.f32 %v2244, %v2245
    %v2247 = vsel %vm2223, %v2008, 0.0
    %v2248 = vadd.f32 %v2246, %v2247
    %v2249 = vsel %vm2223, %v2075, 0.0
    %v2250 = vadd.f32 %v2248, %v2249
    %v2251 = vsel %vm2223, %v2142, 0.0
    %v2252 = vadd.f32 %v2250, %v2251
    %v2253 = vsel %vm2223, %v2209, 0.0
    %v2254 = vadd.f32 %v2252, %v2253
    %v2255 = vsel %vm2223, %v1207, 0.0
    %v2256 = vsel %vm2223, %v1274, 0.0
    %v2257 = vadd.f32 %v2255, %v2256
    %v2258 = vsel %vm2223, %v1341, 0.0
    %v2259 = vadd.f32 %v2257, %v2258
    %v2260 = vsel %vm2223, %v1408, 0.0
    %v2261 = vadd.f32 %v2259, %v2260
    %v2262 = vsel %vm2223, %v1475, 0.0
    %v2263 = vadd.f32 %v2261, %v2262
    %v2264 = vsel %vm2223, %v1542, 0.0
    %v2265 = vadd.f32 %v2263, %v2264
    %v2266 = vsel %vm2223, %v1609, 0.0
    %v2267 = vadd.f32 %v2265, %v2266
    %v2268 = vsel %vm2223, %v1676, 0.0
    %v2269 = vadd.f32 %v2267, %v2268
    %v2270 = vsel %vm2223, %v1743, 0.0
    %v2271 = vadd.f32 %v2269, %v2270
    %v2272 = vsel %vm2223, %v1810, 0.0
    %v2273 = vadd.f32 %v2271, %v2272
    %v2274 = vsel %vm2223, %v1877, 0.0
    %v2275 = vadd.f32 %v2273, %v2274
    %v2276 = vsel %vm2223, %v1944, 0.0
    %v2277 = vadd.f32 %v2275, %v2276
    %v2278 = vsel %vm2223, %v2011, 0.0
    %v2279 = vadd.f32 %v2277, %v2278
    %v2280 = vsel %vm2223, %v2078, 0.0
    %v2281 = vadd.f32 %v2279, %v2280
    %v2282 = vsel %vm2223, %v2145, 0.0
    %v2283 = vadd.f32 %v2281, %v2282
    %v2284 = vsel %vm2223, %v2212, 0.0
    %v2285 = vadd.f32 %v2283, %v2284
    %v2286 = vsel %vm2223, %v1212, 0.0
    %v2287 = vsel %vm2223, %v1279, 0.0
    %v2288 = vadd.f32 %v2286, %v2287
    %v2289 = vsel %vm2223, %v1346, 0.0
    %v2290 = vadd.f32 %v2288, %v2289
    %v2291 = vsel %vm2223, %v1413, 0.0
    %v2292 = vadd.f32 %v2290, %v2291
    %v2293 = vsel %vm2223, %v1480, 0.0
    %v2294 = vadd.f32 %v2292, %v2293
    %v2295 = vsel %vm2223, %v1547, 0.0
    %v2296 = vadd.f32 %v2294, %v2295
    %v2297 = vsel %vm2223, %v1614, 0.0
    %v2298 = vadd.f32 %v2296, %v2297
    %v2299 = vsel %vm2223, %v1681, 0.0
    %v2300 = vadd.f32 %v2298, %v2299
    %v2301 = vsel %vm2223, %v1748, 0.0
    %v2302 = vadd.f32 %v2300, %v2301
    %v2303 = vsel %vm2223, %v1815, 0.0
    %v2304 = vadd.f32 %v2302, %v2303
    %v2305 = vsel %vm2223, %v1882, 0.0
    %v2306 = vadd.f32 %v2304, %v2305
    %v2307 = vsel %vm2223, %v1949, 0.0
    %v2308 = vadd.f32 %v2306, %v2307
    %v2309 = vsel %vm2223, %v2016, 0.0
    %v2310 = vadd.f32 %v2308, %v2309
    %v2311 = vsel %vm2223, %v2083, 0.0
    %v2312 = vadd.f32 %v2310, %v2311
    %v2313 = vsel %vm2223, %v2150, 0.0
    %v2314 = vadd.f32 %v2312, %v2313
    %v2315 = vsel %vm2223, %v2217, 0.0
    %v2316 = vadd.f32 %v2314, %v2315
    %v2317 = vsel %vm2223, %v1215, 0.0
    %v2318 = vsel %vm2223, %v1282, 0.0
    %v2319 = vadd.f32 %v2317, %v2318
    %v2320 = vsel %vm2223, %v1349, 0.0
    %v2321 = vadd.f32 %v2319, %v2320
    %v2322 = vsel %vm2223, %v1416, 0.0
    %v2323 = vadd.f32 %v2321, %v2322
    %v2324 = vsel %vm2223, %v1483, 0.0
    %v2325 = vadd.f32 %v2323, %v2324
    %v2326 = vsel %vm2223, %v1550, 0.0
    %v2327 = vadd.f32 %v2325, %v2326
    %v2328 = vsel %vm2223, %v1617, 0.0
    %v2329 = vadd.f32 %v2327, %v2328
    %v2330 = vsel %vm2223, %v1684, 0.0
    %v2331 = vadd.f32 %v2329, %v2330
    %v2332 = vsel %vm2223, %v1751, 0.0
    %v2333 = vadd.f32 %v2331, %v2332
    %v2334 = vsel %vm2223, %v1818, 0.0
    %v2335 = vadd.f32 %v2333, %v2334
    %v2336 = vsel %vm2223, %v1885, 0.0
    %v2337 = vadd.f32 %v2335, %v2336
    %v2338 = vsel %vm2223, %v1952, 0.0
    %v2339 = vadd.f32 %v2337, %v2338
    %v2340 = vsel %vm2223, %v2019, 0.0
    %v2341 = vadd.f32 %v2339, %v2340
    %v2342 = vsel %vm2223, %v2086, 0.0
    %v2343 = vadd.f32 %v2341, %v2342
    %v2344 = vsel %vm2223, %v2153, 0.0
    %v2345 = vadd.f32 %v2343, %v2344
    %v2346 = vsel %vm2223, %v2220, 0.0
    %v2347 = vadd.f32 %v2345, %v2346
    %v2348 = vadd.f32 %v2254, %v255
    %v2349 = vadd.f32 %v2285, %v255
    %v2350 = vadd.f32 %v2316, %v255
    %v2351 = vadd.f32 %v2347, %v255
    %v2352 = vmax.f32 %v2348, 0.0
    %v2353 = vmax.f32 %v2349, 0.0
    %v2354 = vmax.f32 %v2350, 0.0
    %v2355 = vmax.f32 %v2351, 0.0
    %v2356 = vpack.c.bf16 %v2353, %v2352
    %v2357 = vpack.c.bf16 %v2355, %v2354
    %v2358 = vld [vmem:[%s1 + $0x100] sm:$0xf]
    %v2359 = vld [vmem:[%s1 + $0x104] sm:$0xf]
    %v2360 = vld [vmem:[%s1 + $0x108] sm:$0xf]
    %v2361 = vld [vmem:[%s1 + $0x10c] sm:$0xf]
    %v2362 = vld [vmem:[%s1 + $0x110] sm:$0xf]
    %v2363 = vld [vmem:[%s1 + $0x114] sm:$0xf]
    %v2364 = vld [vmem:[%s1 + $0x118] sm:$0xf]
    %v2365 = vld [vmem:[%s1 + $0x11c] sm:$0xf]
    %v2366 = vld [vmem:[%s1 + $0x120] sm:$0xf]
    %v2367 = vld [vmem:[%s1 + $0x124] sm:$0xf]
    %v2368 = vld [vmem:[%s1 + $0x128] sm:$0xf]
    %v2369 = vld [vmem:[%s1 + $0x12c] sm:$0xf]
    %v2370 = vld [vmem:[%s1 + $0x130] sm:$0xf]
    %v2371 = vld [vmem:[%s1 + $0x134] sm:$0xf]
    %v2372 = vld [vmem:[%s1 + $0x138] sm:$0xf]
    %v2373 = vld [vmem:[%s1 + $0x13c] sm:$0xf]
    %v2374 = vld [vmem:[%s1 + $0x140] sm:$0xf]
    %v2375 = vld [vmem:[%s1 + $0x144] sm:$0xf]
    %v2394 = vunpack.c.l.b16 %v2358
    %v2395 = vunpack.c.l.b16 %v2359
    %v2396 = vunpack.c.l.b16 %v2360
    %v2397 = vunpack.c.l.b16 %v2361
    %v2398 = vunpack.c.l.b16 %v2362
    %v2399 = vunpack.c.l.b16 %v2363
    %v2400 = vunpack.c.l.b16 %v2364
    %v2401 = vunpack.c.l.b16 %v2365
    %v2402 = vunpack.c.l.b16 %v2366
    %v2403 = vunpack.c.l.b16 %v2367
    %v2404 = vunpack.c.l.b16 %v2368
    %v2405 = vunpack.c.l.b16 %v2369
    %v2406 = vunpack.c.l.b16 %v2370
    %v2407 = vunpack.c.l.b16 %v2371
    %v2408 = vunpack.c.l.b16 %v2372
    %v2409 = vunpack.c.l.b16 %v2373
    %v2410 = vunpack.c.l.b16 %v2374
    %v2411 = vunpack.c.l.b16 %v2375
    %v2412 = vpack.c.b16 %v2395, %v2394
    %v2413 = vpack.c.b16 %v2397, %v2396
    %v2414 = vpack.c.b16 %v2399, %v2398
    %v2415 = vpack.c.b16 %v2401, %v2400
    %v2416 = vpack.c.b16 %v2403, %v2402
    %v2417 = vpack.c.b16 %v2405, %v2404
    %v2418 = vpack.c.b16 %v2407, %v2406
    %v2419 = vpack.c.b16 %v2409, %v2408
    %v2420 = vpack.c.b16 %v2411, %v2410
    %v2422 = vsel %vm1162, %v2412, 0
    %v2425 = vsel %vm1162, %v2413, 0
    %v2428 = vsel %vm1162, %v2414, 0
    %v2431 = vsel %vm1162, %v2415, 0
    %v2434 = vsel %vm1162, %v2416, 0
    %v2437 = vsel %vm1162, %v2417, 0
    %v2440 = vsel %vm1162, %v2418, 0
    %v2443 = vsel %vm1162, %v2419, 0
    %v2446 = vsel %vm1162, %v2420, 0
    %2448 = vmatprep.subr.bf16.mxu0 0
    %2449 = vmatpush1.bf16.msra.mxu0 %v2356
    %2450 = vmatprep.subr.bf16.mxu0 0
    %2451 = vmatpush1.bf16.msra.mxu0 %v2357
    %2452 = vmatprep.subr.bf16.mxu0 0
    %2453 = vmatpush1.bf16.msra.mxu0 0
    %2454 = vmatprep.subr.bf16.mxu0 0
    %2455 = vmatpush1.bf16.msra.mxu0 0
    %2456 = vmatprep.subr.bf16.mxu0 0
    %2457 = vmatpush1.bf16.msra.mxu0 0
    %2458 = vmatprep.subr.bf16.mxu0 0
    %2459 = vmatpush1.bf16.msra.mxu0 0
    %2460 = vmatprep.subr.bf16.mxu0 0
    %2461 = vmatpush1.bf16.msra.mxu0 0
    %2462 = vmatprep.subr.bf16.mxu0 0
    %2463 = vmatpush1.bf16.msra.mxu0 0
    %2464 = vmatprep.subr.bf16.mxu0 0
    %2465 = vmatpush1.bf16.msra.mxu0 0
    %2466 = vmatprep.subr.bf16.mxu0 0
    %2467 = vmatpush1.bf16.msra.mxu0 0
    %2468 = vmatprep.subr.bf16.mxu0 0
    %2469 = vmatpush1.bf16.msra.mxu0 0
    %2470 = vmatprep.subr.bf16.mxu0 0
    %2471 = vmatpush1.bf16.msra.mxu0 0
    %2472 = vmatprep.subr.bf16.mxu0 0
    %2473 = vmatpush1.bf16.msra.mxu0 0
    %2474 = vmatprep.subr.bf16.mxu0 0
    %2475 = vmatpush1.bf16.msra.mxu0 0
    %2476 = vmatprep.subr.bf16.mxu0 0
    %2477 = vmatpush1.bf16.msra.mxu0 0
    %2478 = vmatprep.subr.bf16.mxu0 0
    %2479 = vmatpush1.bf16.msra.mxu0 0
    %2480 = vmatprep.mubr.bf16.mxu0 0
    %2481 = vmatmul.mubr.bf16.gmra.mrb[0].mxu0 %v2422
    %v2482 = vpop.f32.mrb[0].mxu0
    %v2483 = vadd.f32 0.0, %v2482
    %v2484 = vpop.f32.mrb[0].mxu0
    %v2485 = vpop.f32.mrb[0].mxu0
    %v2486 = vadd.f32 0.0, %v2485
    %v2487 = vpop.f32.mrb[0].mxu0
    %2488 = vmatprep.mubr.bf16.mxu0 0
    %2489 = vmatmul.mubr.bf16.gmra.mrb[0].mxu0 %v2425
    %v2490 = vpop.f32.mrb[0].mxu0
    %v2491 = vadd.f32 0.0, %v2490
    %v2492 = vpop.f32.mrb[0].mxu0
    %v2493 = vpop.f32.mrb[0].mxu0
    %v2494 = vadd.f32 0.0, %v2493
    %v2495 = vpop.f32.mrb[0].mxu0
    %2496 = vmatprep.mubr.bf16.mxu0 0
    %2497 = vmatmul.mubr.bf16.gmra.mrb[0].mxu0 %v2428
    %v2498 = vpop.f32.mrb[0].mxu0
    %v2499 = vadd.f32 0.0, %v2498
    %v2500 = vpop.f32.mrb[0].mxu0
    %v2501 = vpop.f32.mrb[0].mxu0
    %v2502 = vadd.f32 0.0, %v2501
    %v2503 = vpop.f32.mrb[0].mxu0
    %2504 = vmatprep.mubr.bf16.mxu0 0
    %2505 = vmatmul.mubr.bf16.gmra.mrb[0].mxu0 %v2431
    %v2506 = vpop.f32.mrb[0].mxu0
    %v2507 = vadd.f32 0.0, %v2506
    %v2508 = vpop.f32.mrb[0].mxu0
    %v2509 = vpop.f32.mrb[0].mxu0
    %v2510 = vadd.f32 0.0, %v2509
    %v2511 = vpop.f32.mrb[0].mxu0
    %2512 = vmatprep.mubr.bf16.mxu0 0
    %2513 = vmatmul.mubr.bf16.gmra.mrb[0].mxu0 %v2434
    %v2514 = vpop.f32.mrb[0].mxu0
    %v2515 = vadd.f32 0.0, %v2514
    %v2516 = vpop.f32.mrb[0].mxu0
    %v2517 = vpop.f32.mrb[0].mxu0
    %v2518 = vadd.f32 0.0, %v2517
    %v2519 = vpop.f32.mrb[0].mxu0
    %2520 = vmatprep.mubr.bf16.mxu0 0
    %2521 = vmatmul.mubr.bf16.gmra.mrb[0].mxu0 %v2437
    %v2522 = vpop.f32.mrb[0].mxu0
    %v2523 = vadd.f32 0.0, %v2522
    %v2524 = vpop.f32.mrb[0].mxu0
    %v2525 = vpop.f32.mrb[0].mxu0
    %v2526 = vadd.f32 0.0, %v2525
    %v2527 = vpop.f32.mrb[0].mxu0
    %2528 = vmatprep.mubr.bf16.mxu0 0
    %2529 = vmatmul.mubr.bf16.gmra.mrb[0].mxu0 %v2440
    %v2530 = vpop.f32.mrb[0].mxu0
    %v2531 = vadd.f32 0.0, %v2530
    %v2532 = vpop.f32.mrb[0].mxu0
    %v2533 = vpop.f32.mrb[0].mxu0
    %v2534 = vadd.f32 0.0, %v2533
    %v2535 = vpop.f32.mrb[0].mxu0
    %2536 = vmatprep.mubr.bf16.mxu0 0
    %2537 = vmatmul.mubr.bf16.gmra.mrb[0].mxu0 %v2443
    %v2538 = vpop.f32.mrb[0].mxu0
    %v2539 = vadd.f32 0.0, %v2538
    %v2540 = vpop.f32.mrb[0].mxu0
    %v2541 = vpop.f32.mrb[0].mxu0
    %v2542 = vadd.f32 0.0, %v2541
    %v2543 = vpop.f32.mrb[0].mxu0
    %2544 = vmatprep.mubr.bf16.mxu0 0
    %2545 = vmatmul.mubr.bf16.gmra.mrb[0].mxu0 %v2446
    %v2546 = vpop.f32.mrb[0].mxu0
    %v2547 = vadd.f32 0.0, %v2546
    %v2548 = vpop.f32.mrb[0].mxu0
    %v2549 = vpop.f32.mrb[0].mxu0
    %v2550 = vadd.f32 0.0, %v2549
    %v2551 = vpop.f32.mrb[0].mxu0
    %2552 = vdwg.mxu0
    %v2553 = vpack.c.bf16 %v2486, %v2483
    %v2554 = vpack.c.bf16 %v2494, %v2491
    %v2555 = vpack.c.bf16 %v2502, %v2499
    %v2556 = vpack.c.bf16 %v2510, %v2507
    %v2557 = vpack.c.bf16 %v2518, %v2515
    %v2558 = vpack.c.bf16 %v2526, %v2523
    %v2559 = vpack.c.bf16 %v2534, %v2531
    %v2560 = vpack.c.bf16 %v2542, %v2539
    %v2561 = vpack.c.bf16 %v2550, %v2547
    %v2570 = vunpack.c.l.b16 %v118
    %v2571 = vunpack.c.l.b16 %v119
    %v2572 = vunpack.c.l.b16 %v120
    %v2573 = vunpack.c.l.b16 %v121
    %v2574 = vunpack.c.l.b16 %v122
    %v2575 = vunpack.c.l.b16 %v123
    %v2576 = vunpack.c.l.b16 %v124
    %v2577 = vunpack.c.l.b16 %v125
    %v2578 = vpack.c.b16 %v2571, %v2570
    %v2579 = vpack.c.b16 %v2573, %v2572
    %v2580 = vpack.c.b16 %v2575, %v2574
    %v2581 = vpack.c.b16 %v2577, %v2576
    %v2587 = vsel %vm2223, %v2553, 0
    %2589 = vmatprep.subr.bf16.mxu0 0
    %2590 = vmatpush1.bf16.msra.mxu0 %v2578
    %2591 = vmatprep.subr.bf16.mxu0 0
    %2592 = vmatpush1.bf16.msra.mxu0 %v2579
    %2593 = vmatprep.subr.bf16.mxu0 0
    %2594 = vmatpush1.bf16.msra.mxu0 %v2580
    %2595 = vmatprep.subr.bf16.mxu0 0
    %2596 = vmatpush1.bf16.msra.mxu0 %v2581
    %2597 = vmatprep.subr.bf16.mxu0 0
    %2598 = vmatpush1.bf16.msra.mxu0 0
    %2599 = vmatprep.subr.bf16.mxu0 0
    %2600 = vmatpush1.bf16.msra.mxu0 0
    %2601 = vmatprep.subr.bf16.mxu0 0
    %2602 = vmatpush1.bf16.msra.mxu0 0
    %2603 = vmatprep.subr.bf16.mxu0 0
    %2604 = vmatpush1.bf16.msra.mxu0 0
    %2605 = vmatprep.subr.bf16.mxu0 0
    %2606 = vmatpush1.bf16.msra.mxu0 0
    %2607 = vmatprep.subr.bf16.mxu0 0
    %2608 = vmatpush1.bf16.msra.mxu0 0
    %2609 = vmatprep.subr.bf16.mxu0 0
    %2610 = vmatpush1.bf16.msra.mxu0 0
    %2611 = vmatprep.subr.bf16.mxu0 0
    %2612 = vmatpush1.bf16.msra.mxu0 0
    %2613 = vmatprep.subr.bf16.mxu0 0
    %2614 = vmatpush1.bf16.msra.mxu0 0
    %2615 = vmatprep.subr.bf16.mxu0 0
    %2616 = vmatpush1.bf16.msra.mxu0 0
    %2617 = vmatprep.subr.bf16.mxu0 0
    %2618 = vmatpush1.bf16.msra.mxu0 0
    %2619 = vmatprep.subr.bf16.mxu0 0
    %2620 = vmatpush1.bf16.msra.mxu0 0
    %2621 = vmatprep.mubr.bf16.mxu0 0
    %2622 = vmatmul.mubr.bf16.gmra.mrb[0].mxu0 %v2587
    %v2623 = vpop.f32.mrb[0].mxu0
    %v2624 = vadd.f32 0.0, %v2623
    %v2625 = vpop.f32.mrb[0].mxu0
    %v2626 = vpop.f32.mrb[0].mxu0
    %v2627 = vadd.f32 0.0, %v2626
    %v2628 = vpop.f32.mrb[0].mxu0
    %2629 = vdwg.mxu0
    %v2638 = vunpack.c.l.b16 %v126
    %v2639 = vunpack.c.l.b16 %v127
    %v2640 = vunpack.c.l.b16 %v128
    %v2641 = vunpack.c.l.b16 %v129
    %v2642 = vunpack.c.l.b16 %v130
    %v2643 = vunpack.c.l.b16 %v131
    %v2644 = vunpack.c.l.b16 %v132
    %v2645 = vunpack.c.l.b16 %v133
    %v2646 = vpack.c.b16 %v2639, %v2638
    %v2647 = vpack.c.b16 %v2641, %v2640
    %v2648 = vpack.c.b16 %v2643, %v2642
    %v2649 = vpack.c.b16 %v2645, %v2644
    %v2655 = vsel %vm2223, %v2554, 0
    %2657 = vmatprep.subr.bf16.mxu0 0
    %2658 = vmatpush1.bf16.msra.mxu0 %v2646
    %2659 = vmatprep.subr.bf16.mxu0 0
    %2660 = vmatpush1.bf16.msra.mxu0 %v2647
    %2661 = vmatprep.subr.bf16.mxu0 0
    %2662 = vmatpush1.bf16.msra.mxu0 %v2648
    %2663 = vmatprep.subr.bf16.mxu0 0
    %2664 = vmatpush1.bf16.msra.mxu0 %v2649
    %2665 = vmatprep.subr.bf16.mxu0 0
    %2666 = vmatpush1.bf16.msra.mxu0 0
    %2667 = vmatprep.subr.bf16.mxu0 0
    %2668 = vmatpush1.bf16.msra.mxu0 0
    %2669 = vmatprep.subr.bf16.mxu0 0
    %2670 = vmatpush1.bf16.msra.mxu0 0
    %2671 = vmatprep.subr.bf16.mxu0 0
    %2672 = vmatpush1.bf16.msra.mxu0 0
    %2673 = vmatprep.subr.bf16.mxu0 0
    %2674 = vmatpush1.bf16.msra.mxu0 0
    %2675 = vmatprep.subr.bf16.mxu0 0
    %2676 = vmatpush1.bf16.msra.mxu0 0
    %2677 = vmatprep.subr.bf16.mxu0 0
    %2678 = vmatpush1.bf16.msra.mxu0 0
    %2679 = vmatprep.subr.bf16.mxu0 0
    %2680 = vmatpush1.bf16.msra.mxu0 0
    %2681 = vmatprep.subr.bf16.mxu0 0
    %2682 = vmatpush1.bf16.msra.mxu0 0
    %2683 = vmatprep.subr.bf16.mxu0 0
    %2684 = vmatpush1.bf16.msra.mxu0 0
    %2685 = vmatprep.subr.bf16.mxu0 0
    %2686 = vmatpush1.bf16.msra.mxu0 0
    %2687 = vmatprep.subr.bf16.mxu0 0
    %2688 = vmatpush1.bf16.msra.mxu0 0
    %2689 = vmatprep.mubr.bf16.mxu0 0
    %2690 = vmatmul.mubr.bf16.gmra.mrb[0].mxu0 %v2655
    %v2691 = vpop.f32.mrb[0].mxu0
    %v2692 = vadd.f32 0.0, %v2691
    %v2693 = vpop.f32.mrb[0].mxu0
    %v2694 = vpop.f32.mrb[0].mxu0
    %v2695 = vadd.f32 0.0, %v2694
    %v2696 = vpop.f32.mrb[0].mxu0
    %2697 = vdwg.mxu0
    %v2706 = vunpack.c.l.b16 %v134
    %v2707 = vunpack.c.l.b16 %v135
    %v2708 = vunpack.c.l.b16 %v136
    %v2709 = vunpack.c.l.b16 %v137
    %v2710 = vunpack.c.l.b16 %v138
    %v2711 = vunpack.c.l.b16 %v139
    %v2712 = vunpack.c.l.b16 %v140
    %v2713 = vunpack.c.l.b16 %v141
    %v2714 = vpack.c.b16 %v2707, %v2706
    %v2715 = vpack.c.b16 %v2709, %v2708
    %v2716 = vpack.c.b16 %v2711, %v2710
    %v2717 = vpack.c.b16 %v2713, %v2712
    %v2723 = vsel %vm2223, %v2555, 0
    %2725 = vmatprep.subr.bf16.mxu0 0
    %2726 = vmatpush1.bf16.msra.mxu0 %v2714
    %2727 = vmatprep.subr.bf16.mxu0 0
    %2728 = vmatpush1.bf16.msra.mxu0 %v2715
    %2729 = vmatprep.subr.bf16.mxu0 0
    %2730 = vmatpush1.bf16.msra.mxu0 %v2716
    %2731 = vmatprep.subr.bf16.mxu0 0
    %2732 = vmatpush1.bf16.msra.mxu0 %v2717
    %2733 = vmatprep.subr.bf16.mxu0 0
    %2734 = vmatpush1.bf16.msra.mxu0 0
    %2735 = vmatprep.subr.bf16.mxu0 0
    %2736 = vmatpush1.bf16.msra.mxu0 0
    %2737 = vmatprep.subr.bf16.mxu0 0
    %2738 = vmatpush1.bf16.msra.mxu0 0
    %2739 = vmatprep.subr.bf16.mxu0 0
    %2740 = vmatpush1.bf16.msra.mxu0 0
    %2741 = vmatprep.subr.bf16.mxu0 0
    %2742 = vmatpush1.bf16.msra.mxu0 0
    %2743 = vmatprep.subr.bf16.mxu0 0
    %2744 = vmatpush1.bf16.msra.mxu0 0
    %2745 = vmatprep.subr.bf16.mxu0 0
    %2746 = vmatpush1.bf16.msra.mxu0 0
    %2747 = vmatprep.subr.bf16.mxu0 0
    %2748 = vmatpush1.bf16.msra.mxu0 0
    %2749 = vmatprep.subr.bf16.mxu0 0
    %2750 = vmatpush1.bf16.msra.mxu0 0
    %2751 = vmatprep.subr.bf16.mxu0 0
    %2752 = vmatpush1.bf16.msra.mxu0 0
    %2753 = vmatprep.subr.bf16.mxu0 0
    %2754 = vmatpush1.bf16.msra.mxu0 0
    %2755 = vmatprep.subr.bf16.mxu0 0
    %2756 = vmatpush1.bf16.msra.mxu0 0
    %2757 = vmatprep.mubr.bf16.mxu0 0
    %2758 = vmatmul.mubr.bf16.gmra.mrb[0].mxu0 %v2723
    %v2759 = vpop.f32.mrb[0].mxu0
    %v2760 = vadd.f32 0.0, %v2759
    %v2761 = vpop.f32.mrb[0].mxu0
    %v2762 = vpop.f32.mrb[0].mxu0
    %v2763 = vadd.f32 0.0, %v2762
    %v2764 = vpop.f32.mrb[0].mxu0
    %2765 = vdwg.mxu0
    %v2774 = vunpack.c.l.b16 %v142
    %v2775 = vunpack.c.l.b16 %v143
    %v2776 = vunpack.c.l.b16 %v144
    %v2777 = vunpack.c.l.b16 %v145
    %v2778 = vunpack.c.l.b16 %v146
    %v2779 = vunpack.c.l.b16 %v147
    %v2780 = vunpack.c.l.b16 %v148
    %v2781 = vunpack.c.l.b16 %v149
    %v2782 = vpack.c.b16 %v2775, %v2774
    %v2783 = vpack.c.b16 %v2777, %v2776
    %v2784 = vpack.c.b16 %v2779, %v2778
    %v2785 = vpack.c.b16 %v2781, %v2780
    %v2791 = vsel %vm2223, %v2556, 0
    %2793 = vmatprep.subr.bf16.mxu0 0
    %2794 = vmatpush1.bf16.msra.mxu0 %v2782
    %2795 = vmatprep.subr.bf16.mxu0 0
    %2796 = vmatpush1.bf16.msra.mxu0 %v2783
    %2797 = vmatprep.subr.bf16.mxu0 0
    %2798 = vmatpush1.bf16.msra.mxu0 %v2784
    %2799 = vmatprep.subr.bf16.mxu0 0
    %2800 = vmatpush1.bf16.msra.mxu0 %v2785
    %2801 = vmatprep.subr.bf16.mxu0 0
    %2802 = vmatpush1.bf16.msra.mxu0 0
    %2803 = vmatprep.subr.bf16.mxu0 0
    %2804 = vmatpush1.bf16.msra.mxu0 0
    %2805 = vmatprep.subr.bf16.mxu0 0
    %2806 = vmatpush1.bf16.msra.mxu0 0
    %2807 = vmatprep.subr.bf16.mxu0 0
    %2808 = vmatpush1.bf16.msra.mxu0 0
    %2809 = vmatprep.subr.bf16.mxu0 0
    %2810 = vmatpush1.bf16.msra.mxu0 0
    %2811 = vmatprep.subr.bf16.mxu0 0
    %2812 = vmatpush1.bf16.msra.mxu0 0
    %2813 = vmatprep.subr.bf16.mxu0 0
    %2814 = vmatpush1.bf16.msra.mxu0 0
    %2815 = vmatprep.subr.bf16.mxu0 0
    %2816 = vmatpush1.bf16.msra.mxu0 0
    %2817 = vmatprep.subr.bf16.mxu0 0
    %2818 = vmatpush1.bf16.msra.mxu0 0
    %2819 = vmatprep.subr.bf16.mxu0 0
    %2820 = vmatpush1.bf16.msra.mxu0 0
    %2821 = vmatprep.subr.bf16.mxu0 0
    %2822 = vmatpush1.bf16.msra.mxu0 0
    %2823 = vmatprep.subr.bf16.mxu0 0
    %2824 = vmatpush1.bf16.msra.mxu0 0
    %2825 = vmatprep.mubr.bf16.mxu0 0
    %2826 = vmatmul.mubr.bf16.gmra.mrb[0].mxu0 %v2791
    %v2827 = vpop.f32.mrb[0].mxu0
    %v2828 = vadd.f32 0.0, %v2827
    %v2829 = vpop.f32.mrb[0].mxu0
    %v2830 = vpop.f32.mrb[0].mxu0
    %v2831 = vadd.f32 0.0, %v2830
    %v2832 = vpop.f32.mrb[0].mxu0
    %2833 = vdwg.mxu0
    %v2842 = vunpack.c.l.b16 %v150
    %v2843 = vunpack.c.l.b16 %v151
    %v2844 = vunpack.c.l.b16 %v152
    %v2845 = vunpack.c.l.b16 %v153
    %v2846 = vunpack.c.l.b16 %v154
    %v2847 = vunpack.c.l.b16 %v155
    %v2848 = vunpack.c.l.b16 %v156
    %v2849 = vunpack.c.l.b16 %v157
    %v2850 = vpack.c.b16 %v2843, %v2842
    %v2851 = vpack.c.b16 %v2845, %v2844
    %v2852 = vpack.c.b16 %v2847, %v2846
    %v2853 = vpack.c.b16 %v2849, %v2848
    %v2859 = vsel %vm2223, %v2557, 0
    %2861 = vmatprep.subr.bf16.mxu0 0
    %2862 = vmatpush1.bf16.msra.mxu0 %v2850
    %2863 = vmatprep.subr.bf16.mxu0 0
    %2864 = vmatpush1.bf16.msra.mxu0 %v2851
    %2865 = vmatprep.subr.bf16.mxu0 0
    %2866 = vmatpush1.bf16.msra.mxu0 %v2852
    %2867 = vmatprep.subr.bf16.mxu0 0
    %2868 = vmatpush1.bf16.msra.mxu0 %v2853
    %2869 = vmatprep.subr.bf16.mxu0 0
    %2870 = vmatpush1.bf16.msra.mxu0 0
    %2871 = vmatprep.subr.bf16.mxu0 0
    %2872 = vmatpush1.bf16.msra.mxu0 0
    %2873 = vmatprep.subr.bf16.mxu0 0
    %2874 = vmatpush1.bf16.msra.mxu0 0
    %2875 = vmatprep.subr.bf16.mxu0 0
    %2876 = vmatpush1.bf16.msra.mxu0 0
    %2877 = vmatprep.subr.bf16.mxu0 0
    %2878 = vmatpush1.bf16.msra.mxu0 0
    %2879 = vmatprep.subr.bf16.mxu0 0
    %2880 = vmatpush1.bf16.msra.mxu0 0
    %2881 = vmatprep.subr.bf16.mxu0 0
    %2882 = vmatpush1.bf16.msra.mxu0 0
    %2883 = vmatprep.subr.bf16.mxu0 0
    %2884 = vmatpush1.bf16.msra.mxu0 0
    %2885 = vmatprep.subr.bf16.mxu0 0
    %2886 = vmatpush1.bf16.msra.mxu0 0
    %2887 = vmatprep.subr.bf16.mxu0 0
    %2888 = vmatpush1.bf16.msra.mxu0 0
    %2889 = vmatprep.subr.bf16.mxu0 0
    %2890 = vmatpush1.bf16.msra.mxu0 0
    %2891 = vmatprep.subr.bf16.mxu0 0
    %2892 = vmatpush1.bf16.msra.mxu0 0
    %2893 = vmatprep.mubr.bf16.mxu0 0
    %2894 = vmatmul.mubr.bf16.gmra.mrb[0].mxu0 %v2859
    %v2895 = vpop.f32.mrb[0].mxu0
    %v2896 = vadd.f32 0.0, %v2895
    %v2897 = vpop.f32.mrb[0].mxu0
    %v2898 = vpop.f32.mrb[0].mxu0
    %v2899 = vadd.f32 0.0, %v2898
    %v2900 = vpop.f32.mrb[0].mxu0
    %2901 = vdwg.mxu0
    %v2910 = vunpack.c.l.b16 %v158
    %v2911 = vunpack.c.l.b16 %v159
    %v2912 = vunpack.c.l.b16 %v160
    %v2913 = vunpack.c.l.b16 %v161
    %v2914 = vunpack.c.l.b16 %v162
    %v2915 = vunpack.c.l.b16 %v163
    %v2916 = vunpack.c.l.b16 %v164
    %v2917 = vunpack.c.l.b16 %v165
    %v2918 = vpack.c.b16 %v2911, %v2910
    %v2919 = vpack.c.b16 %v2913, %v2912
    %v2920 = vpack.c.b16 %v2915, %v2914
    %v2921 = vpack.c.b16 %v2917, %v2916
    %v2927 = vsel %vm2223, %v2558, 0
    %2929 = vmatprep.subr.bf16.mxu0 0
    %2930 = vmatpush1.bf16.msra.mxu0 %v2918
    %2931 = vmatprep.subr.bf16.mxu0 0
    %2932 = vmatpush1.bf16.msra.mxu0 %v2919
    %2933 = vmatprep.subr.bf16.mxu0 0
    %2934 = vmatpush1.bf16.msra.mxu0 %v2920
    %2935 = vmatprep.subr.bf16.mxu0 0
    %2936 = vmatpush1.bf16.msra.mxu0 %v2921
    %2937 = vmatprep.subr.bf16.mxu0 0
    %2938 = vmatpush1.bf16.msra.mxu0 0
    %2939 = vmatprep.subr.bf16.mxu0 0
    %2940 = vmatpush1.bf16.msra.mxu0 0
    %2941 = vmatprep.subr.bf16.mxu0 0
    %2942 = vmatpush1.bf16.msra.mxu0 0
    %2943 = vmatprep.subr.bf16.mxu0 0
    %2944 = vmatpush1.bf16.msra.mxu0 0
    %2945 = vmatprep.subr.bf16.mxu0 0
    %2946 = vmatpush1.bf16.msra.mxu0 0
    %2947 = vmatprep.subr.bf16.mxu0 0
    %2948 = vmatpush1.bf16.msra.mxu0 0
    %2949 = vmatprep.subr.bf16.mxu0 0
    %2950 = vmatpush1.bf16.msra.mxu0 0
    %2951 = vmatprep.subr.bf16.mxu0 0
    %2952 = vmatpush1.bf16.msra.mxu0 0
    %2953 = vmatprep.subr.bf16.mxu0 0
    %2954 = vmatpush1.bf16.msra.mxu0 0
    %2955 = vmatprep.subr.bf16.mxu0 0
    %2956 = vmatpush1.bf16.msra.mxu0 0
    %2957 = vmatprep.subr.bf16.mxu0 0
    %2958 = vmatpush1.bf16.msra.mxu0 0
    %2959 = vmatprep.subr.bf16.mxu0 0
    %2960 = vmatpush1.bf16.msra.mxu0 0
    %2961 = vmatprep.mubr.bf16.mxu0 0
    %2962 = vmatmul.mubr.bf16.gmra.mrb[0].mxu0 %v2927
    %v2963 = vpop.f32.mrb[0].mxu0
    %v2964 = vadd.f32 0.0, %v2963
    %v2965 = vpop.f32.mrb[0].mxu0
    %v2966 = vpop.f32.mrb[0].mxu0
    %v2967 = vadd.f32 0.0, %v2966
    %v2968 = vpop.f32.mrb[0].mxu0
    %2969 = vdwg.mxu0
    %v2978 = vunpack.c.l.b16 %v166
    %v2979 = vunpack.c.l.b16 %v167
    %v2980 = vunpack.c.l.b16 %v168
    %v2981 = vunpack.c.l.b16 %v169
    %v2982 = vunpack.c.l.b16 %v170
    %v2983 = vunpack.c.l.b16 %v171
    %v2984 = vunpack.c.l.b16 %v172
    %v2985 = vunpack.c.l.b16 %v173
    %v2986 = vpack.c.b16 %v2979, %v2978
    %v2987 = vpack.c.b16 %v2981, %v2980
    %v2988 = vpack.c.b16 %v2983, %v2982
    %v2989 = vpack.c.b16 %v2985, %v2984
    %v2995 = vsel %vm2223, %v2559, 0
    %2997 = vmatprep.subr.bf16.mxu0 0
    %2998 = vmatpush1.bf16.msra.mxu0 %v2986
    %2999 = vmatprep.subr.bf16.mxu0 0
    %3000 = vmatpush1.bf16.msra.mxu0 %v2987
    %3001 = vmatprep.subr.bf16.mxu0 0
    %3002 = vmatpush1.bf16.msra.mxu0 %v2988
    %3003 = vmatprep.subr.bf16.mxu0 0
    %3004 = vmatpush1.bf16.msra.mxu0 %v2989
    %3005 = vmatprep.subr.bf16.mxu0 0
    %3006 = vmatpush1.bf16.msra.mxu0 0
    %3007 = vmatprep.subr.bf16.mxu0 0
    %3008 = vmatpush1.bf16.msra.mxu0 0
    %3009 = vmatprep.subr.bf16.mxu0 0
    %3010 = vmatpush1.bf16.msra.mxu0 0
    %3011 = vmatprep.subr.bf16.mxu0 0
    %3012 = vmatpush1.bf16.msra.mxu0 0
    %3013 = vmatprep.subr.bf16.mxu0 0
    %3014 = vmatpush1.bf16.msra.mxu0 0
    %3015 = vmatprep.subr.bf16.mxu0 0
    %3016 = vmatpush1.bf16.msra.mxu0 0
    %3017 = vmatprep.subr.bf16.mxu0 0
    %3018 = vmatpush1.bf16.msra.mxu0 0
    %3019 = vmatprep.subr.bf16.mxu0 0
    %3020 = vmatpush1.bf16.msra.mxu0 0
    %3021 = vmatprep.subr.bf16.mxu0 0
    %3022 = vmatpush1.bf16.msra.mxu0 0
    %3023 = vmatprep.subr.bf16.mxu0 0
    %3024 = vmatpush1.bf16.msra.mxu0 0
    %3025 = vmatprep.subr.bf16.mxu0 0
    %3026 = vmatpush1.bf16.msra.mxu0 0
    %3027 = vmatprep.subr.bf16.mxu0 0
    %3028 = vmatpush1.bf16.msra.mxu0 0
    %3029 = vmatprep.mubr.bf16.mxu0 0
    %3030 = vmatmul.mubr.bf16.gmra.mrb[0].mxu0 %v2995
    %v3031 = vpop.f32.mrb[0].mxu0
    %v3032 = vadd.f32 0.0, %v3031
    %v3033 = vpop.f32.mrb[0].mxu0
    %v3034 = vpop.f32.mrb[0].mxu0
    %v3035 = vadd.f32 0.0, %v3034
    %v3036 = vpop.f32.mrb[0].mxu0
    %3037 = vdwg.mxu0
    %v3046 = vunpack.c.l.b16 %v174
    %v3047 = vunpack.c.l.b16 %v175
    %v3048 = vunpack.c.l.b16 %v176
    %v3049 = vunpack.c.l.b16 %v177
    %v3050 = vunpack.c.l.b16 %v178
    %v3051 = vunpack.c.l.b16 %v179
    %v3052 = vunpack.c.l.b16 %v180
    %v3053 = vunpack.c.l.b16 %v181
    %v3054 = vpack.c.b16 %v3047, %v3046
    %v3055 = vpack.c.b16 %v3049, %v3048
    %v3056 = vpack.c.b16 %v3051, %v3050
    %v3057 = vpack.c.b16 %v3053, %v3052
    %v3063 = vsel %vm2223, %v2560, 0
    %3065 = vmatprep.subr.bf16.mxu0 0
    %3066 = vmatpush1.bf16.msra.mxu0 %v3054
    %3067 = vmatprep.subr.bf16.mxu0 0
    %3068 = vmatpush1.bf16.msra.mxu0 %v3055
    %3069 = vmatprep.subr.bf16.mxu0 0
    %3070 = vmatpush1.bf16.msra.mxu0 %v3056
    %3071 = vmatprep.subr.bf16.mxu0 0
    %3072 = vmatpush1.bf16.msra.mxu0 %v3057
    %3073 = vmatprep.subr.bf16.mxu0 0
    %3074 = vmatpush1.bf16.msra.mxu0 0
    %3075 = vmatprep.subr.bf16.mxu0 0
    %3076 = vmatpush1.bf16.msra.mxu0 0
    %3077 = vmatprep.subr.bf16.mxu0 0
    %3078 = vmatpush1.bf16.msra.mxu0 0
    %3079 = vmatprep.subr.bf16.mxu0 0
    %3080 = vmatpush1.bf16.msra.mxu0 0
    %3081 = vmatprep.subr.bf16.mxu0 0
    %3082 = vmatpush1.bf16.msra.mxu0 0
    %3083 = vmatprep.subr.bf16.mxu0 0
    %3084 = vmatpush1.bf16.msra.mxu0 0
    %3085 = vmatprep.subr.bf16.mxu0 0
    %3086 = vmatpush1.bf16.msra.mxu0 0
    %3087 = vmatprep.subr.bf16.mxu0 0
    %3088 = vmatpush1.bf16.msra.mxu0 0
    %3089 = vmatprep.subr.bf16.mxu0 0
    %3090 = vmatpush1.bf16.msra.mxu0 0
    %3091 = vmatprep.subr.bf16.mxu0 0
    %3092 = vmatpush1.bf16.msra.mxu0 0
    %3093 = vmatprep.subr.bf16.mxu0 0
    %3094 = vmatpush1.bf16.msra.mxu0 0
    %3095 = vmatprep.subr.bf16.mxu0 0
    %3096 = vmatpush1.bf16.msra.mxu0 0
    %3097 = vmatprep.mubr.bf16.mxu0 0
    %3098 = vmatmul.mubr.bf16.gmra.mrb[0].mxu0 %v3063
    %v3099 = vpop.f32.mrb[0].mxu0
    %v3100 = vadd.f32 0.0, %v3099
    %v3101 = vpop.f32.mrb[0].mxu0
    %v3102 = vpop.f32.mrb[0].mxu0
    %v3103 = vadd.f32 0.0, %v3102
    %v3104 = vpop.f32.mrb[0].mxu0
    %3105 = vdwg.mxu0
    %v3114 = vunpack.c.l.b16 %v182
    %v3115 = vunpack.c.l.b16 %v183
    %v3116 = vunpack.c.l.b16 %v184
    %v3117 = vunpack.c.l.b16 %v185
    %v3118 = vunpack.c.l.b16 %v186
    %v3119 = vunpack.c.l.b16 %v187
    %v3120 = vunpack.c.l.b16 %v188
    %v3121 = vunpack.c.l.b16 %v189
    %v3122 = vpack.c.b16 %v3115, %v3114
    %v3123 = vpack.c.b16 %v3117, %v3116
    %v3124 = vpack.c.b16 %v3119, %v3118
    %v3125 = vpack.c.b16 %v3121, %v3120
    %v3131 = vsel %vm2223, %v2561, 0
    %3133 = vmatprep.subr.bf16.mxu0 0
    %3134 = vmatpush1.bf16.msra.mxu0 %v3122
    %3135 = vmatprep.subr.bf16.mxu0 0
    %3136 = vmatpush1.bf16.msra.mxu0 %v3123
    %3137 = vmatprep.subr.bf16.mxu0 0
    %3138 = vmatpush1.bf16.msra.mxu0 %v3124
    %3139 = vmatprep.subr.bf16.mxu0 0
    %3140 = vmatpush1.bf16.msra.mxu0 %v3125
    %3141 = vmatprep.subr.bf16.mxu0 0
    %3142 = vmatpush1.bf16.msra.mxu0 0
    %3143 = vmatprep.subr.bf16.mxu0 0
    %3144 = vmatpush1.bf16.msra.mxu0 0
    %3145 = vmatprep.subr.bf16.mxu0 0
    %3146 = vmatpush1.bf16.msra.mxu0 0
    %3147 = vmatprep.subr.bf16.mxu0 0
    %3148 = vmatpush1.bf16.msra.mxu0 0
    %3149 = vmatprep.subr.bf16.mxu0 0
    %3150 = vmatpush1.bf16.msra.mxu0 0
    %3151 = vmatprep.subr.bf16.mxu0 0
    %3152 = vmatpush1.bf16.msra.mxu0 0
    %3153 = vmatprep.subr.bf16.mxu0 0
    %3154 = vmatpush1.bf16.msra.mxu0 0
    %3155 = vmatprep.subr.bf16.mxu0 0
    %3156 = vmatpush1.bf16.msra.mxu0 0
    %3157 = vmatprep.subr.bf16.mxu0 0
    %3158 = vmatpush1.bf16.msra.mxu0 0
    %3159 = vmatprep.subr.bf16.mxu0 0
    %3160 = vmatpush1.bf16.msra.mxu0 0
    %3161 = vmatprep.subr.bf16.mxu0 0
    %3162 = vmatpush1.bf16.msra.mxu0 0
    %3163 = vmatprep.subr.bf16.mxu0 0
    %3164 = vmatpush1.bf16.msra.mxu0 0
    %3165 = vmatprep.mubr.bf16.mxu0 0
    %3166 = vmatmul.mubr.bf16.gmra.mrb[0].mxu0 %v3131
    %v3167 = vpop.f32.mrb[0].mxu0
    %v3168 = vadd.f32 0.0, %v3167
    %v3169 = vpop.f32.mrb[0].mxu0
    %v3170 = vpop.f32.mrb[0].mxu0
    %v3171 = vadd.f32 0.0, %v3170
    %v3172 = vpop.f32.mrb[0].mxu0
    %3173 = vdwg.mxu0
    %v3174 = vsel %vm2223, %v2624, 0.0
    %v3175 = vsel %vm2223, %v2692, 0.0
    %v3176 = vadd.f32 %v3174, %v3175
    %v3177 = vsel %vm2223, %v2760, 0.0
    %v3178 = vadd.f32 %v3176, %v3177
    %v3179 = vsel %vm2223, %v2828, 0.0
    %v3180 = vadd.f32 %v3178, %v3179
    %v3181 = vsel %vm2223, %v2896, 0.0
    %v3182 = vadd.f32 %v3180, %v3181
    %v3183 = vsel %vm2223, %v2964, 0.0
    %v3184 = vadd.f32 %v3182, %v3183
    %v3185 = vsel %vm2223, %v3032, 0.0
    %v3186 = vadd.f32 %v3184, %v3185
    %v3187 = vsel %vm2223, %v3100, 0.0
    %v3188 = vadd.f32 %v3186, %v3187
    %v3189 = vsel %vm2223, %v3168, 0.0
    %v3190 = vadd.f32 %v3188, %v3189
    %v3191 = vsel %vm2223, %v2627, 0.0
    %v3192 = vsel %vm2223, %v2695, 0.0
    %v3193 = vadd.f32 %v3191, %v3192
    %v3194 = vsel %vm2223, %v2763, 0.0
    %v3195 = vadd.f32 %v3193, %v3194
    %v3196 = vsel %vm2223, %v2831, 0.0
    %v3197 = vadd.f32 %v3195, %v3196
    %v3198 = vsel %vm2223, %v2899, 0.0
    %v3199 = vadd.f32 %v3197, %v3198
    %v3200 = vsel %vm2223, %v2967, 0.0
    %v3201 = vadd.f32 %v3199, %v3200
    %v3202 = vsel %vm2223, %v3035, 0.0
    %v3203 = vadd.f32 %v3201, %v3202
    %v3204 = vsel %vm2223, %v3103, 0.0
    %v3205 = vadd.f32 %v3203, %v3204
    %v3206 = vsel %vm2223, %v3171, 0.0
    %v3207 = vadd.f32 %v3205, %v3206
    %v3208 = vadd.f32 %v3190, %v256
    %v3209 = vadd.f32 %v3207, %v256
    %v3210 = vmax.f32 %v3208, 0.0
    %v3211 = vmax.f32 %v3209, 0.0
    %v3212 = vpack.c.bf16 %v3211, %v3210
    %v3213 = vld [vmem:[%s3] sm:$0xff]
    %v3214 = vld [vmem:[%s3 + $0x8] sm:$0xff]
    %v3215 = vld [vmem:[%s3 + $0x10] sm:$0xff]
    %v3216 = vld [vmem:[%s3 + $0x18] sm:$0xff]
    %v3217 = vld [vmem:[%s3 + $0x20] sm:$0xff]
    %v3218 = vld [vmem:[%s3 + $0x28] sm:$0xff]
    %v3219 = vld [vmem:[%s3 + $0x30] sm:$0xff]
    %v3220 = vld [vmem:[%s3 + $0x38] sm:$0xff]
    %v3221 = vld [vmem:[%s3 + $0x40] sm:$0xff]
    %v3222 = vld [vmem:[%s3 + $0x48] sm:$0xff]
    %v3223 = vld [vmem:[%s3 + $0x50] sm:$0xff]
    %v3224 = vld [vmem:[%s3 + $0x58] sm:$0xff]
    %v3225 = vld [vmem:[%s3 + $0x60] sm:$0xff]
    %v3226 = vld [vmem:[%s3 + $0x68] sm:$0xff]
    %v3227 = vld [vmem:[%s3 + $0x70] sm:$0xff]
    %v3228 = vld [vmem:[%s3 + $0x78] sm:$0xff]
    %v3230 = vlaneseq
    %v3231 = vshrl.u32 %v3230, 7
    %v3232 = vsub.s32 0, %v3231
    %v3233 = vrot.slane %v258, %v3232
    %v3234 = vlaneseq
    %v3235 = vshrl.u32 %v3234, 7
    %v3236 = vsub.s32 1, %v3235
    %v3237 = vrot.slane %v258, %v3236
    %v3238 = vlaneseq
    %v3239 = vshrl.u32 %v3238, 7
    %v3240 = vsub.s32 2, %v3239
    %v3241 = vrot.slane %v258, %v3240
    %v3242 = vlaneseq
    %v3243 = vshrl.u32 %v3242, 7
    %v3244 = vsub.s32 3, %v3243
    %v3245 = vrot.slane %v258, %v3244
    %v3266 = vunpack.c.l.b16 %v3213
    %v3267 = vunpack.c.h.b16 %v3213
    %v3268 = vunpack.c.l.b16 %v3214
    %v3269 = vunpack.c.h.b16 %v3214
    %v3270 = vunpack.c.l.b16 %v3215
    %v3271 = vunpack.c.h.b16 %v3215
    %v3272 = vunpack.c.l.b16 %v3216
    %v3273 = vunpack.c.h.b16 %v3216
    %v3274 = vunpack.c.l.b16 %v3217
    %v3275 = vunpack.c.h.b16 %v3217
    %v3276 = vunpack.c.l.b16 %v3218
    %v3277 = vunpack.c.h.b16 %v3218
    %v3278 = vunpack.c.l.b16 %v3219
    %v3279 = vunpack.c.h.b16 %v3219
    %v3280 = vunpack.c.l.b16 %v3220
    %v3281 = vunpack.c.h.b16 %v3220
    %v3282 = vunpack.c.l.b16 %v3221
    %v3283 = vunpack.c.h.b16 %v3221
    %v3284 = vunpack.c.l.b16 %v3222
    %v3285 = vunpack.c.h.b16 %v3222
    %v3286 = vunpack.c.l.b16 %v3223
    %v3287 = vunpack.c.h.b16 %v3223
    %v3288 = vunpack.c.l.b16 %v3224
    %v3289 = vunpack.c.h.b16 %v3224
    %v3290 = vunpack.c.l.b16 %v3225
    %v3291 = vunpack.c.h.b16 %v3225
    %v3292 = vunpack.c.l.b16 %v3226
    %v3293 = vunpack.c.h.b16 %v3226
    %v3294 = vunpack.c.l.b16 %v3227
    %v3295 = vunpack.c.h.b16 %v3227
    %v3296 = vunpack.c.l.b16 %v3228
    %v3297 = vunpack.c.h.b16 %v3228
    %v3298 = vpack.c.b16 %v3270, %v3266
    %v3299 = vpack.c.b16 %v3271, %v3267
    %v3300 = vpack.c.b16 %v3272, %v3268
    %v3301 = vpack.c.b16 %v3273, %v3269
    %v3302 = vpack.c.b16 %v3278, %v3274
    %v3303 = vpack.c.b16 %v3279, %v3275
    %v3304 = vpack.c.b16 %v3280, %v3276
    %v3305 = vpack.c.b16 %v3281, %v3277
    %v3306 = vpack.c.b16 %v3286, %v3282
    %v3307 = vpack.c.b16 %v3287, %v3283
    %v3308 = vpack.c.b16 %v3288, %v3284
    %v3309 = vpack.c.b16 %v3289, %v3285
    %v3310 = vpack.c.b16 %v3294, %v3290
    %v3311 = vpack.c.b16 %v3295, %v3291
    %v3312 = vpack.c.b16 %v3296, %v3292
    %v3313 = vpack.c.b16 %v3297, %v3293
    %v3331 = vsel %vm2223, %v3212, 0
    %3333 = vmatprep.subr.bf16.mxu0 %v3299
    %3334 = vmatpush1.bf16.msra.mxu0 %v3298
    %3335 = vmatprep.subr.bf16.mxu0 %v3303
    %3336 = vmatpush1.bf16.msra.mxu0 %v3302
    %3337 = vmatprep.subr.bf16.mxu0 %v3307
    %3338 = vmatpush1.bf16.msra.mxu0 %v3306
    %3339 = vmatprep.subr.bf16.mxu0 %v3311
    %3340 = vmatpush1.bf16.msra.mxu0 %v3310
    %3341 = vmatprep.subr.bf16.mxu0 0
    %3342 = vmatpush1.bf16.msra.mxu0 0
    %3343 = vmatprep.subr.bf16.mxu0 0
    %3344 = vmatpush1.bf16.msra.mxu0 0
    %3345 = vmatprep.subr.bf16.mxu0 0
    %3346 = vmatpush1.bf16.msra.mxu0 0
    %3347 = vmatprep.subr.bf16.mxu0 0
    %3348 = vmatpush1.bf16.msra.mxu0 0
    %3349 = vmatprep.subr.bf16.mxu0 0
    %3350 = vmatpush1.bf16.msra.mxu0 0
    %3351 = vmatprep.subr.bf16.mxu0 0
    %3352 = vmatpush1.bf16.msra.mxu0 0
    %3353 = vmatprep.subr.bf16.mxu0 0
    %3354 = vmatpush1.bf16.msra.mxu0 0
    %3355 = vmatprep.subr.bf16.mxu0 0
    %3356 = vmatpush1.bf16.msra.mxu0 0
    %3357 = vmatprep.subr.bf16.mxu0 0
    %3358 = vmatpush1.bf16.msra.mxu0 0
    %3359 = vmatprep.subr.bf16.mxu0 0
    %3360 = vmatpush1.bf16.msra.mxu0 0
    %3361 = vmatprep.subr.bf16.mxu0 0
    %3362 = vmatpush1.bf16.msra.mxu0 0
    %3363 = vmatprep.subr.bf16.mxu0 0
    %3364 = vmatpush1.bf16.msra.mxu0 0
    %3365 = vmatprep.mubr.bf16.mxu0 0
    %3366 = vmatmul.mubr.bf16.gmra.mrb[0].mxu0 %v3331
    %v3367 = vpop.f32.mrb[0].mxu0
    %v3368 = vadd.f32 %v3233, %v3367
    %v3369 = vpop.f32.mrb[0].mxu0
    %v3370 = vadd.f32 %v3237, %v3369
    %v3371 = vpop.f32.mrb[0].mxu0
    %v3372 = vadd.f32 %v3233, %v3371
    %v3373 = vpop.f32.mrb[0].mxu0
    %v3374 = vadd.f32 %v3237, %v3373
    %3375 = vdwg.mxu0
    %3376 = vmatprep.subr.bf16.mxu0 %v3301
    %3377 = vmatpush1.bf16.msra.mxu0 %v3300
    %3378 = vmatprep.subr.bf16.mxu0 %v3305
    %3379 = vmatpush1.bf16.msra.mxu0 %v3304
    %3380 = vmatprep.subr.bf16.mxu0 %v3309
    %3381 = vmatpush1.bf16.msra.mxu0 %v3308
    %3382 = vmatprep.subr.bf16.mxu0 %v3313
    %3383 = vmatpush1.bf16.msra.mxu0 %v3312
    %3384 = vmatprep.subr.bf16.mxu0 0
    %3385 = vmatpush1.bf16.msra.mxu0 0
    %3386 = vmatprep.subr.bf16.mxu0 0
    %3387 = vmatpush1.bf16.msra.mxu0 0
    %3388 = vmatprep.subr.bf16.mxu0 0
    %3389 = vmatpush1.bf16.msra.mxu0 0
    %3390 = vmatprep.subr.bf16.mxu0 0
    %3391 = vmatpush1.bf16.msra.mxu0 0
    %3392 = vmatprep.subr.bf16.mxu0 0
    %3393 = vmatpush1.bf16.msra.mxu0 0
    %3394 = vmatprep.subr.bf16.mxu0 0
    %3395 = vmatpush1.bf16.msra.mxu0 0
    %3396 = vmatprep.subr.bf16.mxu0 0
    %3397 = vmatpush1.bf16.msra.mxu0 0
    %3398 = vmatprep.subr.bf16.mxu0 0
    %3399 = vmatpush1.bf16.msra.mxu0 0
    %3400 = vmatprep.subr.bf16.mxu0 0
    %3401 = vmatpush1.bf16.msra.mxu0 0
    %3402 = vmatprep.subr.bf16.mxu0 0
    %3403 = vmatpush1.bf16.msra.mxu0 0
    %3404 = vmatprep.subr.bf16.mxu0 0
    %3405 = vmatpush1.bf16.msra.mxu0 0
    %3406 = vmatprep.subr.bf16.mxu0 0
    %3407 = vmatpush1.bf16.msra.mxu0 0
    %3408 = vmatprep.mubr.bf16.mxu0 0
    %3409 = vmatmul.mubr.bf16.gmra.mrb[0].mxu0 %v3331
    %v3410 = vpop.f32.mrb[0].mxu0
    %v3411 = vadd.f32 %v3241, %v3410
    %v3412 = vpop.f32.mrb[0].mxu0
    %v3413 = vadd.f32 %v3245, %v3412
    %v3414 = vpop.f32.mrb[0].mxu0
    %v3415 = vadd.f32 %v3241, %v3414
    %v3416 = vpop.f32.mrb[0].mxu0
    %v3417 = vadd.f32 %v3245, %v3416
    %3418 = vdwg.mxu0
    %v3419 = vmax.f32 %v3368, 0.0
    %v3420 = vmax.f32 %v3370, 0.0
    %v3421 = vmax.f32 %v3411, 0.0
    %v3422 = vmax.f32 %v3413, 0.0
    %v3423 = vmax.f32 %v3372, 0.0
    %v3424 = vmax.f32 %v3374, 0.0
    %v3425 = vmax.f32 %v3415, 0.0
    %v3426 = vmax.f32 %v3417, 0.0
    %v3427 = vpack.c.bf16 %v3423, %v3419
    %v3428 = vpack.c.bf16 %v3424, %v3420
    %v3429 = vpack.c.bf16 %v3425, %v3421
    %v3430 = vpack.c.bf16 %v3426, %v3422
    %v3495 = vunpack.c.l.b16 %v190
    %v3496 = vunpack.c.l.b16 %v191
    %v3497 = vunpack.c.l.b16 %v192
    %v3498 = vunpack.c.l.b16 %v193
    %v3499 = vunpack.c.l.b16 %v194
    %v3500 = vunpack.c.l.b16 %v195
    %v3501 = vunpack.c.l.b16 %v196
    %v3502 = vunpack.c.l.b16 %v197
    %v3503 = vunpack.c.l.b16 %v198
    %v3504 = vunpack.c.l.b16 %v199
    %v3505 = vunpack.c.l.b16 %v200
    %v3506 = vunpack.c.l.b16 %v201
    %v3507 = vunpack.c.l.b16 %v202
    %v3508 = vunpack.c.l.b16 %v203
    %v3509 = vunpack.c.l.b16 %v204
    %v3510 = vunpack.c.l.b16 %v205
    %v3511 = vunpack.c.l.b16 %v206
    %v3512 = vunpack.c.l.b16 %v207
    %v3513 = vunpack.c.l.b16 %v208
    %v3514 = vunpack.c.l.b16 %v209
    %v3515 = vunpack.c.l.b16 %v210
    %v3516 = vunpack.c.l.b16 %v211
    %v3517 = vunpack.c.l.b16 %v212
    %v3518 = vunpack.c.l.b16 %v213
    %v3519 = vunpack.c.l.b16 %v214
    %v3520 = vunpack.c.l.b16 %v215
    %v3521 = vunpack.c.l.b16 %v216
    %v3522 = vunpack.c.l.b16 %v217
    %v3523 = vunpack.c.l.b16 %v218
    %v3524 = vunpack.c.l.b16 %v219
    %v3525 = vunpack.c.l.b16 %v220
    %v3526 = vunpack.c.l.b16 %v221
    %v3527 = vunpack.c.l.b16 %v222
    %v3528 = vunpack.c.l.b16 %v223
    %v3529 = vunpack.c.l.b16 %v224
    %v3530 = vunpack.c.l.b16 %v225
    %v3531 = vunpack.c.l.b16 %v226
    %v3532 = vunpack.c.l.b16 %v227
    %v3533 = vunpack.c.l.b16 %v228
    %v3534 = vunpack.c.l.b16 %v229
    %v3535 = vunpack.c.l.b16 %v230
    %v3536 = vunpack.c.l.b16 %v231
    %v3537 = vunpack.c.l.b16 %v232
    %v3538 = vunpack.c.l.b16 %v233
    %v3539 = vunpack.c.l.b16 %v234
    %v3540 = vunpack.c.l.b16 %v235
    %v3541 = vunpack.c.l.b16 %v236
    %v3542 = vunpack.c.l.b16 %v237
    %v3543 = vunpack.c.l.b16 %v238
    %v3544 = vunpack.c.l.b16 %v239
    %v3545 = vunpack.c.l.b16 %v240
    %v3546 = vunpack.c.l.b16 %v241
    %v3547 = vunpack.c.l.b16 %v242
    %v3548 = vunpack.c.l.b16 %v243
    %v3549 = vunpack.c.l.b16 %v244
    %v3550 = vunpack.c.l.b16 %v245
    %v3551 = vunpack.c.l.b16 %v246
    %v3552 = vunpack.c.l.b16 %v247
    %v3553 = vunpack.c.l.b16 %v248
    %v3554 = vunpack.c.l.b16 %v249
    %v3555 = vunpack.c.l.b16 %v250
    %v3556 = vunpack.c.l.b16 %v251
    %v3557 = vunpack.c.l.b16 %v252
    %v3558 = vunpack.c.l.b16 %v253
    %v3559 = vpack.c.b16 %v3496, %v3495
    %v3560 = vpack.c.b16 %v3498, %v3497
    %v3561 = vpack.c.b16 %v3500, %v3499
    %v3562 = vpack.c.b16 %v3502, %v3501
    %v3563 = vpack.c.b16 %v3504, %v3503
    %v3564 = vpack.c.b16 %v3506, %v3505
    %v3565 = vpack.c.b16 %v3508, %v3507
    %v3566 = vpack.c.b16 %v3510, %v3509
    %v3567 = vpack.c.b16 %v3512, %v3511
    %v3568 = vpack.c.b16 %v3514, %v3513
    %v3569 = vpack.c.b16 %v3516, %v3515
    %v3570 = vpack.c.b16 %v3518, %v3517
    %v3571 = vpack.c.b16 %v3520, %v3519
    %v3572 = vpack.c.b16 %v3522, %v3521
    %v3573 = vpack.c.b16 %v3524, %v3523
    %v3574 = vpack.c.b16 %v3526, %v3525
    %v3575 = vpack.c.b16 %v3528, %v3527
    %v3576 = vpack.c.b16 %v3530, %v3529
    %v3577 = vpack.c.b16 %v3532, %v3531
    %v3578 = vpack.c.b16 %v3534, %v3533
    %v3579 = vpack.c.b16 %v3536, %v3535
    %v3580 = vpack.c.b16 %v3538, %v3537
    %v3581 = vpack.c.b16 %v3540, %v3539
    %v3582 = vpack.c.b16 %v3542, %v3541
    %v3583 = vpack.c.b16 %v3544, %v3543
    %v3584 = vpack.c.b16 %v3546, %v3545
    %v3585 = vpack.c.b16 %v3548, %v3547
    %v3586 = vpack.c.b16 %v3550, %v3549
    %v3587 = vpack.c.b16 %v3552, %v3551
    %v3588 = vpack.c.b16 %v3554, %v3553
    %v3589 = vpack.c.b16 %v3556, %v3555
    %v3590 = vpack.c.b16 %v3558, %v3557
    %3623 = vmatprep.subr.bf16.mxu0 0
    %3624 = vmatpush1.bf16.msra.mxu0 %v3559
    %3625 = vmatprep.subr.bf16.mxu0 0
    %3626 = vmatpush1.bf16.msra.mxu0 %v3560
    %3627 = vmatprep.subr.bf16.mxu0 0
    %3628 = vmatpush1.bf16.msra.mxu0 %v3561
    %3629 = vmatprep.subr.bf16.mxu0 0
    %3630 = vmatpush1.bf16.msra.mxu0 %v3562
    %3631 = vmatprep.subr.bf16.mxu0 0
    %3632 = vmatpush1.bf16.msra.mxu0 %v3563
    %3633 = vmatprep.subr.bf16.mxu0 0
    %3634 = vmatpush1.bf16.msra.mxu0 %v3564
    %3635 = vmatprep.subr.bf16.mxu0 0
    %3636 = vmatpush1.bf16.msra.mxu0 %v3565
    %3637 = vmatprep.subr.bf16.mxu0 0
    %3638 = vmatpush1.bf16.msra.mxu0 %v3566
    %3639 = vmatprep.subr.bf16.mxu0 0
    %3640 = vmatpush1.bf16.msra.mxu0 %v3567
    %3641 = vmatprep.subr.bf16.mxu0 0
    %3642 = vmatpush1.bf16.msra.mxu0 %v3568
    %3643 = vmatprep.subr.bf16.mxu0 0
    %3644 = vmatpush1.bf16.msra.mxu0 %v3569
    %3645 = vmatprep.subr.bf16.mxu0 0
    %3646 = vmatpush1.bf16.msra.mxu0 %v3570
    %3647 = vmatprep.subr.bf16.mxu0 0
    %3648 = vmatpush1.bf16.msra.mxu0 %v3571
    %3649 = vmatprep.subr.bf16.mxu0 0
    %3650 = vmatpush1.bf16.msra.mxu0 %v3572
    %3651 = vmatprep.subr.bf16.mxu0 0
    %3652 = vmatpush1.bf16.msra.mxu0 %v3573
    %3653 = vmatprep.subr.bf16.mxu0 0
    %3654 = vmatpush1.bf16.msra.mxu0 %v3574
    %3655 = vmatprep.mubr.bf16.mxu0 %v3428
    %3656 = vmatmul.mubr.bf16.gmra.mrb[0].mxu0 %v3427
    %v3657 = vpop.f32.mrb[0].mxu0
    %v3658 = vadd.f32 %v259, %v3657
    %v3659 = vpop.f32.mrb[0].mxu0
    %v3660 = vpop.f32.mrb[0].mxu0
    %v3661 = vpop.f32.mrb[0].mxu0
    %3662 = vdwg.mxu0
    %3663 = vmatprep.subr.bf16.mxu0 0
    %3664 = vmatpush1.bf16.msra.mxu0 %v3575
    %3665 = vmatprep.subr.bf16.mxu0 0
    %3666 = vmatpush1.bf16.msra.mxu0 %v3576
    %3667 = vmatprep.subr.bf16.mxu0 0
    %3668 = vmatpush1.bf16.msra.mxu0 %v3577
    %3669 = vmatprep.subr.bf16.mxu0 0
    %3670 = vmatpush1.bf16.msra.mxu0 %v3578
    %3671 = vmatprep.subr.bf16.mxu0 0
    %3672 = vmatpush1.bf16.msra.mxu0 %v3579
    %3673 = vmatprep.subr.bf16.mxu0 0
    %3674 = vmatpush1.bf16.msra.mxu0 %v3580
    %3675 = vmatprep.subr.bf16.mxu0 0
    %3676 = vmatpush1.bf16.msra.mxu0 %v3581
    %3677 = vmatprep.subr.bf16.mxu0 0
    %3678 = vmatpush1.bf16.msra.mxu0 %v3582
    %3679 = vmatprep.subr.bf16.mxu0 0
    %3680 = vmatpush1.bf16.msra.mxu0 %v3583
    %3681 = vmatprep.subr.bf16.mxu0 0
    %3682 = vmatpush1.bf16.msra.mxu0 %v3584
    %3683 = vmatprep.subr.bf16.mxu0 0
    %3684 = vmatpush1.bf16.msra.mxu0 %v3585
    %3685 = vmatprep.subr.bf16.mxu0 0
    %3686 = vmatpush1.bf16.msra.mxu0 %v3586
    %3687 = vmatprep.subr.bf16.mxu0 0
    %3688 = vmatpush1.bf16.msra.mxu0 %v3587
    %3689 = vmatprep.subr.bf16.mxu0 0
    %3690 = vmatpush1.bf16.msra.mxu0 %v3588
    %3691 = vmatprep.subr.bf16.mxu0 0
    %3692 = vmatpush1.bf16.msra.mxu0 %v3589
    %3693 = vmatprep.subr.bf16.mxu0 0
    %3694 = vmatpush1.bf16.msra.mxu0 %v3590
    %3695 = vmatprep.mubr.bf16.mxu0 %v3430
    %3696 = vmatmul.mubr.bf16.gmra.mrb[0].mxu0 %v3429
    %v3697 = vpop.f32.mrb[0].mxu0
    %v3698 = vadd.f32 %v3658, %v3697
    %v3699 = vpop.f32.mrb[0].mxu0
    %v3700 = vpop.f32.mrb[0].mxu0
    %v3701 = vpop.f32.mrb[0].mxu0
    %3702 = vdwg.mxu0
    %vm3703 = vcmask 41984
    %3704 = vst.msk [vmem:[#allocation2] sm:$0x3] %vm3703, %v3698
    // Predicated region
    $region22: #{fwd.1} parent=1 // pred_check
      _
    $region23: #{fwd.1} parent=1 // pred_check_branch
      %3706 = sbr.rel (0) target = $region25
    $region24: #{fwd.1} parent=1 // pred_region
      %s3708 = ssub.s32 32, 32
      %3709 = vsyncadd [#allocation3], %s3708
      %s3711 = sshll.u32 [#allocation2], 4
      %s3712 = int_to_ptr.vmem [resolvable:$true] %s3711
      %3714 = dma.vmem_to_hbm [thread:$0]  %s3712, 32, %s5, [#allocation3]
    $region25: #{fwd.1} parent=1 // pred_fallthru
      _
    // Predicated region
    $region26: #{fwd.1} parent=1 // pred_check
      _
    $region27: #{fwd.1} parent=1 // pred_check_branch
      %3716 = sbr.rel (0) target = $region29
    $region28: #{fwd.1} parent=1 // pred_region
      %3717 = dma.done [#allocation3], 32
    $region29: #{fwd.1} parent=1 // pred_fallthru
      _
    %3718 = vsyncpa [#allocation3], 1

</llo_original>
